<compile_context>
chip_gen: v6e
topology: v6e:2x2x1
jax: 0.10.0
libtpu: 0.0.40
codegen_flags: <defaults>
</compile_context>

<pallas_src>
import functools

import jax
import jax.numpy as jnp
from jax.experimental import pallas as pl
from jax.experimental.pallas import tpu as pltpu

BN_EPS = 1e-5
NUM_CONV = 13  # static conv index order, see _conv_specs below


# ---------------------------------------------------------------------------
# Fused forward kernel (gridless: everything stays in VMEM / vregs)
# ---------------------------------------------------------------------------
def _vae_forward_kernel(adj_ref, x_ref, eps_ref, w_ref, b_ref, out_ref, *,
                        n, c_in, c_lat, c_pad, mxu_dtype):
    f32 = jnp.float32
    adj16 = adj_ref[...]                    # (n, n)     bf16 row-normalized
    x = x_ref[...]                          # (n, c_pad) f32, lanes >= c_in are 0
    eps = eps_ref[...]                      # (n, c_pad) f32, lanes >= c_lat are 0

    def mm(a16, b16):                       # MXU: bf16 operands, f32 accumulate
        return jnp.dot(a16, b16, preferred_element_type=f32)

    def cast(h):                            # hoisted bf16 pack (one per activation)
        return h.astype(mxu_dtype)

    def conv(agg16, h16, idx):              # SAGEConv, eval-BN pre-folded into W/b
        out = mm(agg16, w_ref[2 * idx]) + mm(h16, w_ref[2 * idx + 1])
        return out + b_ref[pl.ds(idx, 1), :]

    def res_block(h, i1, i2, i3=None):
        h16 = cast(h)
        agg16 = cast(mm(adj16, h16))        # mean aggregation, shared conv1/conv3
        h1 = jnp.maximum(conv(agg16, h16, i1), 0.0)
        sc = conv(agg16, h16, i3) if i3 is not None else h
        h1_16 = cast(h1)
        agg1_16 = cast(mm(adj16, h1_16))
        return jnp.maximum(conv(agg1_16, h1_16, i2) + sc, 0.0)

    # ---------------- encoder ----------------
    h = res_block(x, 0, 1, 2)               # layer1 (C_IN -> C_HID, has conv3)
    h = res_block(h, 3, 4)                  # layer2 (C_HID -> C_HID)
    h16 = cast(h)
    agg16 = cast(mm(adj16, h16))            # one aggregation shared by both heads
    mean = conv(agg16, h16, 5)              # gcn_mean    (padded lanes == 0)
    log_std = conv(agg16, h16, 6)           # gcn_logstd  (padded lanes == 0)

    # ------------- reparameterize -------------
    # clamp only affects sampling; KL below uses the unclamped log_std
    z = mean + eps * jnp.exp(jnp.clip(log_std, -10.0, 10.0))

    # ---------------- decoder ----------------
    z16 = cast(z)
    h = conv(cast(mm(adj16, z16)), z16, 7)  # dec.conv (no BN / ReLU)
    h = res_block(h, 8, 9)                  # layer1
    logits = res_block(h, 10, 11, 12)       # layer2; recon_x = sigmoid(logits)

    # ------------- fused loss -------------
    # BCE(sigmoid(logits), x) in logits form; one exp + one log1p per element,
    # each log term clamped at -100 (torch binary_cross_entropy behaviour).
    lane = jax.lax.broadcasted_iota(jnp.int32, (1, c_pad), 1)
    sp = jnp.log1p(jnp.exp(-jnp.abs(logits)))                    # softplus(-|l|)
    log_r = jnp.maximum(-(jnp.maximum(-logits, 0.0) + sp), -100.0)
    log_1mr = jnp.maximum(-(jnp.maximum(logits, 0.0) + sp), -100.0)
    bce = -(x * log_r + (1.0 - x) * log_1mr)
    bce = jnp.where(lane < c_in, bce, 0.0)                       # mask pad lanes
    recon = jnp.sum(bce, axis=(0, 1), keepdims=True) * (1.0 / (n * c_in))

    # padded latent lanes: 1 + 0 - 0 - exp(0) == 0, so no mask needed
    kl_terms = 1.0 + log_std - mean * mean - jnp.exp(log_std)
    kl = jnp.sum(kl_terms, axis=(0, 1), keepdims=True) * (-0.5 / (n * c_lat))
    loss = recon + 0.2 * kl

    # single lane-dense (1, 128) output: lanes 0/1/2 = loss/recon/kl
    out_ref[...] = jnp.where(lane == 0, loss,
                             jnp.where(lane == 1, recon,
                                       jnp.where(lane == 2, kl, 0.0)))


# ---------------------------------------------------------------------------
# Pallas wrapper (single call for the whole forward pass)
# ---------------------------------------------------------------------------
def graphsage_vae_forward(adj, x_pad, eps_pad, w_slab, b_slab, *,
                          c_in, c_lat, mxu_dtype=jnp.bfloat16):
    n, c_pad = x_pad.shape
    vmem = pl.BlockSpec(memory_space=pltpu.MemorySpace.VMEM)
    kernel = functools.partial(_vae_forward_kernel, n=n, c_in=c_in,
                               c_lat=c_lat, c_pad=c_pad, mxu_dtype=mxu_dtype)
    out = pl.pallas_call(
        kernel,
        out_shape=jax.ShapeDtypeStruct((1, c_pad), jnp.float32),
        in_specs=[vmem] * 5,
        out_specs=vmem,
    )(adj, x_pad, eps_pad, w_slab, b_slab)
    return out[0, 0], out[0, 1], out[0, 2]


# ---------------------------------------------------------------------------
# Host-side parameter construction: glorot init, per-channel eval-BN fold,
# zero-pad channels to 128 lanes, pack everything into two slabs.
# ---------------------------------------------------------------------------
def _glorot(key, fan_in, fan_out):
    lim = (6.0 / (fan_in + fan_out)) ** 0.5
    return jax.random.uniform(key, (fan_in, fan_out), jnp.float32, -lim, lim)


def _make_conv(key, c_in, c_out, fold_bn):
    k1, k2 = jax.random.split(key)
    wl = _glorot(k1, c_in, c_out)
    wr = _glorot(k2, c_in, c_out)
    b = jnp.zeros((c_out,), jnp.float32)
    if fold_bn:
        # eval-mode BatchNorm right after reset_parameters():
        # gamma=1, beta=0, running_mean=0, running_var=1 (per-channel fold is
        # general: works for trained running stats too).
        gamma = jnp.ones((c_out,), jnp.float32)
        beta = jnp.zeros((c_out,), jnp.float32)
        r_mean = jnp.zeros((c_out,), jnp.float32)
        r_var = jnp.ones((c_out,), jnp.float32)
        scale = gamma / jnp.sqrt(r_var + BN_EPS)
        shift = beta - r_mean * scale
        wl, wr, b = wl * scale, wr * scale, b * scale + shift
    return wl, wr, b


def _conv_specs(c_in, c_hid, c_lat):
    # (fan_in, fan_out, fold_bn); order == static conv indices used in kernel
    return [
        (c_in,  c_hid, True),   # 0  enc.layer1.conv1
        (c_hid, c_hid, True),   # 1  enc.layer1.conv2
        (c_in,  c_hid, True),   # 2  enc.layer1.conv3
        (c_hid, c_hid, True),   # 3  enc.layer2.conv1
        (c_hid, c_hid, True),   # 4  enc.layer2.conv2
        (c_hid, c_lat, False),  # 5  enc.gcn_mean
        (c_hid, c_lat, False),  # 6  enc.gcn_logstd
        (c_lat, c_hid, False),  # 7  dec.conv
        (c_hid, c_hid, True),   # 8  dec.layer1.conv1
        (c_hid, c_hid, True),   # 9  dec.layer1.conv2
        (c_hid, c_in,  True),   # 10 dec.layer2.conv1
        (c_in,  c_in,  True),   # 11 dec.layer2.conv2
        (c_hid, c_in,  True),   # 12 dec.layer2.conv3
    ]


def pack_params(key, c_in, c_hid, c_lat, c_pad, mxu_dtype=jnp.bfloat16):
    specs = _conv_specs(c_in, c_hid, c_lat)
    assert len(specs) == NUM_CONV
    keys = jax.random.split(key, len(specs))
    w_rows, b_rows = [], []
    for k, (ci, co, fold) in zip(keys, specs):
        wl, wr, b = _make_conv(k, ci, co, fold)
        pad_w = lambda w: jnp.pad(w, ((0, c_pad - w.shape[0]),
                                      (0, c_pad - w.shape[1])))
        w_rows.append(pad_w(wl))
        w_rows.append(pad_w(wr))
        b_rows.append(jnp.pad(b, (0, c_pad - b.shape[0])))
    w_slab = jnp.stack(w_rows).astype(mxu_dtype)        # (2*NUM_CONV, c_pad, c_pad)
    b_slab = jnp.stack(b_rows)                          # (NUM_CONV, c_pad) f32
    pad_rows = (-b_slab.shape[0]) % 8
    if pad_rows:
        b_slab = jnp.pad(b_slab, ((0, pad_rows), (0, 0)))
    return w_slab, b_slab


# ---------------------------------------------------------------------------
if __name__ == "__main__":
    N, C_IN, C_HID, C_LAT, C_PAD, E = 32, 16, 32, 8, 128, 96

    key = jax.random.PRNGKey(0)
    k_x, k_src, k_tgt, k_eps, k_par = jax.random.split(key, 5)

    # Node features in [0, 1] (BCE target requirement), random edges, noise.
    x = jax.random.uniform(k_x, (N, C_IN), jnp.float32)
    src = jax.random.randint(k_src, (E,), 0, N)
    tgt = jax.random.randint(k_tgt, (E,), 0, N)

    # Dense row-normalized adjacency (mean aggregation over in-neighbors).
    # Kept bf16 for the MXU; use f32 here if strict parity vs PyTorch is needed.
    adj = jnp.zeros((N, N), jnp.float32).at[tgt, src].add(1.0)
    deg = jnp.sum(adj, axis=1, keepdims=True)
    adj = (adj / jnp.maximum(deg, 1.0)).astype(jnp.bfloat16)

    eps = jax.random.normal(k_eps, (N, C_LAT), jnp.float32)   # reparam noise

    # Lane-dense padding of the channel axes (zeros stay zero end-to-end).
    x_pad = jnp.pad(x, ((0, 0), (0, C_PAD - C_IN)))
    eps_pad = jnp.pad(eps, ((0, 0), (0, C_PAD - C_LAT)))

    w_slab, b_slab = pack_params(k_par, C_IN, C_HID, C_LAT, C_PAD)

    fwd = jax.jit(functools.partial(graphsage_vae_forward,
                                    c_in=C_IN, c_lat=C_LAT))
    loss, recon_loss, kl_loss = fwd(adj, x_pad, eps_pad, w_slab, b_slab)
    jax.block_until_ready((loss, recon_loss, kl_loss))
    print("KERNEL_OK")
</pallas_src>

<mosaic_0001>
module attributes {stable_mosaic.version = 11 : i64} {
  func.func @_vae_forward_kernel(%arg0: memref<32x32xbf16, #tpu.memory_space<vmem>>, %arg1: memref<32x128xf32, #tpu.memory_space<vmem>>, %arg2: memref<32x128xf32, #tpu.memory_space<vmem>>, %arg3: memref<26x128x128xbf16, #tpu.memory_space<vmem>>, %arg4: memref<16x128xf32, #tpu.memory_space<vmem>>, %arg5: memref<1x128xf32, #tpu.memory_space<vmem>>) attributes {dimension_semantics = [], scalar_prefetch = 0 : i64, scratch_operands = 0 : i64, tpu.core_type = #tpu.core_type<tc>} {
    %c0 = arith.constant 0 : index
    %c0_0 = arith.constant 0 : index
    %0 = vector.load %arg0[%c0, %c0_0] : memref<32x32xbf16, #tpu.memory_space<vmem>>, vector<32x32xbf16>
    %c0_1 = arith.constant 0 : index
    %c0_2 = arith.constant 0 : index
    %1 = vector.load %arg1[%c0_1, %c0_2] : memref<32x128xf32, #tpu.memory_space<vmem>>, vector<32x128xf32>
    %c0_3 = arith.constant 0 : index
    %c0_4 = arith.constant 0 : index
    %2 = vector.load %arg2[%c0_3, %c0_4] : memref<32x128xf32, #tpu.memory_space<vmem>>, vector<32x128xf32>
    %3 = arith.truncf %1 : vector<32x128xf32> to vector<32x128xbf16>
    %cst = arith.constant dense<0.000000e+00> : vector<32x128xf32>
    %4 = tpu.matmul %0, %3, %cst {dimension_numbers = #tpu.dot_dimension_numbers<[1], [0], [0], [1], [0, 0, 1, 1], [], []>} : vector<32x32xbf16>, vector<32x128xbf16>, vector<32x128xf32> -> vector<32x128xf32>
    %5 = arith.truncf %4 : vector<32x128xf32> to vector<32x128xbf16>
    %c0_5 = arith.constant 0 : index
    %c0_6 = arith.constant 0 : index
    %c0_7 = arith.constant 0 : index
    %6 = vector.load %arg3[%c0_5, %c0_6, %c0_7] : memref<26x128x128xbf16, #tpu.memory_space<vmem>>, vector<1x128x128xbf16>
    %7 = vector.shape_cast %6 : vector<1x128x128xbf16> to vector<128x128xbf16>
    %cst_8 = arith.constant dense<0.000000e+00> : vector<32x128xf32>
    %8 = tpu.matmul %5, %7, %cst_8 {dimension_numbers = #tpu.dot_dimension_numbers<[1], [0], [0], [1], [0, 0, 1, 1], [], []>} : vector<32x128xbf16>, vector<128x128xbf16>, vector<32x128xf32> -> vector<32x128xf32>
    %c1 = arith.constant 1 : index
    %c0_9 = arith.constant 0 : index
    %c0_10 = arith.constant 0 : index
    %9 = vector.load %arg3[%c1, %c0_9, %c0_10] : memref<26x128x128xbf16, #tpu.memory_space<vmem>>, vector<1x128x128xbf16>
    %10 = vector.shape_cast %9 : vector<1x128x128xbf16> to vector<128x128xbf16>
    %cst_11 = arith.constant dense<0.000000e+00> : vector<32x128xf32>
    %11 = tpu.matmul %3, %10, %cst_11 {dimension_numbers = #tpu.dot_dimension_numbers<[1], [0], [0], [1], [0, 0, 1, 1], [], []>} : vector<32x128xbf16>, vector<128x128xbf16>, vector<32x128xf32> -> vector<32x128xf32>
    %12 = arith.addf %8, %11 : vector<32x128xf32>
    %c0_12 = arith.constant 0 : index
    %c0_13 = arith.constant 0 : index
    %13 = vector.load %arg4[%c0_12, %c0_13] : memref<16x128xf32, #tpu.memory_space<vmem>>, vector<1x128xf32>
    %14 = vector.broadcast %13 : vector<1x128xf32> to vector<32x128xf32>
    %15 = arith.addf %12, %14 : vector<32x128xf32>
    %cst_14 = arith.constant 0.000000e+00 : f32
    %16 = vector.broadcast %cst_14 : f32 to vector<32x128xf32>
    %17 = arith.maximumf %15, %16 : vector<32x128xf32>
    %c4 = arith.constant 4 : index
    %c0_15 = arith.constant 0 : index
    %c0_16 = arith.constant 0 : index
    %18 = vector.load %arg3[%c4, %c0_15, %c0_16] : memref<26x128x128xbf16, #tpu.memory_space<vmem>>, vector<1x128x128xbf16>
    %19 = vector.shape_cast %18 : vector<1x128x128xbf16> to vector<128x128xbf16>
    %cst_17 = arith.constant dense<0.000000e+00> : vector<32x128xf32>
    %20 = tpu.matmul %5, %19, %cst_17 {dimension_numbers = #tpu.dot_dimension_numbers<[1], [0], [0], [1], [0, 0, 1, 1], [], []>} : vector<32x128xbf16>, vector<128x128xbf16>, vector<32x128xf32> -> vector<32x128xf32>
    %c5 = arith.constant 5 : index
    %c0_18 = arith.constant 0 : index
    %c0_19 = arith.constant 0 : index
    %21 = vector.load %arg3[%c5, %c0_18, %c0_19] : memref<26x128x128xbf16, #tpu.memory_space<vmem>>, vector<1x128x128xbf16>
    %22 = vector.shape_cast %21 : vector<1x128x128xbf16> to vector<128x128xbf16>
    %cst_20 = arith.constant dense<0.000000e+00> : vector<32x128xf32>
    %23 = tpu.matmul %3, %22, %cst_20 {dimension_numbers = #tpu.dot_dimension_numbers<[1], [0], [0], [1], [0, 0, 1, 1], [], []>} : vector<32x128xbf16>, vector<128x128xbf16>, vector<32x128xf32> -> vector<32x128xf32>
    %24 = arith.addf %20, %23 : vector<32x128xf32>
    %c2 = arith.constant 2 : index
    %c0_21 = arith.constant 0 : index
    %25 = vector.load %arg4[%c2, %c0_21] : memref<16x128xf32, #tpu.memory_space<vmem>>, vector<1x128xf32>
    %26 = vector.broadcast %25 : vector<1x128xf32> to vector<32x128xf32>
    %27 = arith.addf %24, %26 : vector<32x128xf32>
    %28 = arith.truncf %17 : vector<32x128xf32> to vector<32x128xbf16>
    %cst_22 = arith.constant dense<0.000000e+00> : vector<32x128xf32>
    %29 = tpu.matmul %0, %28, %cst_22 {dimension_numbers = #tpu.dot_dimension_numbers<[1], [0], [0], [1], [0, 0, 1, 1], [], []>} : vector<32x32xbf16>, vector<32x128xbf16>, vector<32x128xf32> -> vector<32x128xf32>
    %30 = arith.truncf %29 : vector<32x128xf32> to vector<32x128xbf16>
    %c2_23 = arith.constant 2 : index
    %c0_24 = arith.constant 0 : index
    %c0_25 = arith.constant 0 : index
    %31 = vector.load %arg3[%c2_23, %c0_24, %c0_25] : memref<26x128x128xbf16, #tpu.memory_space<vmem>>, vector<1x128x128xbf16>
    %32 = vector.shape_cast %31 : vector<1x128x128xbf16> to vector<128x128xbf16>
    %cst_26 = arith.constant dense<0.000000e+00> : vector<32x128xf32>
    %33 = tpu.matmul %30, %32, %cst_26 {dimension_numbers = #tpu.dot_dimension_numbers<[1], [0], [0], [1], [0, 0, 1, 1], [], []>} : vector<32x128xbf16>, vector<128x128xbf16>, vector<32x128xf32> -> vector<32x128xf32>
    %c3 = arith.constant 3 : index
    %c0_27 = arith.constant 0 : index
    %c0_28 = arith.constant 0 : index
    %34 = vector.load %arg3[%c3, %c0_27, %c0_28] : memref<26x128x128xbf16, #tpu.memory_space<vmem>>, vector<1x128x128xbf16>
    %35 = vector.shape_cast %34 : vector<1x128x128xbf16> to vector<128x128xbf16>
    %cst_29 = arith.constant dense<0.000000e+00> : vector<32x128xf32>
    %36 = tpu.matmul %28, %35, %cst_29 {dimension_numbers = #tpu.dot_dimension_numbers<[1], [0], [0], [1], [0, 0, 1, 1], [], []>} : vector<32x128xbf16>, vector<128x128xbf16>, vector<32x128xf32> -> vector<32x128xf32>
    %37 = arith.addf %33, %36 : vector<32x128xf32>
    %c1_30 = arith.constant 1 : index
    %c0_31 = arith.constant 0 : index
    %38 = vector.load %arg4[%c1_30, %c0_31] : memref<16x128xf32, #tpu.memory_space<vmem>>, vector<1x128xf32>
    %39 = vector.broadcast %38 : vector<1x128xf32> to vector<32x128xf32>
    %40 = arith.addf %37, %39 : vector<32x128xf32>
    %41 = arith.addf %40, %27 : vector<32x128xf32>
    %cst_32 = arith.constant 0.000000e+00 : f32
    %42 = vector.broadcast %cst_32 : f32 to vector<32x128xf32>
    %43 = arith.maximumf %41, %42 : vector<32x128xf32>
    %44 = arith.truncf %43 : vector<32x128xf32> to vector<32x128xbf16>
    %cst_33 = arith.constant dense<0.000000e+00> : vector<32x128xf32>
    %45 = tpu.matmul %0, %44, %cst_33 {dimension_numbers = #tpu.dot_dimension_numbers<[1], [0], [0], [1], [0, 0, 1, 1], [], []>} : vector<32x32xbf16>, vector<32x128xbf16>, vector<32x128xf32> -> vector<32x128xf32>
    %46 = arith.truncf %45 : vector<32x128xf32> to vector<32x128xbf16>
    %c6 = arith.constant 6 : index
    %c0_34 = arith.constant 0 : index
    %c0_35 = arith.constant 0 : index
    %47 = vector.load %arg3[%c6, %c0_34, %c0_35] : memref<26x128x128xbf16, #tpu.memory_space<vmem>>, vector<1x128x128xbf16>
    %48 = vector.shape_cast %47 : vector<1x128x128xbf16> to vector<128x128xbf16>
    %cst_36 = arith.constant dense<0.000000e+00> : vector<32x128xf32>
    %49 = tpu.matmul %46, %48, %cst_36 {dimension_numbers = #tpu.dot_dimension_numbers<[1], [0], [0], [1], [0, 0, 1, 1], [], []>} : vector<32x128xbf16>, vector<128x128xbf16>, vector<32x128xf32> -> vector<32x128xf32>
    %c7 = arith.constant 7 : index
    %c0_37 = arith.constant 0 : index
    %c0_38 = arith.constant 0 : index
    %50 = vector.load %arg3[%c7, %c0_37, %c0_38] : memref<26x128x128xbf16, #tpu.memory_space<vmem>>, vector<1x128x128xbf16>
    %51 = vector.shape_cast %50 : vector<1x128x128xbf16> to vector<128x128xbf16>
    %cst_39 = arith.constant dense<0.000000e+00> : vector<32x128xf32>
    %52 = tpu.matmul %44, %51, %cst_39 {dimension_numbers = #tpu.dot_dimension_numbers<[1], [0], [0], [1], [0, 0, 1, 1], [], []>} : vector<32x128xbf16>, vector<128x128xbf16>, vector<32x128xf32> -> vector<32x128xf32>
    %53 = arith.addf %49, %52 : vector<32x128xf32>
    %c3_40 = arith.constant 3 : index
    %c0_41 = arith.constant 0 : index
    %54 = vector.load %arg4[%c3_40, %c0_41] : memref<16x128xf32, #tpu.memory_space<vmem>>, vector<1x128xf32>
    %55 = vector.broadcast %54 : vector<1x128xf32> to vector<32x128xf32>
    %56 = arith.addf %53, %55 : vector<32x128xf32>
    %cst_42 = arith.constant 0.000000e+00 : f32
    %57 = vector.broadcast %cst_42 : f32 to vector<32x128xf32>
    %58 = arith.maximumf %56, %57 : vector<32x128xf32>
    %59 = arith.truncf %58 : vector<32x128xf32> to vector<32x128xbf16>
    %cst_43 = arith.constant dense<0.000000e+00> : vector<32x128xf32>
    %60 = tpu.matmul %0, %59, %cst_43 {dimension_numbers = #tpu.dot_dimension_numbers<[1], [0], [0], [1], [0, 0, 1, 1], [], []>} : vector<32x32xbf16>, vector<32x128xbf16>, vector<32x128xf32> -> vector<32x128xf32>
    %61 = arith.truncf %60 : vector<32x128xf32> to vector<32x128xbf16>
    %c8 = arith.constant 8 : index
    %c0_44 = arith.constant 0 : index
    %c0_45 = arith.constant 0 : index
    %62 = vector.load %arg3[%c8, %c0_44, %c0_45] : memref<26x128x128xbf16, #tpu.memory_space<vmem>>, vector<1x128x128xbf16>
    %63 = vector.shape_cast %62 : vector<1x128x128xbf16> to vector<128x128xbf16>
    %cst_46 = arith.constant dense<0.000000e+00> : vector<32x128xf32>
    %64 = tpu.matmul %61, %63, %cst_46 {dimension_numbers = #tpu.dot_dimension_numbers<[1], [0], [0], [1], [0, 0, 1, 1], [], []>} : vector<32x128xbf16>, vector<128x128xbf16>, vector<32x128xf32> -> vector<32x128xf32>
    %c9 = arith.constant 9 : index
    %c0_47 = arith.constant 0 : index
    %c0_48 = arith.constant 0 : index
    %65 = vector.load %arg3[%c9, %c0_47, %c0_48] : memref<26x128x128xbf16, #tpu.memory_space<vmem>>, vector<1x128x128xbf16>
    %66 = vector.shape_cast %65 : vector<1x128x128xbf16> to vector<128x128xbf16>
    %cst_49 = arith.constant dense<0.000000e+00> : vector<32x128xf32>
    %67 = tpu.matmul %59, %66, %cst_49 {dimension_numbers = #tpu.dot_dimension_numbers<[1], [0], [0], [1], [0, 0, 1, 1], [], []>} : vector<32x128xbf16>, vector<128x128xbf16>, vector<32x128xf32> -> vector<32x128xf32>
    %68 = arith.addf %64, %67 : vector<32x128xf32>
    %c4_50 = arith.constant 4 : index
    %c0_51 = arith.constant 0 : index
    %69 = vector.load %arg4[%c4_50, %c0_51] : memref<16x128xf32, #tpu.memory_space<vmem>>, vector<1x128xf32>
    %70 = vector.broadcast %69 : vector<1x128xf32> to vector<32x128xf32>
    %71 = arith.addf %68, %70 : vector<32x128xf32>
    %72 = arith.addf %71, %43 : vector<32x128xf32>
    %cst_52 = arith.constant 0.000000e+00 : f32
    %73 = vector.broadcast %cst_52 : f32 to vector<32x128xf32>
    %74 = arith.maximumf %72, %73 : vector<32x128xf32>
    %75 = arith.truncf %74 : vector<32x128xf32> to vector<32x128xbf16>
    %cst_53 = arith.constant dense<0.000000e+00> : vector<32x128xf32>
    %76 = tpu.matmul %0, %75, %cst_53 {dimension_numbers = #tpu.dot_dimension_numbers<[1], [0], [0], [1], [0, 0, 1, 1], [], []>} : vector<32x32xbf16>, vector<32x128xbf16>, vector<32x128xf32> -> vector<32x128xf32>
    %77 = arith.truncf %76 : vector<32x128xf32> to vector<32x128xbf16>
    %c10 = arith.constant 10 : index
    %c0_54 = arith.constant 0 : index
    %c0_55 = arith.constant 0 : index
    %78 = vector.load %arg3[%c10, %c0_54, %c0_55] : memref<26x128x128xbf16, #tpu.memory_space<vmem>>, vector<1x128x128xbf16>
    %79 = vector.shape_cast %78 : vector<1x128x128xbf16> to vector<128x128xbf16>
    %cst_56 = arith.constant dense<0.000000e+00> : vector<32x128xf32>
    %80 = tpu.matmul %77, %79, %cst_56 {dimension_numbers = #tpu.dot_dimension_numbers<[1], [0], [0], [1], [0, 0, 1, 1], [], []>} : vector<32x128xbf16>, vector<128x128xbf16>, vector<32x128xf32> -> vector<32x128xf32>
    %c11 = arith.constant 11 : index
    %c0_57 = arith.constant 0 : index
    %c0_58 = arith.constant 0 : index
    %81 = vector.load %arg3[%c11, %c0_57, %c0_58] : memref<26x128x128xbf16, #tpu.memory_space<vmem>>, vector<1x128x128xbf16>
    %82 = vector.shape_cast %81 : vector<1x128x128xbf16> to vector<128x128xbf16>
    %cst_59 = arith.constant dense<0.000000e+00> : vector<32x128xf32>
    %83 = tpu.matmul %75, %82, %cst_59 {dimension_numbers = #tpu.dot_dimension_numbers<[1], [0], [0], [1], [0, 0, 1, 1], [], []>} : vector<32x128xbf16>, vector<128x128xbf16>, vector<32x128xf32> -> vector<32x128xf32>
    %84 = arith.addf %80, %83 : vector<32x128xf32>
    %c5_60 = arith.constant 5 : index
    %c0_61 = arith.constant 0 : index
    %85 = vector.load %arg4[%c5_60, %c0_61] : memref<16x128xf32, #tpu.memory_space<vmem>>, vector<1x128xf32>
    %86 = vector.broadcast %85 : vector<1x128xf32> to vector<32x128xf32>
    %87 = arith.addf %84, %86 : vector<32x128xf32>
    %c12 = arith.constant 12 : index
    %c0_62 = arith.constant 0 : index
    %c0_63 = arith.constant 0 : index
    %88 = vector.load %arg3[%c12, %c0_62, %c0_63] : memref<26x128x128xbf16, #tpu.memory_space<vmem>>, vector<1x128x128xbf16>
    %89 = vector.shape_cast %88 : vector<1x128x128xbf16> to vector<128x128xbf16>
    %cst_64 = arith.constant dense<0.000000e+00> : vector<32x128xf32>
    %90 = tpu.matmul %77, %89, %cst_64 {dimension_numbers = #tpu.dot_dimension_numbers<[1], [0], [0], [1], [0, 0, 1, 1], [], []>} : vector<32x128xbf16>, vector<128x128xbf16>, vector<32x128xf32> -> vector<32x128xf32>
    %c13 = arith.constant 13 : index
    %c0_65 = arith.constant 0 : index
    %c0_66 = arith.constant 0 : index
    %91 = vector.load %arg3[%c13, %c0_65, %c0_66] : memref<26x128x128xbf16, #tpu.memory_space<vmem>>, vector<1x128x128xbf16>
    %92 = vector.shape_cast %91 : vector<1x128x128xbf16> to vector<128x128xbf16>
    %cst_67 = arith.constant dense<0.000000e+00> : vector<32x128xf32>
    %93 = tpu.matmul %75, %92, %cst_67 {dimension_numbers = #tpu.dot_dimension_numbers<[1], [0], [0], [1], [0, 0, 1, 1], [], []>} : vector<32x128xbf16>, vector<128x128xbf16>, vector<32x128xf32> -> vector<32x128xf32>
    %94 = arith.addf %90, %93 : vector<32x128xf32>
    %c6_68 = arith.constant 6 : index
    %c0_69 = arith.constant 0 : index
    %95 = vector.load %arg4[%c6_68, %c0_69] : memref<16x128xf32, #tpu.memory_space<vmem>>, vector<1x128xf32>
    %96 = vector.broadcast %95 : vector<1x128xf32> to vector<32x128xf32>
    %97 = arith.addf %94, %96 : vector<32x128xf32>
    %cst_70 = arith.constant -1.000000e+01 : f32
    %cst_71 = arith.constant 1.000000e+01 : f32
    %98 = vector.broadcast %cst_70 : f32 to vector<32x128xf32>
    %99 = arith.maximumf %98, %97 : vector<32x128xf32>
    %100 = vector.broadcast %cst_71 : f32 to vector<32x128xf32>
    %101 = arith.minimumf %100, %99 : vector<32x128xf32>
    %102 = math.exp %101 : vector<32x128xf32>
    %103 = arith.mulf %2, %102 : vector<32x128xf32>
    %104 = arith.addf %87, %103 : vector<32x128xf32>
    %105 = arith.truncf %104 : vector<32x128xf32> to vector<32x128xbf16>
    %cst_72 = arith.constant dense<0.000000e+00> : vector<32x128xf32>
    %106 = tpu.matmul %0, %105, %cst_72 {dimension_numbers = #tpu.dot_dimension_numbers<[1], [0], [0], [1], [0, 0, 1, 1], [], []>} : vector<32x32xbf16>, vector<32x128xbf16>, vector<32x128xf32> -> vector<32x128xf32>
    %107 = arith.truncf %106 : vector<32x128xf32> to vector<32x128xbf16>
    %c14 = arith.constant 14 : index
    %c0_73 = arith.constant 0 : index
    %c0_74 = arith.constant 0 : index
    %108 = vector.load %arg3[%c14, %c0_73, %c0_74] : memref<26x128x128xbf16, #tpu.memory_space<vmem>>, vector<1x128x128xbf16>
    %109 = vector.shape_cast %108 : vector<1x128x128xbf16> to vector<128x128xbf16>
    %cst_75 = arith.constant dense<0.000000e+00> : vector<32x128xf32>
    %110 = tpu.matmul %107, %109, %cst_75 {dimension_numbers = #tpu.dot_dimension_numbers<[1], [0], [0], [1], [0, 0, 1, 1], [], []>} : vector<32x128xbf16>, vector<128x128xbf16>, vector<32x128xf32> -> vector<32x128xf32>
    %c15 = arith.constant 15 : index
    %c0_76 = arith.constant 0 : index
    %c0_77 = arith.constant 0 : index
    %111 = vector.load %arg3[%c15, %c0_76, %c0_77] : memref<26x128x128xbf16, #tpu.memory_space<vmem>>, vector<1x128x128xbf16>
    %112 = vector.shape_cast %111 : vector<1x128x128xbf16> to vector<128x128xbf16>
    %cst_78 = arith.constant dense<0.000000e+00> : vector<32x128xf32>
    %113 = tpu.matmul %105, %112, %cst_78 {dimension_numbers = #tpu.dot_dimension_numbers<[1], [0], [0], [1], [0, 0, 1, 1], [], []>} : vector<32x128xbf16>, vector<128x128xbf16>, vector<32x128xf32> -> vector<32x128xf32>
    %114 = arith.addf %110, %113 : vector<32x128xf32>
    %c7_79 = arith.constant 7 : index
    %c0_80 = arith.constant 0 : index
    %115 = vector.load %arg4[%c7_79, %c0_80] : memref<16x128xf32, #tpu.memory_space<vmem>>, vector<1x128xf32>
    %116 = vector.broadcast %115 : vector<1x128xf32> to vector<32x128xf32>
    %117 = arith.addf %114, %116 : vector<32x128xf32>
    %118 = arith.truncf %117 : vector<32x128xf32> to vector<32x128xbf16>
    %cst_81 = arith.constant dense<0.000000e+00> : vector<32x128xf32>
    %119 = tpu.matmul %0, %118, %cst_81 {dimension_numbers = #tpu.dot_dimension_numbers<[1], [0], [0], [1], [0, 0, 1, 1], [], []>} : vector<32x32xbf16>, vector<32x128xbf16>, vector<32x128xf32> -> vector<32x128xf32>
    %120 = arith.truncf %119 : vector<32x128xf32> to vector<32x128xbf16>
    %c16 = arith.constant 16 : index
    %c0_82 = arith.constant 0 : index
    %c0_83 = arith.constant 0 : index
    %121 = vector.load %arg3[%c16, %c0_82, %c0_83] : memref<26x128x128xbf16, #tpu.memory_space<vmem>>, vector<1x128x128xbf16>
    %122 = vector.shape_cast %121 : vector<1x128x128xbf16> to vector<128x128xbf16>
    %cst_84 = arith.constant dense<0.000000e+00> : vector<32x128xf32>
    %123 = tpu.matmul %120, %122, %cst_84 {dimension_numbers = #tpu.dot_dimension_numbers<[1], [0], [0], [1], [0, 0, 1, 1], [], []>} : vector<32x128xbf16>, vector<128x128xbf16>, vector<32x128xf32> -> vector<32x128xf32>
    %c17 = arith.constant 17 : index
    %c0_85 = arith.constant 0 : index
    %c0_86 = arith.constant 0 : index
    %124 = vector.load %arg3[%c17, %c0_85, %c0_86] : memref<26x128x128xbf16, #tpu.memory_space<vmem>>, vector<1x128x128xbf16>
    %125 = vector.shape_cast %124 : vector<1x128x128xbf16> to vector<128x128xbf16>
    %cst_87 = arith.constant dense<0.000000e+00> : vector<32x128xf32>
    %126 = tpu.matmul %118, %125, %cst_87 {dimension_numbers = #tpu.dot_dimension_numbers<[1], [0], [0], [1], [0, 0, 1, 1], [], []>} : vector<32x128xbf16>, vector<128x128xbf16>, vector<32x128xf32> -> vector<32x128xf32>
    %127 = arith.addf %123, %126 : vector<32x128xf32>
    %c8_88 = arith.constant 8 : index
    %c0_89 = arith.constant 0 : index
    %128 = vector.load %arg4[%c8_88, %c0_89] : memref<16x128xf32, #tpu.memory_space<vmem>>, vector<1x128xf32>
    %129 = vector.broadcast %128 : vector<1x128xf32> to vector<32x128xf32>
    %130 = arith.addf %127, %129 : vector<32x128xf32>
    %cst_90 = arith.constant 0.000000e+00 : f32
    %131 = vector.broadcast %cst_90 : f32 to vector<32x128xf32>
    %132 = arith.maximumf %130, %131 : vector<32x128xf32>
    %133 = arith.truncf %132 : vector<32x128xf32> to vector<32x128xbf16>
    %cst_91 = arith.constant dense<0.000000e+00> : vector<32x128xf32>
    %134 = tpu.matmul %0, %133, %cst_91 {dimension_numbers = #tpu.dot_dimension_numbers<[1], [0], [0], [1], [0, 0, 1, 1], [], []>} : vector<32x32xbf16>, vector<32x128xbf16>, vector<32x128xf32> -> vector<32x128xf32>
    %135 = arith.truncf %134 : vector<32x128xf32> to vector<32x128xbf16>
    %c18 = arith.constant 18 : index
    %c0_92 = arith.constant 0 : index
    %c0_93 = arith.constant 0 : index
    %136 = vector.load %arg3[%c18, %c0_92, %c0_93] : memref<26x128x128xbf16, #tpu.memory_space<vmem>>, vector<1x128x128xbf16>
    %137 = vector.shape_cast %136 : vector<1x128x128xbf16> to vector<128x128xbf16>
    %cst_94 = arith.constant dense<0.000000e+00> : vector<32x128xf32>
    %138 = tpu.matmul %135, %137, %cst_94 {dimension_numbers = #tpu.dot_dimension_numbers<[1], [0], [0], [1], [0, 0, 1, 1], [], []>} : vector<32x128xbf16>, vector<128x128xbf16>, vector<32x128xf32> -> vector<32x128xf32>
    %c19 = arith.constant 19 : index
    %c0_95 = arith.constant 0 : index
    %c0_96 = arith.constant 0 : index
    %139 = vector.load %arg3[%c19, %c0_95, %c0_96] : memref<26x128x128xbf16, #tpu.memory_space<vmem>>, vector<1x128x128xbf16>
    %140 = vector.shape_cast %139 : vector<1x128x128xbf16> to vector<128x128xbf16>
    %cst_97 = arith.constant dense<0.000000e+00> : vector<32x128xf32>
    %141 = tpu.matmul %133, %140, %cst_97 {dimension_numbers = #tpu.dot_dimension_numbers<[1], [0], [0], [1], [0, 0, 1, 1], [], []>} : vector<32x128xbf16>, vector<128x128xbf16>, vector<32x128xf32> -> vector<32x128xf32>
    %142 = arith.addf %138, %141 : vector<32x128xf32>
    %c9_98 = arith.constant 9 : index
    %c0_99 = arith.constant 0 : index
    %143 = vector.load %arg4[%c9_98, %c0_99] : memref<16x128xf32, #tpu.memory_space<vmem>>, vector<1x128xf32>
    %144 = vector.broadcast %143 : vector<1x128xf32> to vector<32x128xf32>
    %145 = arith.addf %142, %144 : vector<32x128xf32>
    %146 = arith.addf %145, %117 : vector<32x128xf32>
    %cst_100 = arith.constant 0.000000e+00 : f32
    %147 = vector.broadcast %cst_100 : f32 to vector<32x128xf32>
    %148 = arith.maximumf %146, %147 : vector<32x128xf32>
    %149 = arith.truncf %148 : vector<32x128xf32> to vector<32x128xbf16>
    %cst_101 = arith.constant dense<0.000000e+00> : vector<32x128xf32>
    %150 = tpu.matmul %0, %149, %cst_101 {dimension_numbers = #tpu.dot_dimension_numbers<[1], [0], [0], [1], [0, 0, 1, 1], [], []>} : vector<32x32xbf16>, vector<32x128xbf16>, vector<32x128xf32> -> vector<32x128xf32>
    %151 = arith.truncf %150 : vector<32x128xf32> to vector<32x128xbf16>
    %c20 = arith.constant 20 : index
    %c0_102 = arith.constant 0 : index
    %c0_103 = arith.constant 0 : index
    %152 = vector.load %arg3[%c20, %c0_102, %c0_103] : memref<26x128x128xbf16, #tpu.memory_space<vmem>>, vector<1x128x128xbf16>
    %153 = vector.shape_cast %152 : vector<1x128x128xbf16> to vector<128x128xbf16>
    %cst_104 = arith.constant dense<0.000000e+00> : vector<32x128xf32>
    %154 = tpu.matmul %151, %153, %cst_104 {dimension_numbers = #tpu.dot_dimension_numbers<[1], [0], [0], [1], [0, 0, 1, 1], [], []>} : vector<32x128xbf16>, vector<128x128xbf16>, vector<32x128xf32> -> vector<32x128xf32>
    %c21 = arith.constant 21 : index
    %c0_105 = arith.constant 0 : index
    %c0_106 = arith.constant 0 : index
    %155 = vector.load %arg3[%c21, %c0_105, %c0_106] : memref<26x128x128xbf16, #tpu.memory_space<vmem>>, vector<1x128x128xbf16>
    %156 = vector.shape_cast %155 : vector<1x128x128xbf16> to vector<128x128xbf16>
    %cst_107 = arith.constant dense<0.000000e+00> : vector<32x128xf32>
    %157 = tpu.matmul %149, %156, %cst_107 {dimension_numbers = #tpu.dot_dimension_numbers<[1], [0], [0], [1], [0, 0, 1, 1], [], []>} : vector<32x128xbf16>, vector<128x128xbf16>, vector<32x128xf32> -> vector<32x128xf32>
    %158 = arith.addf %154, %157 : vector<32x128xf32>
    %c10_108 = arith.constant 10 : index
    %c0_109 = arith.constant 0 : index
    %159 = vector.load %arg4[%c10_108, %c0_109] : memref<16x128xf32, #tpu.memory_space<vmem>>, vector<1x128xf32>
    %160 = vector.broadcast %159 : vector<1x128xf32> to vector<32x128xf32>
    %161 = arith.addf %158, %160 : vector<32x128xf32>
    %cst_110 = arith.constant 0.000000e+00 : f32
    %162 = vector.broadcast %cst_110 : f32 to vector<32x128xf32>
    %163 = arith.maximumf %161, %162 : vector<32x128xf32>
    %c24 = arith.constant 24 : index
    %c0_111 = arith.constant 0 : index
    %c0_112 = arith.constant 0 : index
    %164 = vector.load %arg3[%c24, %c0_111, %c0_112] : memref<26x128x128xbf16, #tpu.memory_space<vmem>>, vector<1x128x128xbf16>
    %165 = vector.shape_cast %164 : vector<1x128x128xbf16> to vector<128x128xbf16>
    %cst_113 = arith.constant dense<0.000000e+00> : vector<32x128xf32>
    %166 = tpu.matmul %151, %165, %cst_113 {dimension_numbers = #tpu.dot_dimension_numbers<[1], [0], [0], [1], [0, 0, 1, 1], [], []>} : vector<32x128xbf16>, vector<128x128xbf16>, vector<32x128xf32> -> vector<32x128xf32>
    %c25 = arith.constant 25 : index
    %c0_114 = arith.constant 0 : index
    %c0_115 = arith.constant 0 : index
    %167 = vector.load %arg3[%c25, %c0_114, %c0_115] : memref<26x128x128xbf16, #tpu.memory_space<vmem>>, vector<1x128x128xbf16>
    %168 = vector.shape_cast %167 : vector<1x128x128xbf16> to vector<128x128xbf16>
    %cst_116 = arith.constant dense<0.000000e+00> : vector<32x128xf32>
    %169 = tpu.matmul %149, %168, %cst_116 {dimension_numbers = #tpu.dot_dimension_numbers<[1], [0], [0], [1], [0, 0, 1, 1], [], []>} : vector<32x128xbf16>, vector<128x128xbf16>, vector<32x128xf32> -> vector<32x128xf32>
    %170 = arith.addf %166, %169 : vector<32x128xf32>
    %c12_117 = arith.constant 12 : index
    %c0_118 = arith.constant 0 : index
    %171 = vector.load %arg4[%c12_117, %c0_118] : memref<16x128xf32, #tpu.memory_space<vmem>>, vector<1x128xf32>
    %172 = vector.broadcast %171 : vector<1x128xf32> to vector<32x128xf32>
    %173 = arith.addf %170, %172 : vector<32x128xf32>
    %174 = arith.truncf %163 : vector<32x128xf32> to vector<32x128xbf16>
    %cst_119 = arith.constant dense<0.000000e+00> : vector<32x128xf32>
    %175 = tpu.matmul %0, %174, %cst_119 {dimension_numbers = #tpu.dot_dimension_numbers<[1], [0], [0], [1], [0, 0, 1, 1], [], []>} : vector<32x32xbf16>, vector<32x128xbf16>, vector<32x128xf32> -> vector<32x128xf32>
    %176 = arith.truncf %175 : vector<32x128xf32> to vector<32x128xbf16>
    %c22 = arith.constant 22 : index
    %c0_120 = arith.constant 0 : index
    %c0_121 = arith.constant 0 : index
    %177 = vector.load %arg3[%c22, %c0_120, %c0_121] : memref<26x128x128xbf16, #tpu.memory_space<vmem>>, vector<1x128x128xbf16>
    %178 = vector.shape_cast %177 : vector<1x128x128xbf16> to vector<128x128xbf16>
    %cst_122 = arith.constant dense<0.000000e+00> : vector<32x128xf32>
    %179 = tpu.matmul %176, %178, %cst_122 {dimension_numbers = #tpu.dot_dimension_numbers<[1], [0], [0], [1], [0, 0, 1, 1], [], []>} : vector<32x128xbf16>, vector<128x128xbf16>, vector<32x128xf32> -> vector<32x128xf32>
    %c23 = arith.constant 23 : index
    %c0_123 = arith.constant 0 : index
    %c0_124 = arith.constant 0 : index
    %180 = vector.load %arg3[%c23, %c0_123, %c0_124] : memref<26x128x128xbf16, #tpu.memory_space<vmem>>, vector<1x128x128xbf16>
    %181 = vector.shape_cast %180 : vector<1x128x128xbf16> to vector<128x128xbf16>
    %cst_125 = arith.constant dense<0.000000e+00> : vector<32x128xf32>
    %182 = tpu.matmul %174, %181, %cst_125 {dimension_numbers = #tpu.dot_dimension_numbers<[1], [0], [0], [1], [0, 0, 1, 1], [], []>} : vector<32x128xbf16>, vector<128x128xbf16>, vector<32x128xf32> -> vector<32x128xf32>
    %183 = arith.addf %179, %182 : vector<32x128xf32>
    %c11_126 = arith.constant 11 : index
    %c0_127 = arith.constant 0 : index
    %184 = vector.load %arg4[%c11_126, %c0_127] : memref<16x128xf32, #tpu.memory_space<vmem>>, vector<1x128xf32>
    %185 = vector.broadcast %184 : vector<1x128xf32> to vector<32x128xf32>
    %186 = arith.addf %183, %185 : vector<32x128xf32>
    %187 = arith.addf %186, %173 : vector<32x128xf32>
    %cst_128 = arith.constant 0.000000e+00 : f32
    %188 = vector.broadcast %cst_128 : f32 to vector<32x128xf32>
    %189 = arith.maximumf %187, %188 : vector<32x128xf32>
    %190 = tpu.iota {dimensions = array<i32: 1>} : vector<1x128xi32>
    %191 = math.absf %189 : vector<32x128xf32>
    %cst_129 = arith.constant 0.000000e+00 : f32
    %192 = vector.broadcast %cst_129 : f32 to vector<32x128xf32>
    %193 = arith.subf %192, %191 : vector<32x128xf32>
    %194 = math.exp %193 : vector<32x128xf32>
    %195 = math.log1p %194 : vector<32x128xf32>
    %cst_130 = arith.constant 0.000000e+00 : f32
    %196 = vector.broadcast %cst_130 : f32 to vector<32x128xf32>
    %197 = arith.subf %196, %189 : vector<32x128xf32>
    %cst_131 = arith.constant 0.000000e+00 : f32
    %198 = vector.broadcast %cst_131 : f32 to vector<32x128xf32>
    %199 = arith.maximumf %197, %198 : vector<32x128xf32>
    %200 = arith.addf %199, %195 : vector<32x128xf32>
    %cst_132 = arith.constant 0.000000e+00 : f32
    %201 = vector.broadcast %cst_132 : f32 to vector<32x128xf32>
    %202 = arith.subf %201, %200 : vector<32x128xf32>
    %cst_133 = arith.constant -1.000000e+02 : f32
    %203 = vector.broadcast %cst_133 : f32 to vector<32x128xf32>
    %204 = arith.maximumf %202, %203 : vector<32x128xf32>
    %cst_134 = arith.constant 0.000000e+00 : f32
    %205 = vector.broadcast %cst_134 : f32 to vector<32x128xf32>
    %206 = arith.maximumf %189, %205 : vector<32x128xf32>
    %207 = arith.addf %206, %195 : vector<32x128xf32>
    %cst_135 = arith.constant 0.000000e+00 : f32
    %208 = vector.broadcast %cst_135 : f32 to vector<32x128xf32>
    %209 = arith.subf %208, %207 : vector<32x128xf32>
    %cst_136 = arith.constant -1.000000e+02 : f32
    %210 = vector.broadcast %cst_136 : f32 to vector<32x128xf32>
    %211 = arith.maximumf %209, %210 : vector<32x128xf32>
    %212 = arith.mulf %1, %204 : vector<32x128xf32>
    %cst_137 = arith.constant 1.000000e+00 : f32
    %213 = vector.broadcast %cst_137 : f32 to vector<32x128xf32>
    %214 = arith.subf %213, %1 : vector<32x128xf32>
    %215 = arith.mulf %214, %211 : vector<32x128xf32>
    %216 = arith.addf %212, %215 : vector<32x128xf32>
    %cst_138 = arith.constant 0.000000e+00 : f32
    %217 = vector.broadcast %cst_138 : f32 to vector<32x128xf32>
    %218 = arith.subf %217, %216 : vector<32x128xf32>
    %c16_i32 = arith.constant 16 : i32
    %219 = vector.broadcast %c16_i32 : i32 to vector<1x128xi32>
    %220 = arith.cmpi slt, %190, %219 : vector<1x128xi32>
    %cst_139 = arith.constant 0.000000e+00 : f32
    %221 = vector.shape_cast %220 : vector<1x128xi1> to vector<1x128xi1>
    %222 = vector.broadcast %221 : vector<1x128xi1> to vector<32x128xi1>
    %223 = vector.broadcast %cst_139 : f32 to vector<32x128xf32>
    %224 = arith.select %222, %218, %223 : vector<32x128xi1>, vector<32x128xf32>
    %225 = vector.shape_cast %224 : vector<32x128xf32> to vector<1x32x128xf32>
    %cst_140 = arith.constant dense<0.000000e+00> : vector<1xf32>
    %226 = vector.multi_reduction <add>, %225, %cst_140 [1, 2] : vector<1x32x128xf32> to vector<1xf32>
    %227 = vector.shape_cast %226 : vector<1xf32> to vector<1x1x1xf32>
    %228 = vector.extract %227[0, 0, 0] : f32 from vector<1x1x1xf32>
    %229 = vector.broadcast %228 : f32 to vector<1x1xf32>
    %cst_141 = arith.constant 0.001953125 : f32
    %230 = vector.broadcast %cst_141 : f32 to vector<1x1xf32>
    %231 = arith.mulf %229, %230 : vector<1x1xf32>
    %cst_142 = arith.constant 1.000000e+00 : f32
    %232 = vector.broadcast %cst_142 : f32 to vector<32x128xf32>
    %233 = arith.addf %232, %97 : vector<32x128xf32>
    %234 = arith.mulf %87, %87 : vector<32x128xf32>
    %235 = arith.subf %233, %234 : vector<32x128xf32>
    %236 = math.exp %97 : vector<32x128xf32>
    %237 = arith.subf %235, %236 : vector<32x128xf32>
    %238 = vector.shape_cast %237 : vector<32x128xf32> to vector<1x32x128xf32>
    %cst_143 = arith.constant dense<0.000000e+00> : vector<1xf32>
    %239 = vector.multi_reduction <add>, %238, %cst_143 [1, 2] : vector<1x32x128xf32> to vector<1xf32>
    %240 = vector.shape_cast %239 : vector<1xf32> to vector<1x1x1xf32>
    %241 = vector.extract %240[0, 0, 0] : f32 from vector<1x1x1xf32>
    %242 = vector.broadcast %241 : f32 to vector<1x1xf32>
    %cst_144 = arith.constant -0.001953125 : f32
    %243 = vector.broadcast %cst_144 : f32 to vector<1x1xf32>
    %244 = arith.mulf %242, %243 : vector<1x1xf32>
    %cst_145 = arith.constant 2.000000e-01 : f32
    %245 = vector.broadcast %cst_145 : f32 to vector<1x1xf32>
    %246 = arith.mulf %245, %244 : vector<1x1xf32>
    %247 = arith.addf %231, %246 : vector<1x1xf32>
    %c0_i32 = arith.constant 0 : i32
    %248 = vector.broadcast %c0_i32 : i32 to vector<1x128xi32>
    %249 = arith.cmpi eq, %190, %248 : vector<1x128xi32>
    %c1_i32 = arith.constant 1 : i32
    %250 = vector.broadcast %c1_i32 : i32 to vector<1x128xi32>
    %251 = arith.cmpi eq, %190, %250 : vector<1x128xi32>
    %c2_i32 = arith.constant 2 : i32
    %252 = vector.broadcast %c2_i32 : i32 to vector<1x128xi32>
    %253 = arith.cmpi eq, %190, %252 : vector<1x128xi32>
    %cst_146 = arith.constant 0.000000e+00 : f32
    %254 = vector.shape_cast %244 : vector<1x1xf32> to vector<1x1xf32>
    %255 = vector.broadcast %254 : vector<1x1xf32> to vector<1x128xf32>
    %256 = vector.broadcast %cst_146 : f32 to vector<1x128xf32>
    %257 = arith.select %253, %255, %256 : vector<1x128xi1>, vector<1x128xf32>
    %258 = vector.shape_cast %231 : vector<1x1xf32> to vector<1x1xf32>
    %259 = vector.broadcast %258 : vector<1x1xf32> to vector<1x128xf32>
    %260 = arith.select %251, %259, %257 : vector<1x128xi1>, vector<1x128xf32>
    %261 = vector.shape_cast %247 : vector<1x1xf32> to vector<1x1xf32>
    %262 = vector.broadcast %261 : vector<1x1xf32> to vector<1x128xf32>
    %263 = arith.select %249, %262, %260 : vector<1x128xi1>, vector<1x128xf32>
    %c0_147 = arith.constant 0 : index
    %c0_148 = arith.constant 0 : index
    %264 = vector.load %arg5[%c0_147, %c0_148] : memref<1x128xf32, #tpu.memory_space<vmem>>, vector<1x128xf32>
    tpu.vector_store %arg5[%c0_147, %c0_148], %263 {strides = array<i32>} : memref<1x128xf32, #tpu.memory_space<vmem>>, vector<1x128xf32>,
    return
  }
}

</mosaic_0001>

<llo_original>
// kernel: graphsage_vae_forward.1
$region0: #{graphsage_vae_forward.1}
  #allocation0 [shape = 'u32[]', space=smem, size = 0x4, offset = 0x4, fixed_abs, tag = 'smem constant byte address 0x4 - core index']
  #allocation1 [shape = 'u32[144,128]{1,0:T(1,128)}', space=vmem, size = 0x12000, scoped, tag = 'internal scratch']
  %s0 = inlined_call_operand.hbm [shape: bf16[32,32], index: 0, kind: input, shape index: {}]
  %s1 = inlined_call_operand.hbm [shape: f32[32,128], index: 1, kind: input, shape index: {}]
  %s2 = inlined_call_operand.hbm [shape: f32[32,128], index: 2, kind: input, shape index: {}]
  %s3 = inlined_call_operand.hbm [shape: bf16[26,128,128], index: 3, kind: input, shape index: {}]
  %s4 = inlined_call_operand.hbm [shape: f32[16,128], index: 4, kind: input, shape index: {}]
  %s5 = inlined_call_operand.vmem [shape: f32[1,128], index: 5, kind: output, shape index: {}]
  %s6 = sld [smem:[#allocation0]]
  $region50: #{graphsage_vae_forward.1} parent=0
    _
  %s8 = ssub.s32 1, %s6
  %s9 = scalar_select 0, %s8, %s6
  $region1: #{graphsage_vae_forward.1} parent=0
    #allocation2 [shape = 'u8[8192]{0}', space=vmem, size = 0x2000, scoped, tag = 'input window, operand 0, single buffered']
    #allocation3 [shape = 's32[1]{0}', space=sflag, size = 0x4, scoped, tag = 'scoped memory for graphsage_vae_forward.1']
    #allocation4 [shape = 'u8[16384]{0}', space=vmem, size = 0x4000, scoped, tag = 'input window, operand 1, single buffered']
    #allocation5 [shape = 's32[1]{0}', space=sflag, size = 0x4, scoped, tag = 'scoped memory for graphsage_vae_forward.1']
    #allocation6 [shape = 'u8[16384]{0}', space=vmem, size = 0x4000, scoped, tag = 'input window, operand 2, single buffered']
    #allocation7 [shape = 'u8[851968]{0}', space=vmem, size = 0xd0000, scoped, tag = 'input window, operand 3, single buffered']
    #allocation8 [shape = 's32[1]{0}', space=sflag, size = 0x4, scoped, tag = 'scoped memory for graphsage_vae_forward.1']
    #allocation9 [shape = 'u8[8192]{0}', space=vmem, size = 0x2000, scoped, tag = 'input window, operand 4, single buffered']
    %10 = vsyncpa [#allocation3], 0
    %11 = vsyncpa [#allocation5], 0
    %12 = vsyncpa [#allocation8], 0
    // Predicated region
    $region2: #{graphsage_vae_forward.1} parent=1 // pred_check
      _
    $region3: #{graphsage_vae_forward.1} parent=1 // pred_check_branch
      %14 = sbr.rel (0) target = $region5
    $region4: #{graphsage_vae_forward.1} parent=1 // pred_region
      %s16 = ssub.s32 256, 256
      %17 = vsyncadd [#allocation3], %s16
      %s18 = sshll.u32 [#allocation2], 4
      %s19 = int_to_ptr.vmem [resolvable:$true] %s18
      %24 = dma.hbm_to_vmem [thread:$0]  %s0, 256, %s19, [#allocation3], 64, 64, 4
    $region5: #{graphsage_vae_forward.1} parent=1 // pred_fallthru
      _
    // Predicated region
    $region6: #{graphsage_vae_forward.1} parent=1 // pred_check
      _
    $region7: #{graphsage_vae_forward.1} parent=1 // pred_check_branch
      %26 = sbr.rel (0) target = $region9
    $region8: #{graphsage_vae_forward.1} parent=1 // pred_region
      %s28 = ssub.s32 512, 512
      %29 = vsyncadd [#allocation5], %s28
      %s30 = sshll.u32 [#allocation4], 4
      %s31 = int_to_ptr.vmem [resolvable:$true] %s30
      %36 = dma.hbm_to_vmem [thread:$0]  %s1, 512, %s31, [#allocation5], 128, 128, 8
    $region9: #{graphsage_vae_forward.1} parent=1 // pred_fallthru
      _
    // Predicated region
    $region10: #{graphsage_vae_forward.1} parent=1 // pred_check
      _
    $region11: #{graphsage_vae_forward.1} parent=1 // pred_check_branch
      %38 = sbr.rel (0) target = $region13
    $region12: #{graphsage_vae_forward.1} parent=1 // pred_region
      %s40 = ssub.s32 512, 512
      %41 = vsyncadd [#allocation5], %s40
      %s42 = sshll.u32 [#allocation6], 4
      %s43 = int_to_ptr.vmem [resolvable:$true] %s42
      %48 = dma.hbm_to_vmem [thread:$0]  %s2, 512, %s43, [#allocation5], 128, 128, 8
    $region13: #{graphsage_vae_forward.1} parent=1 // pred_fallthru
      _
    // Predicated region
    $region14: #{graphsage_vae_forward.1} parent=1 // pred_check
      _
    $region15: #{graphsage_vae_forward.1} parent=1 // pred_check_branch
      %50 = sbr.rel (0) target = $region17
    $region16: #{graphsage_vae_forward.1} parent=1 // pred_region
      %s52 = ssub.s32 26624, 26624
      %53 = vsyncadd [#allocation8], %s52
      %s54 = sshll.u32 [#allocation7], 4
      %s55 = int_to_ptr.vmem [resolvable:$true] %s54
      %60 = dma.hbm_to_vmem [thread:$0]  %s3, 26624, %s55, [#allocation8], 64, 64, 4
    $region17: #{graphsage_vae_forward.1} parent=1 // pred_fallthru
      _
    // Predicated region
    $region18: #{graphsage_vae_forward.1} parent=1 // pred_check
      _
    $region19: #{graphsage_vae_forward.1} parent=1 // pred_check_branch
      %62 = sbr.rel (0) target = $region21
    $region20: #{graphsage_vae_forward.1} parent=1 // pred_region
      %s64 = ssub.s32 256, 256
      %65 = vsyncadd [#allocation8], %s64
      %s66 = sshll.u32 [#allocation9], 4
      %s67 = int_to_ptr.vmem [resolvable:$true] %s66
      %72 = dma.hbm_to_vmem [thread:$0]  %s4, 256, %s67, [#allocation8], 128, 128, 8
    $region21: #{graphsage_vae_forward.1} parent=1 // pred_fallthru
      _
    // Predicated region
    $region22: #{graphsage_vae_forward.1} parent=1 // pred_check
      _
    $region23: #{graphsage_vae_forward.1} parent=1 // pred_check_branch
      %74 = sbr.rel (0) target = $region25
    $region24: #{graphsage_vae_forward.1} parent=1 // pred_region
      %75 = dma.done [#allocation3], 256
    $region25: #{graphsage_vae_forward.1} parent=1 // pred_fallthru
      _
    // Predicated region
    $region26: #{graphsage_vae_forward.1} parent=1 // pred_check
      _
    $region27: #{graphsage_vae_forward.1} parent=1 // pred_check_branch
      %77 = sbr.rel (0) target = $region29
    $region28: #{graphsage_vae_forward.1} parent=1 // pred_region
      %78 = dma.done [#allocation5], 512
    $region29: #{graphsage_vae_forward.1} parent=1 // pred_fallthru
      _
    // Predicated region
    $region30: #{graphsage_vae_forward.1} parent=1 // pred_check
      _
    $region31: #{graphsage_vae_forward.1} parent=1 // pred_check_branch
      %80 = sbr.rel (0) target = $region33
    $region32: #{graphsage_vae_forward.1} parent=1 // pred_region
      %81 = dma.done [#allocation5], 512
    $region33: #{graphsage_vae_forward.1} parent=1 // pred_fallthru
      _
    // Predicated region
    $region34: #{graphsage_vae_forward.1} parent=1 // pred_check
      _
    $region35: #{graphsage_vae_forward.1} parent=1 // pred_check_branch
      %83 = sbr.rel (0) target = $region37
    $region36: #{graphsage_vae_forward.1} parent=1 // pred_region
      %84 = dma.done [#allocation8], 26624
    $region37: #{graphsage_vae_forward.1} parent=1 // pred_fallthru
      _
    // Predicated region
    $region38: #{graphsage_vae_forward.1} parent=1 // pred_check
      _
    $region39: #{graphsage_vae_forward.1} parent=1 // pred_check_branch
      %86 = sbr.rel (0) target = $region41
    $region40: #{graphsage_vae_forward.1} parent=1 // pred_region
      %87 = dma.done [#allocation8], 256
    $region41: #{graphsage_vae_forward.1} parent=1 // pred_fallthru
      _
    %v89 = vld [vmem:[#allocation2] sm:$0xf]
    %v90 = vld [vmem:[#allocation2 + $0x4] sm:$0xf]
    %v91 = vld [vmem:[#allocation2 + $0x8] sm:$0xf]
    %v92 = vld [vmem:[#allocation2 + $0xc] sm:$0xf]
    %v93 = vld [vmem:[#allocation4] sm:$0xff]
    %v94 = vld [vmem:[#allocation4 + $0x8] sm:$0xff]
    %v95 = vld [vmem:[#allocation4 + $0x10] sm:$0xff]
    %v96 = vld [vmem:[#allocation4 + $0x18] sm:$0xff]
    %v97 = vld [vmem:[#allocation6] sm:$0xff]
    %v98 = vld [vmem:[#allocation6 + $0x8] sm:$0xff]
    %v99 = vld [vmem:[#allocation6 + $0x10] sm:$0xff]
    %v100 = vld [vmem:[#allocation6 + $0x18] sm:$0xff]
    %v101 = vpack.c.bf16 %v94, %v93
    %v102 = vpack.c.bf16 %v96, %v95
    %v107 = vunpack.c.l.b16 %v89
    %v108 = vunpack.c.l.b16 %v90
    %v109 = vunpack.c.l.b16 %v91
    %v110 = vunpack.c.l.b16 %v92
    %v111 = vpack.c.b16 %v108, %v107
    %v112 = vpack.c.b16 %v110, %v109
    %vm113 = vcmask 261120
    %v115 = vsel %vm113, %v111, 0
    %v118 = vsel %vm113, %v112, 0
    %120 = vmatprep.subr.bf16.mxu0 0
    %121 = vmatpush1.bf16.msra.mxu0 0
    %122 = vmatprep.subr.bf16.mxu0 0
    %123 = vmatpush1.bf16.msra.mxu0 0
    %124 = vmatprep.subr.bf16.mxu0 0
    %125 = vmatpush1.bf16.msra.mxu0 0
    %126 = vmatprep.subr.bf16.mxu0 0
    %127 = vmatpush1.bf16.msra.mxu0 0
    %128 = vmatprep.subr.bf16.mxu0 0
    %129 = vmatpush1.bf16.msra.mxu0 0
    %130 = vmatprep.subr.bf16.mxu0 0
    %131 = vmatpush1.bf16.msra.mxu0 0
    %132 = vmatprep.subr.bf16.mxu0 0
    %133 = vmatpush1.bf16.msra.mxu0 %v102
    %134 = vmatprep.subr.bf16.mxu0 0
    %135 = vmatpush1.bf16.msra.mxu0 %v101
    %136 = vmatprep.subr.bf16.mxu0 0
    %137 = vmatpush2.bf16.msra.mxu0 0
    %138 = vmatprep.subr.bf16.mxu0 0
    %139 = vmatpush2.bf16.msra.mxu0 0
    %140 = vmatprep.subr.bf16.mxu0 0
    %141 = vmatpush2.bf16.msra.mxu0 0
    %142 = vmatprep.subr.bf16.mxu0 0
    %143 = vmatpush2.bf16.msra.mxu0 0
    %144 = vmatprep.subr.bf16.mxu0 0
    %145 = vmatpush2.bf16.msra.mxu0 0
    %146 = vmatprep.subr.bf16.mxu0 0
    %147 = vmatpush2.bf16.msra.mxu0 0
    %148 = vmatprep.subr.bf16.mxu0 0
    %149 = vmatpush2.bf16.msra.mxu0 0
    %150 = vmatprep.subr.bf16.mxu0 0
    %151 = vmatpush2.bf16.msra.mxu0 0
    %152 = vmatprep.mubr.bf16.mxu0 0
    %153 = vmatmul.mubr.bf16.gmra.mxu0 %v115
    %v154 = vpop.f32.mrf.mxu0
    %v155 = vadd.f32 0.0, %v154
    %v156 = vpop.f32.mrf.mxu0
    %v157 = vpop.f32.mrf.mxu0
    %v158 = vadd.f32 0.0, %v157
    %v159 = vpop.f32.mrf.mxu0
    %160 = vmatprep.mubr.bf16.mxu0 0
    %161 = vmatmul.mubr.bf16.gmra.mxu0 %v118
    %v162 = vpop.f32.mrf.mxu0
    %v163 = vadd.f32 0.0, %v162
    %v164 = vpop.f32.mrf.mxu0
    %v165 = vpop.f32.mrf.mxu0
    %v166 = vadd.f32 0.0, %v165
    %v167 = vpop.f32.mrf.mxu0
    %168 = vdwg.mxu0
    %v169 = vpack.c.bf16 %v158, %v155
    %v170 = vpack.c.bf16 %v166, %v163
    %v171 = vld [vmem:[#allocation7] sm:$0xf]
    %v172 = vld [vmem:[#allocation7 + $0x4] sm:$0xf]
    %v173 = vld [vmem:[#allocation7 + $0x8] sm:$0xf]
    %v174 = vld [vmem:[#allocation7 + $0xc] sm:$0xf]
    %v175 = vld [vmem:[#allocation7 + $0x10] sm:$0xf]
    %v176 = vld [vmem:[#allocation7 + $0x14] sm:$0xf]
    %v177 = vld [vmem:[#allocation7 + $0x18] sm:$0xf]
    %v178 = vld [vmem:[#allocation7 + $0x1c] sm:$0xf]
    %v179 = vld [vmem:[#allocation7 + $0x20] sm:$0xf]
    %v180 = vld [vmem:[#allocation7 + $0x24] sm:$0xf]
    %v181 = vld [vmem:[#allocation7 + $0x28] sm:$0xf]
    %v182 = vld [vmem:[#allocation7 + $0x2c] sm:$0xf]
    %v183 = vld [vmem:[#allocation7 + $0x30] sm:$0xf]
    %v184 = vld [vmem:[#allocation7 + $0x34] sm:$0xf]
    %v185 = vld [vmem:[#allocation7 + $0x38] sm:$0xf]
    %v186 = vld [vmem:[#allocation7 + $0x3c] sm:$0xf]
    %s187 = scalar_lea.vmem [#allocation7], 64
    %v188 = vld [vmem:[%s187] sm:$0xf]
    %v189 = vld [vmem:[%s187 + $0x4] sm:$0xf]
    %v190 = vld [vmem:[%s187 + $0x8] sm:$0xf]
    %v191 = vld [vmem:[%s187 + $0xc] sm:$0xf]
    %v192 = vld [vmem:[%s187 + $0x10] sm:$0xf]
    %v193 = vld [vmem:[%s187 + $0x14] sm:$0xf]
    %v194 = vld [vmem:[%s187 + $0x18] sm:$0xf]
    %v195 = vld [vmem:[%s187 + $0x1c] sm:$0xf]
    %v196 = vld [vmem:[%s187 + $0x20] sm:$0xf]
    %v197 = vld [vmem:[%s187 + $0x24] sm:$0xf]
    %v198 = vld [vmem:[%s187 + $0x28] sm:$0xf]
    %v199 = vld [vmem:[%s187 + $0x2c] sm:$0xf]
    %v200 = vld [vmem:[%s187 + $0x30] sm:$0xf]
    %v201 = vld [vmem:[%s187 + $0x34] sm:$0xf]
    %v202 = vld [vmem:[%s187 + $0x38] sm:$0xf]
    %v203 = vld [vmem:[%s187 + $0x3c] sm:$0xf]
    %v220 = vunpack.c.l.b16 %v188
    %v221 = vunpack.c.l.b16 %v189
    %v222 = vunpack.c.l.b16 %v190
    %v223 = vunpack.c.l.b16 %v191
    %v224 = vunpack.c.l.b16 %v192
    %v225 = vunpack.c.l.b16 %v193
    %v226 = vunpack.c.l.b16 %v194
    %v227 = vunpack.c.l.b16 %v195
    %v228 = vunpack.c.l.b16 %v196
    %v229 = vunpack.c.l.b16 %v197
    %v230 = vunpack.c.l.b16 %v198
    %v231 = vunpack.c.l.b16 %v199
    %v232 = vunpack.c.l.b16 %v200
    %v233 = vunpack.c.l.b16 %v201
    %v234 = vunpack.c.l.b16 %v202
    %v235 = vunpack.c.l.b16 %v203
    %v236 = vpack.c.b16 %v221, %v220
    %v237 = vpack.c.b16 %v223, %v222
    %v238 = vpack.c.b16 %v225, %v224
    %v239 = vpack.c.b16 %v227, %v226
    %v240 = vpack.c.b16 %v229, %v228
    %v241 = vpack.c.b16 %v231, %v230
    %v242 = vpack.c.b16 %v233, %v232
    %v243 = vpack.c.b16 %v235, %v234
    %252 = vmatprep.subr.bf16.mxu0 0
    %253 = vmatpush1.bf16.msra.mxu0 %v243
    %254 = vmatprep.subr.bf16.mxu0 0
    %255 = vmatpush1.bf16.msra.mxu0 %v242
    %256 = vmatprep.subr.bf16.mxu0 0
    %257 = vmatpush1.bf16.msra.mxu0 %v241
    %258 = vmatprep.subr.bf16.mxu0 0
    %259 = vmatpush1.bf16.msra.mxu0 %v240
    %260 = vmatprep.subr.bf16.mxu0 0
    %261 = vmatpush1.bf16.msra.mxu0 %v239
    %262 = vmatprep.subr.bf16.mxu0 0
    %263 = vmatpush1.bf16.msra.mxu0 %v238
    %264 = vmatprep.subr.bf16.mxu0 0
    %265 = vmatpush1.bf16.msra.mxu0 %v237
    %266 = vmatprep.subr.bf16.mxu0 0
    %267 = vmatpush1.bf16.msra.mxu0 %v236
    %268 = vmatprep.subr.bf16.mxu0 0
    %269 = vmatpush2.bf16.msra.mxu0 0
    %270 = vmatprep.subr.bf16.mxu0 0
    %271 = vmatpush2.bf16.msra.mxu0 0
    %272 = vmatprep.subr.bf16.mxu0 0
    %273 = vmatpush2.bf16.msra.mxu0 0
    %274 = vmatprep.subr.bf16.mxu0 0
    %275 = vmatpush2.bf16.msra.mxu0 0
    %276 = vmatprep.subr.bf16.mxu0 0
    %277 = vmatpush2.bf16.msra.mxu0 0
    %278 = vmatprep.subr.bf16.mxu0 0
    %279 = vmatpush2.bf16.msra.mxu0 0
    %280 = vmatprep.subr.bf16.mxu0 0
    %281 = vmatpush2.bf16.msra.mxu0 0
    %282 = vmatprep.subr.bf16.mxu0 0
    %283 = vmatpush2.bf16.msra.mxu0 0
    %284 = vmatprep.mubr.bf16.mxu0 0
    %285 = vmatmul.mubr.bf16.gmra.mxu0 %v101
    %v286 = vpop.f32.mrf.mxu0
    %v287 = vadd.f32 0.0, %v286
    %v288 = vpop.f32.mrf.mxu0
    %v289 = vpop.f32.mrf.mxu0
    %v290 = vadd.f32 0.0, %v289
    %v291 = vpop.f32.mrf.mxu0
    %292 = vmatprep.mubr.bf16.mxu0 0
    %293 = vmatmul.mubr.bf16.gmra.mxu0 %v102
    %v294 = vpop.f32.mrf.mxu0
    %v295 = vadd.f32 0.0, %v294
    %v296 = vpop.f32.mrf.mxu0
    %v297 = vpop.f32.mrf.mxu0
    %v298 = vadd.f32 0.0, %v297
    %v299 = vpop.f32.mrf.mxu0
    %300 = vdwg.mxu0
    %v317 = vunpack.c.l.b16 %v171
    %v318 = vunpack.c.l.b16 %v172
    %v319 = vunpack.c.l.b16 %v173
    %v320 = vunpack.c.l.b16 %v174
    %v321 = vunpack.c.l.b16 %v175
    %v322 = vunpack.c.l.b16 %v176
    %v323 = vunpack.c.l.b16 %v177
    %v324 = vunpack.c.l.b16 %v178
    %v325 = vunpack.c.l.b16 %v179
    %v326 = vunpack.c.l.b16 %v180
    %v327 = vunpack.c.l.b16 %v181
    %v328 = vunpack.c.l.b16 %v182
    %v329 = vunpack.c.l.b16 %v183
    %v330 = vunpack.c.l.b16 %v184
    %v331 = vunpack.c.l.b16 %v185
    %v332 = vunpack.c.l.b16 %v186
    %v333 = vpack.c.b16 %v318, %v317
    %v334 = vpack.c.b16 %v320, %v319
    %v335 = vpack.c.b16 %v322, %v321
    %v336 = vpack.c.b16 %v324, %v323
    %v337 = vpack.c.b16 %v326, %v325
    %v338 = vpack.c.b16 %v328, %v327
    %v339 = vpack.c.b16 %v330, %v329
    %v340 = vpack.c.b16 %v332, %v331
    %349 = vmatprep.subr.bf16.mxu0 0
    %350 = vmatpush1.bf16.msra.mxu0 %v340
    %351 = vmatprep.subr.bf16.mxu0 0
    %352 = vmatpush1.bf16.msra.mxu0 %v339
    %353 = vmatprep.subr.bf16.mxu0 0
    %354 = vmatpush1.bf16.msra.mxu0 %v338
    %355 = vmatprep.subr.bf16.mxu0 0
    %356 = vmatpush1.bf16.msra.mxu0 %v337
    %357 = vmatprep.subr.bf16.mxu0 0
    %358 = vmatpush1.bf16.msra.mxu0 %v336
    %359 = vmatprep.subr.bf16.mxu0 0
    %360 = vmatpush1.bf16.msra.mxu0 %v335
    %361 = vmatprep.subr.bf16.mxu0 0
    %362 = vmatpush1.bf16.msra.mxu0 %v334
    %363 = vmatprep.subr.bf16.mxu0 0
    %364 = vmatpush1.bf16.msra.mxu0 %v333
    %365 = vmatprep.subr.bf16.mxu0 0
    %366 = vmatpush2.bf16.msra.mxu0 0
    %367 = vmatprep.subr.bf16.mxu0 0
    %368 = vmatpush2.bf16.msra.mxu0 0
    %369 = vmatprep.subr.bf16.mxu0 0
    %370 = vmatpush2.bf16.msra.mxu0 0
    %371 = vmatprep.subr.bf16.mxu0 0
    %372 = vmatpush2.bf16.msra.mxu0 0
    %373 = vmatprep.subr.bf16.mxu0 0
    %374 = vmatpush2.bf16.msra.mxu0 0
    %375 = vmatprep.subr.bf16.mxu0 0
    %376 = vmatpush2.bf16.msra.mxu0 0
    %377 = vmatprep.subr.bf16.mxu0 0
    %378 = vmatpush2.bf16.msra.mxu0 0
    %379 = vmatprep.subr.bf16.mxu0 0
    %380 = vmatpush2.bf16.msra.mxu0 0
    %381 = vmatprep.mubr.bf16.mxu0 0
    %382 = vmatmul.mubr.bf16.gmra.mxu0 %v169
    %v383 = vpop.f32.mrf.mxu0
    %v384 = vadd.f32 %v287, %v383
    %v385 = vpop.f32.mrf.mxu0
    %v386 = vpop.f32.mrf.mxu0
    %v387 = vadd.f32 %v290, %v386
    %v388 = vpop.f32.mrf.mxu0
    %389 = vmatprep.mubr.bf16.mxu0 0
    %390 = vmatmul.mubr.bf16.gmra.mxu0 %v170
    %v391 = vpop.f32.mrf.mxu0
    %v392 = vadd.f32 %v295, %v391
    %v393 = vpop.f32.mrf.mxu0
    %v394 = vpop.f32.mrf.mxu0
    %v395 = vadd.f32 %v298, %v394
    %v396 = vpop.f32.mrf.mxu0
    %397 = vdwg.mxu0
    %v398 = vld [vmem:[#allocation9] sm:$0x1]
    %v399 = vlaneseq
    %v400 = vshrl.u32 %v399, 7
    %v401 = vsub.s32 0, %v400
    %v402 = vrot.slane %v398, %v401
    %v403 = vadd.f32 %v384, %v402
    %v404 = vadd.f32 %v387, %v402
    %v405 = vadd.f32 %v392, %v402
    %v406 = vadd.f32 %v395, %v402
    %v407 = vmax.f32 %v403, 0.0
    %v408 = vmax.f32 %v404, 0.0
    %v409 = vmax.f32 %v405, 0.0
    %v410 = vmax.f32 %v406, 0.0
    %s411 = scalar_lea.vmem [#allocation7], 256
    %v412 = vld [vmem:[%s411] sm:$0xf]
    %v413 = vld [vmem:[%s411 + $0x4] sm:$0xf]
    %v414 = vld [vmem:[%s411 + $0x8] sm:$0xf]
    %v415 = vld [vmem:[%s411 + $0xc] sm:$0xf]
    %v416 = vld [vmem:[%s411 + $0x10] sm:$0xf]
    %v417 = vld [vmem:[%s411 + $0x14] sm:$0xf]
    %v418 = vld [vmem:[%s411 + $0x18] sm:$0xf]
    %v419 = vld [vmem:[%s411 + $0x1c] sm:$0xf]
    %v420 = vld [vmem:[%s411 + $0x20] sm:$0xf]
    %v421 = vld [vmem:[%s411 + $0x24] sm:$0xf]
    %v422 = vld [vmem:[%s411 + $0x28] sm:$0xf]
    %v423 = vld [vmem:[%s411 + $0x2c] sm:$0xf]
    %v424 = vld [vmem:[%s411 + $0x30] sm:$0xf]
    %v425 = vld [vmem:[%s411 + $0x34] sm:$0xf]
    %v426 = vld [vmem:[%s411 + $0x38] sm:$0xf]
    %v427 = vld [vmem:[%s411 + $0x3c] sm:$0xf]
    %s428 = scalar_lea.vmem [#allocation7], 320
    %v429 = vld [vmem:[%s428] sm:$0xf]
    %v430 = vld [vmem:[%s428 + $0x4] sm:$0xf]
    %v431 = vld [vmem:[%s428 + $0x8] sm:$0xf]
    %v432 = vld [vmem:[%s428 + $0xc] sm:$0xf]
    %v433 = vld [vmem:[%s428 + $0x10] sm:$0xf]
    %v434 = vld [vmem:[%s428 + $0x14] sm:$0xf]
    %v435 = vld [vmem:[%s428 + $0x18] sm:$0xf]
    %v436 = vld [vmem:[%s428 + $0x1c] sm:$0xf]
    %v437 = vld [vmem:[%s428 + $0x20] sm:$0xf]
    %v438 = vld [vmem:[%s428 + $0x24] sm:$0xf]
    %v439 = vld [vmem:[%s428 + $0x28] sm:$0xf]
    %v440 = vld [vmem:[%s428 + $0x2c] sm:$0xf]
    %v441 = vld [vmem:[%s428 + $0x30] sm:$0xf]
    %v442 = vld [vmem:[%s428 + $0x34] sm:$0xf]
    %v443 = vld [vmem:[%s428 + $0x38] sm:$0xf]
    %v444 = vld [vmem:[%s428 + $0x3c] sm:$0xf]
    %v461 = vunpack.c.l.b16 %v429
    %v462 = vunpack.c.l.b16 %v430
    %v463 = vunpack.c.l.b16 %v431
    %v464 = vunpack.c.l.b16 %v432
    %v465 = vunpack.c.l.b16 %v433
    %v466 = vunpack.c.l.b16 %v434
    %v467 = vunpack.c.l.b16 %v435
    %v468 = vunpack.c.l.b16 %v436
    %v469 = vunpack.c.l.b16 %v437
    %v470 = vunpack.c.l.b16 %v438
    %v471 = vunpack.c.l.b16 %v439
    %v472 = vunpack.c.l.b16 %v440
    %v473 = vunpack.c.l.b16 %v441
    %v474 = vunpack.c.l.b16 %v442
    %v475 = vunpack.c.l.b16 %v443
    %v476 = vunpack.c.l.b16 %v444
    %v477 = vpack.c.b16 %v462, %v461
    %v478 = vpack.c.b16 %v464, %v463
    %v479 = vpack.c.b16 %v466, %v465
    %v480 = vpack.c.b16 %v468, %v467
    %v481 = vpack.c.b16 %v470, %v469
    %v482 = vpack.c.b16 %v472, %v471
    %v483 = vpack.c.b16 %v474, %v473
    %v484 = vpack.c.b16 %v476, %v475
    %493 = vmatprep.subr.bf16.mxu0 0
    %494 = vmatpush1.bf16.msra.mxu0 %v484
    %495 = vmatprep.subr.bf16.mxu0 0
    %496 = vmatpush1.bf16.msra.mxu0 %v483
    %497 = vmatprep.subr.bf16.mxu0 0
    %498 = vmatpush1.bf16.msra.mxu0 %v482
    %499 = vmatprep.subr.bf16.mxu0 0
    %500 = vmatpush1.bf16.msra.mxu0 %v481
    %501 = vmatprep.subr.bf16.mxu0 0
    %502 = vmatpush1.bf16.msra.mxu0 %v480
    %503 = vmatprep.subr.bf16.mxu0 0
    %504 = vmatpush1.bf16.msra.mxu0 %v479
    %505 = vmatprep.subr.bf16.mxu0 0
    %506 = vmatpush1.bf16.msra.mxu0 %v478
    %507 = vmatprep.subr.bf16.mxu0 0
    %508 = vmatpush1.bf16.msra.mxu0 %v477
    %509 = vmatprep.subr.bf16.mxu0 0
    %510 = vmatpush2.bf16.msra.mxu0 0
    %511 = vmatprep.subr.bf16.mxu0 0
    %512 = vmatpush2.bf16.msra.mxu0 0
    %513 = vmatprep.subr.bf16.mxu0 0
    %514 = vmatpush2.bf16.msra.mxu0 0
    %515 = vmatprep.subr.bf16.mxu0 0
    %516 = vmatpush2.bf16.msra.mxu0 0
    %517 = vmatprep.subr.bf16.mxu0 0
    %518 = vmatpush2.bf16.msra.mxu0 0
    %519 = vmatprep.subr.bf16.mxu0 0
    %520 = vmatpush2.bf16.msra.mxu0 0
    %521 = vmatprep.subr.bf16.mxu0 0
    %522 = vmatpush2.bf16.msra.mxu0 0
    %523 = vmatprep.subr.bf16.mxu0 0
    %524 = vmatpush2.bf16.msra.mxu0 0
    %525 = vmatprep.mubr.bf16.mxu0 0
    %526 = vmatmul.mubr.bf16.gmra.mxu0 %v101
    %v527 = vpop.f32.mrf.mxu0
    %v528 = vadd.f32 0.0, %v527
    %v529 = vpop.f32.mrf.mxu0
    %v530 = vpop.f32.mrf.mxu0
    %v531 = vadd.f32 0.0, %v530
    %v532 = vpop.f32.mrf.mxu0
    %533 = vmatprep.mubr.bf16.mxu0 0
    %534 = vmatmul.mubr.bf16.gmra.mxu0 %v102
    %v535 = vpop.f32.mrf.mxu0
    %v536 = vadd.f32 0.0, %v535
    %v537 = vpop.f32.mrf.mxu0
    %v538 = vpop.f32.mrf.mxu0
    %v539 = vadd.f32 0.0, %v538
    %v540 = vpop.f32.mrf.mxu0
    %541 = vdwg.mxu0
    %v558 = vunpack.c.l.b16 %v412
    %v559 = vunpack.c.l.b16 %v413
    %v560 = vunpack.c.l.b16 %v414
    %v561 = vunpack.c.l.b16 %v415
    %v562 = vunpack.c.l.b16 %v416
    %v563 = vunpack.c.l.b16 %v417
    %v564 = vunpack.c.l.b16 %v418
    %v565 = vunpack.c.l.b16 %v419
    %v566 = vunpack.c.l.b16 %v420
    %v567 = vunpack.c.l.b16 %v421
    %v568 = vunpack.c.l.b16 %v422
    %v569 = vunpack.c.l.b16 %v423
    %v570 = vunpack.c.l.b16 %v424
    %v571 = vunpack.c.l.b16 %v425
    %v572 = vunpack.c.l.b16 %v426
    %v573 = vunpack.c.l.b16 %v427
    %v574 = vpack.c.b16 %v559, %v558
    %v575 = vpack.c.b16 %v561, %v560
    %v576 = vpack.c.b16 %v563, %v562
    %v577 = vpack.c.b16 %v565, %v564
    %v578 = vpack.c.b16 %v567, %v566
    %v579 = vpack.c.b16 %v569, %v568
    %v580 = vpack.c.b16 %v571, %v570
    %v581 = vpack.c.b16 %v573, %v572
    %590 = vmatprep.subr.bf16.mxu0 0
    %591 = vmatpush1.bf16.msra.mxu0 %v581
    %592 = vmatprep.subr.bf16.mxu0 0
    %593 = vmatpush1.bf16.msra.mxu0 %v580
    %594 = vmatprep.subr.bf16.mxu0 0
    %595 = vmatpush1.bf16.msra.mxu0 %v579
    %596 = vmatprep.subr.bf16.mxu0 0
    %597 = vmatpush1.bf16.msra.mxu0 %v578
    %598 = vmatprep.subr.bf16.mxu0 0
    %599 = vmatpush1.bf16.msra.mxu0 %v577
    %600 = vmatprep.subr.bf16.mxu0 0
    %601 = vmatpush1.bf16.msra.mxu0 %v576
    %602 = vmatprep.subr.bf16.mxu0 0
    %603 = vmatpush1.bf16.msra.mxu0 %v575
    %604 = vmatprep.subr.bf16.mxu0 0
    %605 = vmatpush1.bf16.msra.mxu0 %v574
    %606 = vmatprep.subr.bf16.mxu0 0
    %607 = vmatpush2.bf16.msra.mxu0 0
    %608 = vmatprep.subr.bf16.mxu0 0
    %609 = vmatpush2.bf16.msra.mxu0 0
    %610 = vmatprep.subr.bf16.mxu0 0
    %611 = vmatpush2.bf16.msra.mxu0 0
    %612 = vmatprep.subr.bf16.mxu0 0
    %613 = vmatpush2.bf16.msra.mxu0 0
    %614 = vmatprep.subr.bf16.mxu0 0
    %615 = vmatpush2.bf16.msra.mxu0 0
    %616 = vmatprep.subr.bf16.mxu0 0
    %617 = vmatpush2.bf16.msra.mxu0 0
    %618 = vmatprep.subr.bf16.mxu0 0
    %619 = vmatpush2.bf16.msra.mxu0 0
    %620 = vmatprep.subr.bf16.mxu0 0
    %621 = vmatpush2.bf16.msra.mxu0 0
    %622 = vmatprep.mubr.bf16.mxu0 0
    %623 = vmatmul.mubr.bf16.gmra.mxu0 %v169
    %v624 = vpop.f32.mrf.mxu0
    %v625 = vadd.f32 %v528, %v624
    %v626 = vpop.f32.mrf.mxu0
    %v627 = vpop.f32.mrf.mxu0
    %v628 = vadd.f32 %v531, %v627
    %v629 = vpop.f32.mrf.mxu0
    %630 = vmatprep.mubr.bf16.mxu0 0
    %631 = vmatmul.mubr.bf16.gmra.mxu0 %v170
    %v632 = vpop.f32.mrf.mxu0
    %v633 = vadd.f32 %v536, %v632
    %v634 = vpop.f32.mrf.mxu0
    %v635 = vpop.f32.mrf.mxu0
    %v636 = vadd.f32 %v539, %v635
    %v637 = vpop.f32.mrf.mxu0
    %638 = vdwg.mxu0
    %v639 = vld [vmem:[#allocation9 + $0x2] sm:$0x1]
    %v640 = vlaneseq
    %v641 = vshrl.u32 %v640, 7
    %v642 = vsub.s32 0, %v641
    %v643 = vrot.slane %v639, %v642
    %v644 = vadd.f32 %v625, %v643
    %v645 = vadd.f32 %v628, %v643
    %v646 = vadd.f32 %v633, %v643
    %v647 = vadd.f32 %v636, %v643
    %v648 = vpack.c.bf16 %v408, %v407
    %v649 = vpack.c.bf16 %v410, %v409
    %650 = vmatprep.subr.bf16.mxu0 0
    %651 = vmatpush1.bf16.msra.mxu0 0
    %652 = vmatprep.subr.bf16.mxu0 0
    %653 = vmatpush1.bf16.msra.mxu0 0
    %654 = vmatprep.subr.bf16.mxu0 0
    %655 = vmatpush1.bf16.msra.mxu0 0
    %656 = vmatprep.subr.bf16.mxu0 0
    %657 = vmatpush1.bf16.msra.mxu0 0
    %658 = vmatprep.subr.bf16.mxu0 0
    %659 = vmatpush1.bf16.msra.mxu0 0
    %660 = vmatprep.subr.bf16.mxu0 0
    %661 = vmatpush1.bf16.msra.mxu0 0
    %662 = vmatprep.subr.bf16.mxu0 0
    %663 = vmatpush1.bf16.msra.mxu0 %v649
    %664 = vmatprep.subr.bf16.mxu0 0
    %665 = vmatpush1.bf16.msra.mxu0 %v648
    %666 = vmatprep.subr.bf16.mxu0 0
    %667 = vmatpush2.bf16.msra.mxu0 0
    %668 = vmatprep.subr.bf16.mxu0 0
    %669 = vmatpush2.bf16.msra.mxu0 0
    %670 = vmatprep.subr.bf16.mxu0 0
    %671 = vmatpush2.bf16.msra.mxu0 0
    %672 = vmatprep.subr.bf16.mxu0 0
    %673 = vmatpush2.bf16.msra.mxu0 0
    %674 = vmatprep.subr.bf16.mxu0 0
    %675 = vmatpush2.bf16.msra.mxu0 0
    %676 = vmatprep.subr.bf16.mxu0 0
    %677 = vmatpush2.bf16.msra.mxu0 0
    %678 = vmatprep.subr.bf16.mxu0 0
    %679 = vmatpush2.bf16.msra.mxu0 0
    %680 = vmatprep.subr.bf16.mxu0 0
    %681 = vmatpush2.bf16.msra.mxu0 0
    %682 = vmatprep.mubr.bf16.mxu0 0
    %683 = vmatmul.mubr.bf16.gmra.mxu0 %v115
    %v684 = vpop.f32.mrf.mxu0
    %v685 = vadd.f32 0.0, %v684
    %v686 = vpop.f32.mrf.mxu0
    %v687 = vpop.f32.mrf.mxu0
    %v688 = vadd.f32 0.0, %v687
    %v689 = vpop.f32.mrf.mxu0
    %690 = vmatprep.mubr.bf16.mxu0 0
    %691 = vmatmul.mubr.bf16.gmra.mxu0 %v118
    %v692 = vpop.f32.mrf.mxu0
    %v693 = vadd.f32 0.0, %v692
    %v694 = vpop.f32.mrf.mxu0
    %v695 = vpop.f32.mrf.mxu0
    %v696 = vadd.f32 0.0, %v695
    %v697 = vpop.f32.mrf.mxu0
    %698 = vdwg.mxu0
    %v699 = vpack.c.bf16 %v688, %v685
    %v700 = vpack.c.bf16 %v696, %v693
    %s701 = scalar_lea.vmem [#allocation7], 128
    %v702 = vld [vmem:[%s701] sm:$0xf]
    %v703 = vld [vmem:[%s701 + $0x4] sm:$0xf]
    %v704 = vld [vmem:[%s701 + $0x8] sm:$0xf]
    %v705 = vld [vmem:[%s701 + $0xc] sm:$0xf]
    %v706 = vld [vmem:[%s701 + $0x10] sm:$0xf]
    %v707 = vld [vmem:[%s701 + $0x14] sm:$0xf]
    %v708 = vld [vmem:[%s701 + $0x18] sm:$0xf]
    %v709 = vld [vmem:[%s701 + $0x1c] sm:$0xf]
    %v710 = vld [vmem:[%s701 + $0x20] sm:$0xf]
    %v711 = vld [vmem:[%s701 + $0x24] sm:$0xf]
    %v712 = vld [vmem:[%s701 + $0x28] sm:$0xf]
    %v713 = vld [vmem:[%s701 + $0x2c] sm:$0xf]
    %v714 = vld [vmem:[%s701 + $0x30] sm:$0xf]
    %v715 = vld [vmem:[%s701 + $0x34] sm:$0xf]
    %v716 = vld [vmem:[%s701 + $0x38] sm:$0xf]
    %v717 = vld [vmem:[%s701 + $0x3c] sm:$0xf]
    %s718 = scalar_lea.vmem [#allocation7], 192
    %v719 = vld [vmem:[%s718] sm:$0xf]
    %v720 = vld [vmem:[%s718 + $0x4] sm:$0xf]
    %v721 = vld [vmem:[%s718 + $0x8] sm:$0xf]
    %v722 = vld [vmem:[%s718 + $0xc] sm:$0xf]
    %v723 = vld [vmem:[%s718 + $0x10] sm:$0xf]
    %v724 = vld [vmem:[%s718 + $0x14] sm:$0xf]
    %v725 = vld [vmem:[%s718 + $0x18] sm:$0xf]
    %v726 = vld [vmem:[%s718 + $0x1c] sm:$0xf]
    %v727 = vld [vmem:[%s718 + $0x20] sm:$0xf]
    %v728 = vld [vmem:[%s718 + $0x24] sm:$0xf]
    %v729 = vld [vmem:[%s718 + $0x28] sm:$0xf]
    %v730 = vld [vmem:[%s718 + $0x2c] sm:$0xf]
    %v731 = vld [vmem:[%s718 + $0x30] sm:$0xf]
    %v732 = vld [vmem:[%s718 + $0x34] sm:$0xf]
    %v733 = vld [vmem:[%s718 + $0x38] sm:$0xf]
    %v734 = vld [vmem:[%s718 + $0x3c] sm:$0xf]
    %v751 = vunpack.c.l.b16 %v719
    %v752 = vunpack.c.l.b16 %v720
    %v753 = vunpack.c.l.b16 %v721
    %v754 = vunpack.c.l.b16 %v722
    %v755 = vunpack.c.l.b16 %v723
    %v756 = vunpack.c.l.b16 %v724
    %v757 = vunpack.c.l.b16 %v725
    %v758 = vunpack.c.l.b16 %v726
    %v759 = vunpack.c.l.b16 %v727
    %v760 = vunpack.c.l.b16 %v728
    %v761 = vunpack.c.l.b16 %v729
    %v762 = vunpack.c.l.b16 %v730
    %v763 = vunpack.c.l.b16 %v731
    %v764 = vunpack.c.l.b16 %v732
    %v765 = vunpack.c.l.b16 %v733
    %v766 = vunpack.c.l.b16 %v734
    %v767 = vpack.c.b16 %v752, %v751
    %v768 = vpack.c.b16 %v754, %v753
    %v769 = vpack.c.b16 %v756, %v755
    %v770 = vpack.c.b16 %v758, %v757
    %v771 = vpack.c.b16 %v760, %v759
    %v772 = vpack.c.b16 %v762, %v761
    %v773 = vpack.c.b16 %v764, %v763
    %v774 = vpack.c.b16 %v766, %v765
    %783 = vmatprep.subr.bf16.mxu0 0
    %784 = vmatpush1.bf16.msra.mxu0 %v774
    %785 = vmatprep.subr.bf16.mxu0 0
    %786 = vmatpush1.bf16.msra.mxu0 %v773
    %787 = vmatprep.subr.bf16.mxu0 0
    %788 = vmatpush1.bf16.msra.mxu0 %v772
    %789 = vmatprep.subr.bf16.mxu0 0
    %790 = vmatpush1.bf16.msra.mxu0 %v771
    %791 = vmatprep.subr.bf16.mxu0 0
    %792 = vmatpush1.bf16.msra.mxu0 %v770
    %793 = vmatprep.subr.bf16.mxu0 0
    %794 = vmatpush1.bf16.msra.mxu0 %v769
    %795 = vmatprep.subr.bf16.mxu0 0
    %796 = vmatpush1.bf16.msra.mxu0 %v768
    %797 = vmatprep.subr.bf16.mxu0 0
    %798 = vmatpush1.bf16.msra.mxu0 %v767
    %799 = vmatprep.subr.bf16.mxu0 0
    %800 = vmatpush2.bf16.msra.mxu0 0
    %801 = vmatprep.subr.bf16.mxu0 0
    %802 = vmatpush2.bf16.msra.mxu0 0
    %803 = vmatprep.subr.bf16.mxu0 0
    %804 = vmatpush2.bf16.msra.mxu0 0
    %805 = vmatprep.subr.bf16.mxu0 0
    %806 = vmatpush2.bf16.msra.mxu0 0
    %807 = vmatprep.subr.bf16.mxu0 0
    %808 = vmatpush2.bf16.msra.mxu0 0
    %809 = vmatprep.subr.bf16.mxu0 0
    %810 = vmatpush2.bf16.msra.mxu0 0
    %811 = vmatprep.subr.bf16.mxu0 0
    %812 = vmatpush2.bf16.msra.mxu0 0
    %813 = vmatprep.subr.bf16.mxu0 0
    %814 = vmatpush2.bf16.msra.mxu0 0
    %815 = vmatprep.mubr.bf16.mxu0 0
    %816 = vmatmul.mubr.bf16.gmra.mxu0 %v648
    %v817 = vpop.f32.mrf.mxu0
    %v818 = vadd.f32 0.0, %v817
    %v819 = vpop.f32.mrf.mxu0
    %v820 = vpop.f32.mrf.mxu0
    %v821 = vadd.f32 0.0, %v820
    %v822 = vpop.f32.mrf.mxu0
    %823 = vmatprep.mubr.bf16.mxu0 0
    %824 = vmatmul.mubr.bf16.gmra.mxu0 %v649
    %v825 = vpop.f32.mrf.mxu0
    %v826 = vadd.f32 0.0, %v825
    %v827 = vpop.f32.mrf.mxu0
    %v828 = vpop.f32.mrf.mxu0
    %v829 = vadd.f32 0.0, %v828
    %v830 = vpop.f32.mrf.mxu0
    %831 = vdwg.mxu0
    %v848 = vunpack.c.l.b16 %v702
    %v849 = vunpack.c.l.b16 %v703
    %v850 = vunpack.c.l.b16 %v704
    %v851 = vunpack.c.l.b16 %v705
    %v852 = vunpack.c.l.b16 %v706
    %v853 = vunpack.c.l.b16 %v707
    %v854 = vunpack.c.l.b16 %v708
    %v855 = vunpack.c.l.b16 %v709
    %v856 = vunpack.c.l.b16 %v710
    %v857 = vunpack.c.l.b16 %v711
    %v858 = vunpack.c.l.b16 %v712
    %v859 = vunpack.c.l.b16 %v713
    %v860 = vunpack.c.l.b16 %v714
    %v861 = vunpack.c.l.b16 %v715
    %v862 = vunpack.c.l.b16 %v716
    %v863 = vunpack.c.l.b16 %v717
    %v864 = vpack.c.b16 %v849, %v848
    %v865 = vpack.c.b16 %v851, %v850
    %v866 = vpack.c.b16 %v853, %v852
    %v867 = vpack.c.b16 %v855, %v854
    %v868 = vpack.c.b16 %v857, %v856
    %v869 = vpack.c.b16 %v859, %v858
    %v870 = vpack.c.b16 %v861, %v860
    %v871 = vpack.c.b16 %v863, %v862
    %880 = vmatprep.subr.bf16.mxu0 0
    %881 = vmatpush1.bf16.msra.mxu0 %v871
    %882 = vmatprep.subr.bf16.mxu0 0
    %883 = vmatpush1.bf16.msra.mxu0 %v870
    %884 = vmatprep.subr.bf16.mxu0 0
    %885 = vmatpush1.bf16.msra.mxu0 %v869
    %886 = vmatprep.subr.bf16.mxu0 0
    %887 = vmatpush1.bf16.msra.mxu0 %v868
    %888 = vmatprep.subr.bf16.mxu0 0
    %889 = vmatpush1.bf16.msra.mxu0 %v867
    %890 = vmatprep.subr.bf16.mxu0 0
    %891 = vmatpush1.bf16.msra.mxu0 %v866
    %892 = vmatprep.subr.bf16.mxu0 0
    %893 = vmatpush1.bf16.msra.mxu0 %v865
    %894 = vmatprep.subr.bf16.mxu0 0
    %895 = vmatpush1.bf16.msra.mxu0 %v864
    %896 = vmatprep.subr.bf16.mxu0 0
    %897 = vmatpush2.bf16.msra.mxu0 0
    %898 = vmatprep.subr.bf16.mxu0 0
    %899 = vmatpush2.bf16.msra.mxu0 0
    %900 = vmatprep.subr.bf16.mxu0 0
    %901 = vmatpush2.bf16.msra.mxu0 0
    %902 = vmatprep.subr.bf16.mxu0 0
    %903 = vmatpush2.bf16.msra.mxu0 0
    %904 = vmatprep.subr.bf16.mxu0 0
    %905 = vmatpush2.bf16.msra.mxu0 0
    %906 = vmatprep.subr.bf16.mxu0 0
    %907 = vmatpush2.bf16.msra.mxu0 0
    %908 = vmatprep.subr.bf16.mxu0 0
    %909 = vmatpush2.bf16.msra.mxu0 0
    %910 = vmatprep.subr.bf16.mxu0 0
    %911 = vmatpush2.bf16.msra.mxu0 0
    %912 = vmatprep.mubr.bf16.mxu0 0
    %913 = vmatmul.mubr.bf16.gmra.mxu0 %v699
    %v914 = vpop.f32.mrf.mxu0
    %v915 = vadd.f32 %v818, %v914
    %v916 = vpop.f32.mrf.mxu0
    %v917 = vpop.f32.mrf.mxu0
    %v918 = vadd.f32 %v821, %v917
    %v919 = vpop.f32.mrf.mxu0
    %920 = vmatprep.mubr.bf16.mxu0 0
    %921 = vmatmul.mubr.bf16.gmra.mxu0 %v700
    %v922 = vpop.f32.mrf.mxu0
    %v923 = vadd.f32 %v826, %v922
    %v924 = vpop.f32.mrf.mxu0
    %v925 = vpop.f32.mrf.mxu0
    %v926 = vadd.f32 %v829, %v925
    %v927 = vpop.f32.mrf.mxu0
    %928 = vdwg.mxu0
    %v929 = vld [vmem:[#allocation9 + $0x1] sm:$0x1]
    %v930 = vlaneseq
    %v931 = vshrl.u32 %v930, 7
    %v932 = vsub.s32 0, %v931
    %v933 = vrot.slane %v929, %v932
    %v934 = vadd.f32 %v915, %v933
    %v935 = vadd.f32 %v918, %v933
    %v936 = vadd.f32 %v923, %v933
    %v937 = vadd.f32 %v926, %v933
    %v938 = vadd.f32 %v934, %v644
    %v939 = vadd.f32 %v935, %v645
    %v940 = vadd.f32 %v936, %v646
    %v941 = vadd.f32 %v937, %v647
    %v942 = vmax.f32 %v938, 0.0
    %v943 = vmax.f32 %v939, 0.0
    %v944 = vmax.f32 %v940, 0.0
    %v945 = vmax.f32 %v941, 0.0
    %v946 = vpack.c.bf16 %v943, %v942
    %v947 = vpack.c.bf16 %v945, %v944
    %948 = vmatprep.subr.bf16.mxu0 0
    %949 = vmatpush1.bf16.msra.mxu0 0
    %950 = vmatprep.subr.bf16.mxu0 0
    %951 = vmatpush1.bf16.msra.mxu0 0
    %952 = vmatprep.subr.bf16.mxu0 0
    %953 = vmatpush1.bf16.msra.mxu0 0
    %954 = vmatprep.subr.bf16.mxu0 0
    %955 = vmatpush1.bf16.msra.mxu0 0
    %956 = vmatprep.subr.bf16.mxu0 0
    %957 = vmatpush1.bf16.msra.mxu0 0
    %958 = vmatprep.subr.bf16.mxu0 0
    %959 = vmatpush1.bf16.msra.mxu0 0
    %960 = vmatprep.subr.bf16.mxu0 0
    %961 = vmatpush1.bf16.msra.mxu0 %v947
    %962 = vmatprep.subr.bf16.mxu0 0
    %963 = vmatpush1.bf16.msra.mxu0 %v946
    %964 = vmatprep.subr.bf16.mxu0 0
    %965 = vmatpush2.bf16.msra.mxu0 0
    %966 = vmatprep.subr.bf16.mxu0 0
    %967 = vmatpush2.bf16.msra.mxu0 0
    %968 = vmatprep.subr.bf16.mxu0 0
    %969 = vmatpush2.bf16.msra.mxu0 0
    %970 = vmatprep.subr.bf16.mxu0 0
    %971 = vmatpush2.bf16.msra.mxu0 0
    %972 = vmatprep.subr.bf16.mxu0 0
    %973 = vmatpush2.bf16.msra.mxu0 0
    %974 = vmatprep.subr.bf16.mxu0 0
    %975 = vmatpush2.bf16.msra.mxu0 0
    %976 = vmatprep.subr.bf16.mxu0 0
    %977 = vmatpush2.bf16.msra.mxu0 0
    %978 = vmatprep.subr.bf16.mxu0 0
    %979 = vmatpush2.bf16.msra.mxu0 0
    %980 = vmatprep.mubr.bf16.mxu0 0
    %981 = vmatmul.mubr.bf16.gmra.mxu0 %v115
    %v982 = vpop.f32.mrf.mxu0
    %v983 = vadd.f32 0.0, %v982
    %v984 = vpop.f32.mrf.mxu0
    %v985 = vpop.f32.mrf.mxu0
    %v986 = vadd.f32 0.0, %v985
    %v987 = vpop.f32.mrf.mxu0
    %988 = vmatprep.mubr.bf16.mxu0 0
    %989 = vmatmul.mubr.bf16.gmra.mxu0 %v118
    %v990 = vpop.f32.mrf.mxu0
    %v991 = vadd.f32 0.0, %v990
    %v992 = vpop.f32.mrf.mxu0
    %v993 = vpop.f32.mrf.mxu0
    %v994 = vadd.f32 0.0, %v993
    %v995 = vpop.f32.mrf.mxu0
    %996 = vdwg.mxu0
    %v997 = vpack.c.bf16 %v986, %v983
    %v998 = vpack.c.bf16 %v994, %v991
    %s999 = scalar_lea.vmem [#allocation7], 384
    %v1000 = vld [vmem:[%s999] sm:$0xf]
    %v1001 = vld [vmem:[%s999 + $0x4] sm:$0xf]
    %v1002 = vld [vmem:[%s999 + $0x8] sm:$0xf]
    %v1003 = vld [vmem:[%s999 + $0xc] sm:$0xf]
    %v1004 = vld [vmem:[%s999 + $0x10] sm:$0xf]
    %v1005 = vld [vmem:[%s999 + $0x14] sm:$0xf]
    %v1006 = vld [vmem:[%s999 + $0x18] sm:$0xf]
    %v1007 = vld [vmem:[%s999 + $0x1c] sm:$0xf]
    %v1008 = vld [vmem:[%s999 + $0x20] sm:$0xf]
    %v1009 = vld [vmem:[%s999 + $0x24] sm:$0xf]
    %v1010 = vld [vmem:[%s999 + $0x28] sm:$0xf]
    %v1011 = vld [vmem:[%s999 + $0x2c] sm:$0xf]
    %v1012 = vld [vmem:[%s999 + $0x30] sm:$0xf]
    %v1013 = vld [vmem:[%s999 + $0x34] sm:$0xf]
    %v1014 = vld [vmem:[%s999 + $0x38] sm:$0xf]
    %v1015 = vld [vmem:[%s999 + $0x3c] sm:$0xf]
    %s1016 = scalar_lea.vmem [#allocation7], 448
    %v1017 = vld [vmem:[%s1016] sm:$0xf]
    %v1018 = vld [vmem:[%s1016 + $0x4] sm:$0xf]
    %v1019 = vld [vmem:[%s1016 + $0x8] sm:$0xf]
    %v1020 = vld [vmem:[%s1016 + $0xc] sm:$0xf]
    %v1021 = vld [vmem:[%s1016 + $0x10] sm:$0xf]
    %v1022 = vld [vmem:[%s1016 + $0x14] sm:$0xf]
    %v1023 = vld [vmem:[%s1016 + $0x18] sm:$0xf]
    %v1024 = vld [vmem:[%s1016 + $0x1c] sm:$0xf]
    %v1025 = vld [vmem:[%s1016 + $0x20] sm:$0xf]
    %v1026 = vld [vmem:[%s1016 + $0x24] sm:$0xf]
    %v1027 = vld [vmem:[%s1016 + $0x28] sm:$0xf]
    %v1028 = vld [vmem:[%s1016 + $0x2c] sm:$0xf]
    %v1029 = vld [vmem:[%s1016 + $0x30] sm:$0xf]
    %v1030 = vld [vmem:[%s1016 + $0x34] sm:$0xf]
    %v1031 = vld [vmem:[%s1016 + $0x38] sm:$0xf]
    %v1032 = vld [vmem:[%s1016 + $0x3c] sm:$0xf]
    %v1049 = vunpack.c.l.b16 %v1017
    %v1050 = vunpack.c.l.b16 %v1018
    %v1051 = vunpack.c.l.b16 %v1019
    %v1052 = vunpack.c.l.b16 %v1020
    %v1053 = vunpack.c.l.b16 %v1021
    %v1054 = vunpack.c.l.b16 %v1022
    %v1055 = vunpack.c.l.b16 %v1023
    %v1056 = vunpack.c.l.b16 %v1024
    %v1057 = vunpack.c.l.b16 %v1025
    %v1058 = vunpack.c.l.b16 %v1026
    %v1059 = vunpack.c.l.b16 %v1027
    %v1060 = vunpack.c.l.b16 %v1028
    %v1061 = vunpack.c.l.b16 %v1029
    %v1062 = vunpack.c.l.b16 %v1030
    %v1063 = vunpack.c.l.b16 %v1031
    %v1064 = vunpack.c.l.b16 %v1032
    %v1065 = vpack.c.b16 %v1050, %v1049
    %v1066 = vpack.c.b16 %v1052, %v1051
    %v1067 = vpack.c.b16 %v1054, %v1053
    %v1068 = vpack.c.b16 %v1056, %v1055
    %v1069 = vpack.c.b16 %v1058, %v1057
    %v1070 = vpack.c.b16 %v1060, %v1059
    %v1071 = vpack.c.b16 %v1062, %v1061
    %v1072 = vpack.c.b16 %v1064, %v1063
    %1081 = vmatprep.subr.bf16.mxu0 0
    %1082 = vmatpush1.bf16.msra.mxu0 %v1072
    %1083 = vmatprep.subr.bf16.mxu0 0
    %1084 = vmatpush1.bf16.msra.mxu0 %v1071
    %1085 = vmatprep.subr.bf16.mxu0 0
    %1086 = vmatpush1.bf16.msra.mxu0 %v1070
    %1087 = vmatprep.subr.bf16.mxu0 0
    %1088 = vmatpush1.bf16.msra.mxu0 %v1069
    %1089 = vmatprep.subr.bf16.mxu0 0
    %1090 = vmatpush1.bf16.msra.mxu0 %v1068
    %1091 = vmatprep.subr.bf16.mxu0 0
    %1092 = vmatpush1.bf16.msra.mxu0 %v1067
    %1093 = vmatprep.subr.bf16.mxu0 0
    %1094 = vmatpush1.bf16.msra.mxu0 %v1066
    %1095 = vmatprep.subr.bf16.mxu0 0
    %1096 = vmatpush1.bf16.msra.mxu0 %v1065
    %1097 = vmatprep.subr.bf16.mxu0 0
    %1098 = vmatpush2.bf16.msra.mxu0 0
    %1099 = vmatprep.subr.bf16.mxu0 0
    %1100 = vmatpush2.bf16.msra.mxu0 0
    %1101 = vmatprep.subr.bf16.mxu0 0
    %1102 = vmatpush2.bf16.msra.mxu0 0
    %1103 = vmatprep.subr.bf16.mxu0 0
    %1104 = vmatpush2.bf16.msra.mxu0 0
    %1105 = vmatprep.subr.bf16.mxu0 0
    %1106 = vmatpush2.bf16.msra.mxu0 0
    %1107 = vmatprep.subr.bf16.mxu0 0
    %1108 = vmatpush2.bf16.msra.mxu0 0
    %1109 = vmatprep.subr.bf16.mxu0 0
    %1110 = vmatpush2.bf16.msra.mxu0 0
    %1111 = vmatprep.subr.bf16.mxu0 0
    %1112 = vmatpush2.bf16.msra.mxu0 0
    %1113 = vmatprep.mubr.bf16.mxu0 0
    %1114 = vmatmul.mubr.bf16.gmra.mxu0 %v946
    %v1115 = vpop.f32.mrf.mxu0
    %v1116 = vadd.f32 0.0, %v1115
    %v1117 = vpop.f32.mrf.mxu0
    %v1118 = vpop.f32.mrf.mxu0
    %v1119 = vadd.f32 0.0, %v1118
    %v1120 = vpop.f32.mrf.mxu0
    %1121 = vmatprep.mubr.bf16.mxu0 0
    %1122 = vmatmul.mubr.bf16.gmra.mxu0 %v947
    %v1123 = vpop.f32.mrf.mxu0
    %v1124 = vadd.f32 0.0, %v1123
    %v1125 = vpop.f32.mrf.mxu0
    %v1126 = vpop.f32.mrf.mxu0
    %v1127 = vadd.f32 0.0, %v1126
    %v1128 = vpop.f32.mrf.mxu0
    %1129 = vdwg.mxu0
    %v1146 = vunpack.c.l.b16 %v1000
    %v1147 = vunpack.c.l.b16 %v1001
    %v1148 = vunpack.c.l.b16 %v1002
    %v1149 = vunpack.c.l.b16 %v1003
    %v1150 = vunpack.c.l.b16 %v1004
    %v1151 = vunpack.c.l.b16 %v1005
    %v1152 = vunpack.c.l.b16 %v1006
    %v1153 = vunpack.c.l.b16 %v1007
    %v1154 = vunpack.c.l.b16 %v1008
    %v1155 = vunpack.c.l.b16 %v1009
    %v1156 = vunpack.c.l.b16 %v1010
    %v1157 = vunpack.c.l.b16 %v1011
    %v1158 = vunpack.c.l.b16 %v1012
    %v1159 = vunpack.c.l.b16 %v1013
    %v1160 = vunpack.c.l.b16 %v1014
    %v1161 = vunpack.c.l.b16 %v1015
    %v1162 = vpack.c.b16 %v1147, %v1146
    %v1163 = vpack.c.b16 %v1149, %v1148
    %v1164 = vpack.c.b16 %v1151, %v1150
    %v1165 = vpack.c.b16 %v1153, %v1152
    %v1166 = vpack.c.b16 %v1155, %v1154
    %v1167 = vpack.c.b16 %v1157, %v1156
    %v1168 = vpack.c.b16 %v1159, %v1158
    %v1169 = vpack.c.b16 %v1161, %v1160
    %1178 = vmatprep.subr.bf16.mxu0 0
    %1179 = vmatpush1.bf16.msra.mxu0 %v1169
    %1180 = vmatprep.subr.bf16.mxu0 0
    %1181 = vmatpush1.bf16.msra.mxu0 %v1168
    %1182 = vmatprep.subr.bf16.mxu0 0
    %1183 = vmatpush1.bf16.msra.mxu0 %v1167
    %1184 = vmatprep.subr.bf16.mxu0 0
    %1185 = vmatpush1.bf16.msra.mxu0 %v1166
    %1186 = vmatprep.subr.bf16.mxu0 0
    %1187 = vmatpush1.bf16.msra.mxu0 %v1165
    %1188 = vmatprep.subr.bf16.mxu0 0
    %1189 = vmatpush1.bf16.msra.mxu0 %v1164
    %1190 = vmatprep.subr.bf16.mxu0 0
    %1191 = vmatpush1.bf16.msra.mxu0 %v1163
    %1192 = vmatprep.subr.bf16.mxu0 0
    %1193 = vmatpush1.bf16.msra.mxu0 %v1162
    %1194 = vmatprep.subr.bf16.mxu0 0
    %1195 = vmatpush2.bf16.msra.mxu0 0
    %1196 = vmatprep.subr.bf16.mxu0 0
    %1197 = vmatpush2.bf16.msra.mxu0 0
    %1198 = vmatprep.subr.bf16.mxu0 0
    %1199 = vmatpush2.bf16.msra.mxu0 0
    %1200 = vmatprep.subr.bf16.mxu0 0
    %1201 = vmatpush2.bf16.msra.mxu0 0
    %1202 = vmatprep.subr.bf16.mxu0 0
    %1203 = vmatpush2.bf16.msra.mxu0 0
    %1204 = vmatprep.subr.bf16.mxu0 0
    %1205 = vmatpush2.bf16.msra.mxu0 0
    %1206 = vmatprep.subr.bf16.mxu0 0
    %1207 = vmatpush2.bf16.msra.mxu0 0
    %1208 = vmatprep.subr.bf16.mxu0 0
    %1209 = vmatpush2.bf16.msra.mxu0 0
    %1210 = vmatprep.mubr.bf16.mxu0 0
    %1211 = vmatmul.mubr.bf16.gmra.mxu0 %v997
    %v1212 = vpop.f32.mrf.mxu0
    %v1213 = vadd.f32 %v1116, %v1212
    %v1214 = vpop.f32.mrf.mxu0
    %v1215 = vpop.f32.mrf.mxu0
    %v1216 = vadd.f32 %v1119, %v1215
    %v1217 = vpop.f32.mrf.mxu0
    %1218 = vmatprep.mubr.bf16.mxu0 0
    %1219 = vmatmul.mubr.bf16.gmra.mxu0 %v998
    %v1220 = vpop.f32.mrf.mxu0
    %v1221 = vadd.f32 %v1124, %v1220
    %v1222 = vpop.f32.mrf.mxu0
    %v1223 = vpop.f32.mrf.mxu0
    %v1224 = vadd.f32 %v1127, %v1223
    %v1225 = vpop.f32.mrf.mxu0
    %1226 = vdwg.mxu0
    %v1227 = vld [vmem:[#allocation9 + $0x3] sm:$0x1]
    %v1228 = vlaneseq
    %v1229 = vshrl.u32 %v1228, 7
    %v1230 = vsub.s32 0, %v1229
    %v1231 = vrot.slane %v1227, %v1230
    %v1232 = vadd.f32 %v1213, %v1231
    %v1233 = vadd.f32 %v1216, %v1231
    %v1234 = vadd.f32 %v1221, %v1231
    %v1235 = vadd.f32 %v1224, %v1231
    %v1236 = vmax.f32 %v1232, 0.0
    %v1237 = vmax.f32 %v1233, 0.0
    %v1238 = vmax.f32 %v1234, 0.0
    %v1239 = vmax.f32 %v1235, 0.0
    %v1240 = vpack.c.bf16 %v1237, %v1236
    %v1241 = vpack.c.bf16 %v1239, %v1238
    %1242 = vmatprep.subr.bf16.mxu0 0
    %1243 = vmatpush1.bf16.msra.mxu0 0
    %1244 = vmatprep.subr.bf16.mxu0 0
    %1245 = vmatpush1.bf16.msra.mxu0 0
    %1246 = vmatprep.subr.bf16.mxu0 0
    %1247 = vmatpush1.bf16.msra.mxu0 0
    %1248 = vmatprep.subr.bf16.mxu0 0
    %1249 = vmatpush1.bf16.msra.mxu0 0
    %1250 = vmatprep.subr.bf16.mxu0 0
    %1251 = vmatpush1.bf16.msra.mxu0 0
    %1252 = vmatprep.subr.bf16.mxu0 0
    %1253 = vmatpush1.bf16.msra.mxu0 0
    %1254 = vmatprep.subr.bf16.mxu0 0
    %1255 = vmatpush1.bf16.msra.mxu0 %v1241
    %1256 = vmatprep.subr.bf16.mxu0 0
    %1257 = vmatpush1.bf16.msra.mxu0 %v1240
    %1258 = vmatprep.subr.bf16.mxu0 0
    %1259 = vmatpush2.bf16.msra.mxu0 0
    %1260 = vmatprep.subr.bf16.mxu0 0
    %1261 = vmatpush2.bf16.msra.mxu0 0
    %1262 = vmatprep.subr.bf16.mxu0 0
    %1263 = vmatpush2.bf16.msra.mxu0 0
    %1264 = vmatprep.subr.bf16.mxu0 0
    %1265 = vmatpush2.bf16.msra.mxu0 0
    %1266 = vmatprep.subr.bf16.mxu0 0
    %1267 = vmatpush2.bf16.msra.mxu0 0
    %1268 = vmatprep.subr.bf16.mxu0 0
    %1269 = vmatpush2.bf16.msra.mxu0 0
    %1270 = vmatprep.subr.bf16.mxu0 0
    %1271 = vmatpush2.bf16.msra.mxu0 0
    %1272 = vmatprep.subr.bf16.mxu0 0
    %1273 = vmatpush2.bf16.msra.mxu0 0
    %1274 = vmatprep.mubr.bf16.mxu0 0
    %1275 = vmatmul.mubr.bf16.gmra.mxu0 %v115
    %v1276 = vpop.f32.mrf.mxu0
    %v1277 = vadd.f32 0.0, %v1276
    %v1278 = vpop.f32.mrf.mxu0
    %v1279 = vpop.f32.mrf.mxu0
    %v1280 = vadd.f32 0.0, %v1279
    %v1281 = vpop.f32.mrf.mxu0
    %1282 = vmatprep.mubr.bf16.mxu0 0
    %1283 = vmatmul.mubr.bf16.gmra.mxu0 %v118
    %v1284 = vpop.f32.mrf.mxu0
    %v1285 = vadd.f32 0.0, %v1284
    %v1286 = vpop.f32.mrf.mxu0
    %v1287 = vpop.f32.mrf.mxu0
    %v1288 = vadd.f32 0.0, %v1287
    %v1289 = vpop.f32.mrf.mxu0
    %1290 = vdwg.mxu0
    %v1291 = vpack.c.bf16 %v1280, %v1277
    %v1292 = vpack.c.bf16 %v1288, %v1285
    %s1293 = scalar_lea.vmem [#allocation7], 512
    %v1294 = vld [vmem:[%s1293] sm:$0xf]
    %v1295 = vld [vmem:[%s1293 + $0x4] sm:$0xf]
    %v1296 = vld [vmem:[%s1293 + $0x8] sm:$0xf]
    %v1297 = vld [vmem:[%s1293 + $0xc] sm:$0xf]
    %v1298 = vld [vmem:[%s1293 + $0x10] sm:$0xf]
    %v1299 = vld [vmem:[%s1293 + $0x14] sm:$0xf]
    %v1300 = vld [vmem:[%s1293 + $0x18] sm:$0xf]
    %v1301 = vld [vmem:[%s1293 + $0x1c] sm:$0xf]
    %v1302 = vld [vmem:[%s1293 + $0x20] sm:$0xf]
    %v1303 = vld [vmem:[%s1293 + $0x24] sm:$0xf]
    %v1304 = vld [vmem:[%s1293 + $0x28] sm:$0xf]
    %v1305 = vld [vmem:[%s1293 + $0x2c] sm:$0xf]
    %v1306 = vld [vmem:[%s1293 + $0x30] sm:$0xf]
    %v1307 = vld [vmem:[%s1293 + $0x34] sm:$0xf]
    %v1308 = vld [vmem:[%s1293 + $0x38] sm:$0xf]
    %v1309 = vld [vmem:[%s1293 + $0x3c] sm:$0xf]
    %s1310 = scalar_lea.vmem [#allocation7], 576
    %v1311 = vld [vmem:[%s1310] sm:$0xf]
    %v1312 = vld [vmem:[%s1310 + $0x4] sm:$0xf]
    %v1313 = vld [vmem:[%s1310 + $0x8] sm:$0xf]
    %v1314 = vld [vmem:[%s1310 + $0xc] sm:$0xf]
    %v1315 = vld [vmem:[%s1310 + $0x10] sm:$0xf]
    %v1316 = vld [vmem:[%s1310 + $0x14] sm:$0xf]
    %v1317 = vld [vmem:[%s1310 + $0x18] sm:$0xf]
    %v1318 = vld [vmem:[%s1310 + $0x1c] sm:$0xf]
    %v1319 = vld [vmem:[%s1310 + $0x20] sm:$0xf]
    %v1320 = vld [vmem:[%s1310 + $0x24] sm:$0xf]
    %v1321 = vld [vmem:[%s1310 + $0x28] sm:$0xf]
    %v1322 = vld [vmem:[%s1310 + $0x2c] sm:$0xf]
    %v1323 = vld [vmem:[%s1310 + $0x30] sm:$0xf]
    %v1324 = vld [vmem:[%s1310 + $0x34] sm:$0xf]
    %v1325 = vld [vmem:[%s1310 + $0x38] sm:$0xf]
    %v1326 = vld [vmem:[%s1310 + $0x3c] sm:$0xf]
    %v1343 = vunpack.c.l.b16 %v1311
    %v1344 = vunpack.c.l.b16 %v1312
    %v1345 = vunpack.c.l.b16 %v1313
    %v1346 = vunpack.c.l.b16 %v1314
    %v1347 = vunpack.c.l.b16 %v1315
    %v1348 = vunpack.c.l.b16 %v1316
    %v1349 = vunpack.c.l.b16 %v1317
    %v1350 = vunpack.c.l.b16 %v1318
    %v1351 = vunpack.c.l.b16 %v1319
    %v1352 = vunpack.c.l.b16 %v1320
    %v1353 = vunpack.c.l.b16 %v1321
    %v1354 = vunpack.c.l.b16 %v1322
    %v1355 = vunpack.c.l.b16 %v1323
    %v1356 = vunpack.c.l.b16 %v1324
    %v1357 = vunpack.c.l.b16 %v1325
    %v1358 = vunpack.c.l.b16 %v1326
    %v1359 = vpack.c.b16 %v1344, %v1343
    %v1360 = vpack.c.b16 %v1346, %v1345
    %v1361 = vpack.c.b16 %v1348, %v1347
    %v1362 = vpack.c.b16 %v1350, %v1349
    %v1363 = vpack.c.b16 %v1352, %v1351
    %v1364 = vpack.c.b16 %v1354, %v1353
    %v1365 = vpack.c.b16 %v1356, %v1355
    %v1366 = vpack.c.b16 %v1358, %v1357
    %1375 = vmatprep.subr.bf16.mxu0 0
    %1376 = vmatpush1.bf16.msra.mxu0 %v1366
    %1377 = vmatprep.subr.bf16.mxu0 0
    %1378 = vmatpush1.bf16.msra.mxu0 %v1365
    %1379 = vmatprep.subr.bf16.mxu0 0
    %1380 = vmatpush1.bf16.msra.mxu0 %v1364
    %1381 = vmatprep.subr.bf16.mxu0 0
    %1382 = vmatpush1.bf16.msra.mxu0 %v1363
    %1383 = vmatprep.subr.bf16.mxu0 0
    %1384 = vmatpush1.bf16.msra.mxu0 %v1362
    %1385 = vmatprep.subr.bf16.mxu0 0
    %1386 = vmatpush1.bf16.msra.mxu0 %v1361
    %1387 = vmatprep.subr.bf16.mxu0 0
    %1388 = vmatpush1.bf16.msra.mxu0 %v1360
    %1389 = vmatprep.subr.bf16.mxu0 0
    %1390 = vmatpush1.bf16.msra.mxu0 %v1359
    %1391 = vmatprep.subr.bf16.mxu0 0
    %1392 = vmatpush2.bf16.msra.mxu0 0
    %1393 = vmatprep.subr.bf16.mxu0 0
    %1394 = vmatpush2.bf16.msra.mxu0 0
    %1395 = vmatprep.subr.bf16.mxu0 0
    %1396 = vmatpush2.bf16.msra.mxu0 0
    %1397 = vmatprep.subr.bf16.mxu0 0
    %1398 = vmatpush2.bf16.msra.mxu0 0
    %1399 = vmatprep.subr.bf16.mxu0 0
    %1400 = vmatpush2.bf16.msra.mxu0 0
    %1401 = vmatprep.subr.bf16.mxu0 0
    %1402 = vmatpush2.bf16.msra.mxu0 0
    %1403 = vmatprep.subr.bf16.mxu0 0
    %1404 = vmatpush2.bf16.msra.mxu0 0
    %1405 = vmatprep.subr.bf16.mxu0 0
    %1406 = vmatpush2.bf16.msra.mxu0 0
    %1407 = vmatprep.mubr.bf16.mxu0 0
    %1408 = vmatmul.mubr.bf16.gmra.mxu0 %v1240
    %v1409 = vpop.f32.mrf.mxu0
    %v1410 = vadd.f32 0.0, %v1409
    %v1411 = vpop.f32.mrf.mxu0
    %v1412 = vpop.f32.mrf.mxu0
    %v1413 = vadd.f32 0.0, %v1412
    %v1414 = vpop.f32.mrf.mxu0
    %1415 = vmatprep.mubr.bf16.mxu0 0
    %1416 = vmatmul.mubr.bf16.gmra.mxu0 %v1241
    %v1417 = vpop.f32.mrf.mxu0
    %v1418 = vadd.f32 0.0, %v1417
    %v1419 = vpop.f32.mrf.mxu0
    %v1420 = vpop.f32.mrf.mxu0
    %v1421 = vadd.f32 0.0, %v1420
    %v1422 = vpop.f32.mrf.mxu0
    %1423 = vdwg.mxu0
    %v1440 = vunpack.c.l.b16 %v1294
    %v1441 = vunpack.c.l.b16 %v1295
    %v1442 = vunpack.c.l.b16 %v1296
    %v1443 = vunpack.c.l.b16 %v1297
    %v1444 = vunpack.c.l.b16 %v1298
    %v1445 = vunpack.c.l.b16 %v1299
    %v1446 = vunpack.c.l.b16 %v1300
    %v1447 = vunpack.c.l.b16 %v1301
    %v1448 = vunpack.c.l.b16 %v1302
    %v1449 = vunpack.c.l.b16 %v1303
    %v1450 = vunpack.c.l.b16 %v1304
    %v1451 = vunpack.c.l.b16 %v1305
    %v1452 = vunpack.c.l.b16 %v1306
    %v1453 = vunpack.c.l.b16 %v1307
    %v1454 = vunpack.c.l.b16 %v1308
    %v1455 = vunpack.c.l.b16 %v1309
    %v1456 = vpack.c.b16 %v1441, %v1440
    %v1457 = vpack.c.b16 %v1443, %v1442
    %v1458 = vpack.c.b16 %v1445, %v1444
    %v1459 = vpack.c.b16 %v1447, %v1446
    %v1460 = vpack.c.b16 %v1449, %v1448
    %v1461 = vpack.c.b16 %v1451, %v1450
    %v1462 = vpack.c.b16 %v1453, %v1452
    %v1463 = vpack.c.b16 %v1455, %v1454
    %1472 = vmatprep.subr.bf16.mxu0 0
    %1473 = vmatpush1.bf16.msra.mxu0 %v1463
    %1474 = vmatprep.subr.bf16.mxu0 0
    %1475 = vmatpush1.bf16.msra.mxu0 %v1462
    %1476 = vmatprep.subr.bf16.mxu0 0
    %1477 = vmatpush1.bf16.msra.mxu0 %v1461
    %1478 = vmatprep.subr.bf16.mxu0 0
    %1479 = vmatpush1.bf16.msra.mxu0 %v1460
    %1480 = vmatprep.subr.bf16.mxu0 0
    %1481 = vmatpush1.bf16.msra.mxu0 %v1459
    %1482 = vmatprep.subr.bf16.mxu0 0
    %1483 = vmatpush1.bf16.msra.mxu0 %v1458
    %1484 = vmatprep.subr.bf16.mxu0 0
    %1485 = vmatpush1.bf16.msra.mxu0 %v1457
    %1486 = vmatprep.subr.bf16.mxu0 0
    %1487 = vmatpush1.bf16.msra.mxu0 %v1456
    %1488 = vmatprep.subr.bf16.mxu0 0
    %1489 = vmatpush2.bf16.msra.mxu0 0
    %1490 = vmatprep.subr.bf16.mxu0 0
    %1491 = vmatpush2.bf16.msra.mxu0 0
    %1492 = vmatprep.subr.bf16.mxu0 0
    %1493 = vmatpush2.bf16.msra.mxu0 0
    %1494 = vmatprep.subr.bf16.mxu0 0
    %1495 = vmatpush2.bf16.msra.mxu0 0
    %1496 = vmatprep.subr.bf16.mxu0 0
    %1497 = vmatpush2.bf16.msra.mxu0 0
    %1498 = vmatprep.subr.bf16.mxu0 0
    %1499 = vmatpush2.bf16.msra.mxu0 0
    %1500 = vmatprep.subr.bf16.mxu0 0
    %1501 = vmatpush2.bf16.msra.mxu0 0
    %1502 = vmatprep.subr.bf16.mxu0 0
    %1503 = vmatpush2.bf16.msra.mxu0 0
    %1504 = vmatprep.mubr.bf16.mxu0 0
    %1505 = vmatmul.mubr.bf16.gmra.mxu0 %v1291
    %v1506 = vpop.f32.mrf.mxu0
    %v1507 = vadd.f32 %v1410, %v1506
    %v1508 = vpop.f32.mrf.mxu0
    %v1509 = vpop.f32.mrf.mxu0
    %v1510 = vadd.f32 %v1413, %v1509
    %v1511 = vpop.f32.mrf.mxu0
    %1512 = vmatprep.mubr.bf16.mxu0 0
    %1513 = vmatmul.mubr.bf16.gmra.mxu0 %v1292
    %v1514 = vpop.f32.mrf.mxu0
    %v1515 = vadd.f32 %v1418, %v1514
    %v1516 = vpop.f32.mrf.mxu0
    %v1517 = vpop.f32.mrf.mxu0
    %v1518 = vadd.f32 %v1421, %v1517
    %v1519 = vpop.f32.mrf.mxu0
    %1520 = vdwg.mxu0
    %v1521 = vld [vmem:[#allocation9 + $0x4] sm:$0x1]
    %v1522 = vlaneseq
    %v1523 = vshrl.u32 %v1522, 7
    %v1524 = vsub.s32 0, %v1523
    %v1525 = vrot.slane %v1521, %v1524
    %v1526 = vadd.f32 %v1507, %v1525
    %v1527 = vadd.f32 %v1510, %v1525
    %v1528 = vadd.f32 %v1515, %v1525
    %v1529 = vadd.f32 %v1518, %v1525
    %v1530 = vadd.f32 %v1526, %v942
    %v1531 = vadd.f32 %v1527, %v943
    %v1532 = vadd.f32 %v1528, %v944
    %v1533 = vadd.f32 %v1529, %v945
    %v1534 = vmax.f32 %v1530, 0.0
    %v1535 = vmax.f32 %v1531, 0.0
    %v1536 = vmax.f32 %v1532, 0.0
    %v1537 = vmax.f32 %v1533, 0.0
    %v1538 = vpack.c.bf16 %v1535, %v1534
    %v1539 = vpack.c.bf16 %v1537, %v1536
    %1540 = vmatprep.subr.bf16.mxu0 0
    %1541 = vmatpush1.bf16.msra.mxu0 0
    %1542 = vmatprep.subr.bf16.mxu0 0
    %1543 = vmatpush1.bf16.msra.mxu0 0
    %1544 = vmatprep.subr.bf16.mxu0 0
    %1545 = vmatpush1.bf16.msra.mxu0 0
    %1546 = vmatprep.subr.bf16.mxu0 0
    %1547 = vmatpush1.bf16.msra.mxu0 0
    %1548 = vmatprep.subr.bf16.mxu0 0
    %1549 = vmatpush1.bf16.msra.mxu0 0
    %1550 = vmatprep.subr.bf16.mxu0 0
    %1551 = vmatpush1.bf16.msra.mxu0 0
    %1552 = vmatprep.subr.bf16.mxu0 0
    %1553 = vmatpush1.bf16.msra.mxu0 %v1539
    %1554 = vmatprep.subr.bf16.mxu0 0
    %1555 = vmatpush1.bf16.msra.mxu0 %v1538
    %1556 = vmatprep.subr.bf16.mxu0 0
    %1557 = vmatpush2.bf16.msra.mxu0 0
    %1558 = vmatprep.subr.bf16.mxu0 0
    %1559 = vmatpush2.bf16.msra.mxu0 0
    %1560 = vmatprep.subr.bf16.mxu0 0
    %1561 = vmatpush2.bf16.msra.mxu0 0
    %1562 = vmatprep.subr.bf16.mxu0 0
    %1563 = vmatpush2.bf16.msra.mxu0 0
    %1564 = vmatprep.subr.bf16.mxu0 0
    %1565 = vmatpush2.bf16.msra.mxu0 0
    %1566 = vmatprep.subr.bf16.mxu0 0
    %1567 = vmatpush2.bf16.msra.mxu0 0
    %1568 = vmatprep.subr.bf16.mxu0 0
    %1569 = vmatpush2.bf16.msra.mxu0 0
    %1570 = vmatprep.subr.bf16.mxu0 0
    %1571 = vmatpush2.bf16.msra.mxu0 0
    %1572 = vmatprep.mubr.bf16.mxu0 0
    %1573 = vmatmul.mubr.bf16.gmra.mxu0 %v115
    %v1574 = vpop.f32.mrf.mxu0
    %v1575 = vadd.f32 0.0, %v1574
    %v1576 = vpop.f32.mrf.mxu0
    %v1577 = vpop.f32.mrf.mxu0
    %v1578 = vadd.f32 0.0, %v1577
    %v1579 = vpop.f32.mrf.mxu0
    %1580 = vmatprep.mubr.bf16.mxu0 0
    %1581 = vmatmul.mubr.bf16.gmra.mxu0 %v118
    %v1582 = vpop.f32.mrf.mxu0
    %v1583 = vadd.f32 0.0, %v1582
    %v1584 = vpop.f32.mrf.mxu0
    %v1585 = vpop.f32.mrf.mxu0
    %v1586 = vadd.f32 0.0, %v1585
    %v1587 = vpop.f32.mrf.mxu0
    %1588 = vdwg.mxu0
    %v1589 = vpack.c.bf16 %v1578, %v1575
    %v1590 = vpack.c.bf16 %v1586, %v1583
    %s1591 = scalar_lea.vmem [#allocation7], 640
    %v1592 = vld [vmem:[%s1591] sm:$0xf]
    %v1593 = vld [vmem:[%s1591 + $0x4] sm:$0xf]
    %v1594 = vld [vmem:[%s1591 + $0x8] sm:$0xf]
    %v1595 = vld [vmem:[%s1591 + $0xc] sm:$0xf]
    %v1596 = vld [vmem:[%s1591 + $0x10] sm:$0xf]
    %v1597 = vld [vmem:[%s1591 + $0x14] sm:$0xf]
    %v1598 = vld [vmem:[%s1591 + $0x18] sm:$0xf]
    %v1599 = vld [vmem:[%s1591 + $0x1c] sm:$0xf]
    %v1600 = vld [vmem:[%s1591 + $0x20] sm:$0xf]
    %v1601 = vld [vmem:[%s1591 + $0x24] sm:$0xf]
    %v1602 = vld [vmem:[%s1591 + $0x28] sm:$0xf]
    %v1603 = vld [vmem:[%s1591 + $0x2c] sm:$0xf]
    %v1604 = vld [vmem:[%s1591 + $0x30] sm:$0xf]
    %v1605 = vld [vmem:[%s1591 + $0x34] sm:$0xf]
    %v1606 = vld [vmem:[%s1591 + $0x38] sm:$0xf]
    %v1607 = vld [vmem:[%s1591 + $0x3c] sm:$0xf]
    %s1608 = scalar_lea.vmem [#allocation7], 704
    %v1609 = vld [vmem:[%s1608] sm:$0xf]
    %v1610 = vld [vmem:[%s1608 + $0x4] sm:$0xf]
    %v1611 = vld [vmem:[%s1608 + $0x8] sm:$0xf]
    %v1612 = vld [vmem:[%s1608 + $0xc] sm:$0xf]
    %v1613 = vld [vmem:[%s1608 + $0x10] sm:$0xf]
    %v1614 = vld [vmem:[%s1608 + $0x14] sm:$0xf]
    %v1615 = vld [vmem:[%s1608 + $0x18] sm:$0xf]
    %v1616 = vld [vmem:[%s1608 + $0x1c] sm:$0xf]
    %v1617 = vld [vmem:[%s1608 + $0x20] sm:$0xf]
    %v1618 = vld [vmem:[%s1608 + $0x24] sm:$0xf]
    %v1619 = vld [vmem:[%s1608 + $0x28] sm:$0xf]
    %v1620 = vld [vmem:[%s1608 + $0x2c] sm:$0xf]
    %v1621 = vld [vmem:[%s1608 + $0x30] sm:$0xf]
    %v1622 = vld [vmem:[%s1608 + $0x34] sm:$0xf]
    %v1623 = vld [vmem:[%s1608 + $0x38] sm:$0xf]
    %v1624 = vld [vmem:[%s1608 + $0x3c] sm:$0xf]
    %v1641 = vunpack.c.l.b16 %v1609
    %v1642 = vunpack.c.l.b16 %v1610
    %v1643 = vunpack.c.l.b16 %v1611
    %v1644 = vunpack.c.l.b16 %v1612
    %v1645 = vunpack.c.l.b16 %v1613
    %v1646 = vunpack.c.l.b16 %v1614
    %v1647 = vunpack.c.l.b16 %v1615
    %v1648 = vunpack.c.l.b16 %v1616
    %v1649 = vunpack.c.l.b16 %v1617
    %v1650 = vunpack.c.l.b16 %v1618
    %v1651 = vunpack.c.l.b16 %v1619
    %v1652 = vunpack.c.l.b16 %v1620
    %v1653 = vunpack.c.l.b16 %v1621
    %v1654 = vunpack.c.l.b16 %v1622
    %v1655 = vunpack.c.l.b16 %v1623
    %v1656 = vunpack.c.l.b16 %v1624
    %v1657 = vpack.c.b16 %v1642, %v1641
    %v1658 = vpack.c.b16 %v1644, %v1643
    %v1659 = vpack.c.b16 %v1646, %v1645
    %v1660 = vpack.c.b16 %v1648, %v1647
    %v1661 = vpack.c.b16 %v1650, %v1649
    %v1662 = vpack.c.b16 %v1652, %v1651
    %v1663 = vpack.c.b16 %v1654, %v1653
    %v1664 = vpack.c.b16 %v1656, %v1655
    %1673 = vmatprep.subr.bf16.mxu0 0
    %1674 = vmatpush1.bf16.msra.mxu0 %v1664
    %1675 = vmatprep.subr.bf16.mxu0 0
    %1676 = vmatpush1.bf16.msra.mxu0 %v1663
    %1677 = vmatprep.subr.bf16.mxu0 0
    %1678 = vmatpush1.bf16.msra.mxu0 %v1662
    %1679 = vmatprep.subr.bf16.mxu0 0
    %1680 = vmatpush1.bf16.msra.mxu0 %v1661
    %1681 = vmatprep.subr.bf16.mxu0 0
    %1682 = vmatpush1.bf16.msra.mxu0 %v1660
    %1683 = vmatprep.subr.bf16.mxu0 0
    %1684 = vmatpush1.bf16.msra.mxu0 %v1659
    %1685 = vmatprep.subr.bf16.mxu0 0
    %1686 = vmatpush1.bf16.msra.mxu0 %v1658
    %1687 = vmatprep.subr.bf16.mxu0 0
    %1688 = vmatpush1.bf16.msra.mxu0 %v1657
    %1689 = vmatprep.subr.bf16.mxu0 0
    %1690 = vmatpush2.bf16.msra.mxu0 0
    %1691 = vmatprep.subr.bf16.mxu0 0
    %1692 = vmatpush2.bf16.msra.mxu0 0
    %1693 = vmatprep.subr.bf16.mxu0 0
    %1694 = vmatpush2.bf16.msra.mxu0 0
    %1695 = vmatprep.subr.bf16.mxu0 0
    %1696 = vmatpush2.bf16.msra.mxu0 0
    %1697 = vmatprep.subr.bf16.mxu0 0
    %1698 = vmatpush2.bf16.msra.mxu0 0
    %1699 = vmatprep.subr.bf16.mxu0 0
    %1700 = vmatpush2.bf16.msra.mxu0 0
    %1701 = vmatprep.subr.bf16.mxu0 0
    %1702 = vmatpush2.bf16.msra.mxu0 0
    %1703 = vmatprep.subr.bf16.mxu0 0
    %1704 = vmatpush2.bf16.msra.mxu0 0
    %1705 = vmatprep.mubr.bf16.mxu0 0
    %1706 = vmatmul.mubr.bf16.gmra.mxu0 %v1538
    %v1707 = vpop.f32.mrf.mxu0
    %v1708 = vadd.f32 0.0, %v1707
    %v1709 = vpop.f32.mrf.mxu0
    %v1710 = vpop.f32.mrf.mxu0
    %v1711 = vadd.f32 0.0, %v1710
    %v1712 = vpop.f32.mrf.mxu0
    %1713 = vmatprep.mubr.bf16.mxu0 0
    %1714 = vmatmul.mubr.bf16.gmra.mxu0 %v1539
    %v1715 = vpop.f32.mrf.mxu0
    %v1716 = vadd.f32 0.0, %v1715
    %v1717 = vpop.f32.mrf.mxu0
    %v1718 = vpop.f32.mrf.mxu0
    %v1719 = vadd.f32 0.0, %v1718
    %v1720 = vpop.f32.mrf.mxu0
    %1721 = vdwg.mxu0
    %v1738 = vunpack.c.l.b16 %v1592
    %v1739 = vunpack.c.l.b16 %v1593
    %v1740 = vunpack.c.l.b16 %v1594
    %v1741 = vunpack.c.l.b16 %v1595
    %v1742 = vunpack.c.l.b16 %v1596
    %v1743 = vunpack.c.l.b16 %v1597
    %v1744 = vunpack.c.l.b16 %v1598
    %v1745 = vunpack.c.l.b16 %v1599
    %v1746 = vunpack.c.l.b16 %v1600
    %v1747 = vunpack.c.l.b16 %v1601
    %v1748 = vunpack.c.l.b16 %v1602
    %v1749 = vunpack.c.l.b16 %v1603
    %v1750 = vunpack.c.l.b16 %v1604
    %v1751 = vunpack.c.l.b16 %v1605
    %v1752 = vunpack.c.l.b16 %v1606
    %v1753 = vunpack.c.l.b16 %v1607
    %v1754 = vpack.c.b16 %v1739, %v1738
    %v1755 = vpack.c.b16 %v1741, %v1740
    %v1756 = vpack.c.b16 %v1743, %v1742
    %v1757 = vpack.c.b16 %v1745, %v1744
    %v1758 = vpack.c.b16 %v1747, %v1746
    %v1759 = vpack.c.b16 %v1749, %v1748
    %v1760 = vpack.c.b16 %v1751, %v1750
    %v1761 = vpack.c.b16 %v1753, %v1752
    %1770 = vmatprep.subr.bf16.mxu0 0
    %1771 = vmatpush1.bf16.msra.mxu0 %v1761
    %1772 = vmatprep.subr.bf16.mxu0 0
    %1773 = vmatpush1.bf16.msra.mxu0 %v1760
    %1774 = vmatprep.subr.bf16.mxu0 0
    %1775 = vmatpush1.bf16.msra.mxu0 %v1759
    %1776 = vmatprep.subr.bf16.mxu0 0
    %1777 = vmatpush1.bf16.msra.mxu0 %v1758
    %1778 = vmatprep.subr.bf16.mxu0 0
    %1779 = vmatpush1.bf16.msra.mxu0 %v1757
    %1780 = vmatprep.subr.bf16.mxu0 0
    %1781 = vmatpush1.bf16.msra.mxu0 %v1756
    %1782 = vmatprep.subr.bf16.mxu0 0
    %1783 = vmatpush1.bf16.msra.mxu0 %v1755
    %1784 = vmatprep.subr.bf16.mxu0 0
    %1785 = vmatpush1.bf16.msra.mxu0 %v1754
    %1786 = vmatprep.subr.bf16.mxu0 0
    %1787 = vmatpush2.bf16.msra.mxu0 0
    %1788 = vmatprep.subr.bf16.mxu0 0
    %1789 = vmatpush2.bf16.msra.mxu0 0
    %1790 = vmatprep.subr.bf16.mxu0 0
    %1791 = vmatpush2.bf16.msra.mxu0 0
    %1792 = vmatprep.subr.bf16.mxu0 0
    %1793 = vmatpush2.bf16.msra.mxu0 0
    %1794 = vmatprep.subr.bf16.mxu0 0
    %1795 = vmatpush2.bf16.msra.mxu0 0
    %1796 = vmatprep.subr.bf16.mxu0 0
    %1797 = vmatpush2.bf16.msra.mxu0 0
    %1798 = vmatprep.subr.bf16.mxu0 0
    %1799 = vmatpush2.bf16.msra.mxu0 0
    %1800 = vmatprep.subr.bf16.mxu0 0
    %1801 = vmatpush2.bf16.msra.mxu0 0
    %1802 = vmatprep.mubr.bf16.mxu0 0
    %1803 = vmatmul.mubr.bf16.gmra.mxu0 %v1589
    %v1804 = vpop.f32.mrf.mxu0
    %v1805 = vadd.f32 %v1708, %v1804
    %v1806 = vpop.f32.mrf.mxu0
    %v1807 = vpop.f32.mrf.mxu0
    %v1808 = vadd.f32 %v1711, %v1807
    %v1809 = vpop.f32.mrf.mxu0
    %1810 = vmatprep.mubr.bf16.mxu0 0
    %1811 = vmatmul.mubr.bf16.gmra.mxu0 %v1590
    %v1812 = vpop.f32.mrf.mxu0
    %v1813 = vadd.f32 %v1716, %v1812
    %v1814 = vpop.f32.mrf.mxu0
    %v1815 = vpop.f32.mrf.mxu0
    %v1816 = vadd.f32 %v1719, %v1815
    %v1817 = vpop.f32.mrf.mxu0
    %1818 = vdwg.mxu0
    %v1819 = vld [vmem:[#allocation9 + $0x5] sm:$0x1]
    %v1820 = vlaneseq
    %v1821 = vshrl.u32 %v1820, 7
    %v1822 = vsub.s32 0, %v1821
    %v1823 = vrot.slane %v1819, %v1822
    %v1824 = vadd.f32 %v1805, %v1823
    %v1825 = vadd.f32 %v1808, %v1823
    %v1826 = vadd.f32 %v1813, %v1823
    %v1827 = vadd.f32 %v1816, %v1823
    %s1828 = scalar_lea.vmem [#allocation7], 768
    %v1829 = vld [vmem:[%s1828] sm:$0xf]
    %v1830 = vld [vmem:[%s1828 + $0x4] sm:$0xf]
    %v1831 = vld [vmem:[%s1828 + $0x8] sm:$0xf]
    %v1832 = vld [vmem:[%s1828 + $0xc] sm:$0xf]
    %v1833 = vld [vmem:[%s1828 + $0x10] sm:$0xf]
    %v1834 = vld [vmem:[%s1828 + $0x14] sm:$0xf]
    %v1835 = vld [vmem:[%s1828 + $0x18] sm:$0xf]
    %v1836 = vld [vmem:[%s1828 + $0x1c] sm:$0xf]
    %v1837 = vld [vmem:[%s1828 + $0x20] sm:$0xf]
    %v1838 = vld [vmem:[%s1828 + $0x24] sm:$0xf]
    %v1839 = vld [vmem:[%s1828 + $0x28] sm:$0xf]
    %v1840 = vld [vmem:[%s1828 + $0x2c] sm:$0xf]
    %v1841 = vld [vmem:[%s1828 + $0x30] sm:$0xf]
    %v1842 = vld [vmem:[%s1828 + $0x34] sm:$0xf]
    %v1843 = vld [vmem:[%s1828 + $0x38] sm:$0xf]
    %v1844 = vld [vmem:[%s1828 + $0x3c] sm:$0xf]
    %s1845 = scalar_lea.vmem [#allocation7], 832
    %v1846 = vld [vmem:[%s1845] sm:$0xf]
    %v1847 = vld [vmem:[%s1845 + $0x4] sm:$0xf]
    %v1848 = vld [vmem:[%s1845 + $0x8] sm:$0xf]
    %v1849 = vld [vmem:[%s1845 + $0xc] sm:$0xf]
    %v1850 = vld [vmem:[%s1845 + $0x10] sm:$0xf]
    %v1851 = vld [vmem:[%s1845 + $0x14] sm:$0xf]
    %v1852 = vld [vmem:[%s1845 + $0x18] sm:$0xf]
    %v1853 = vld [vmem:[%s1845 + $0x1c] sm:$0xf]
    %v1854 = vld [vmem:[%s1845 + $0x20] sm:$0xf]
    %v1855 = vld [vmem:[%s1845 + $0x24] sm:$0xf]
    %v1856 = vld [vmem:[%s1845 + $0x28] sm:$0xf]
    %v1857 = vld [vmem:[%s1845 + $0x2c] sm:$0xf]
    %v1858 = vld [vmem:[%s1845 + $0x30] sm:$0xf]
    %v1859 = vld [vmem:[%s1845 + $0x34] sm:$0xf]
    %v1860 = vld [vmem:[%s1845 + $0x38] sm:$0xf]
    %v1861 = vld [vmem:[%s1845 + $0x3c] sm:$0xf]
    %v1878 = vunpack.c.l.b16 %v1846
    %v1879 = vunpack.c.l.b16 %v1847
    %v1880 = vunpack.c.l.b16 %v1848
    %v1881 = vunpack.c.l.b16 %v1849
    %v1882 = vunpack.c.l.b16 %v1850
    %v1883 = vunpack.c.l.b16 %v1851
    %v1884 = vunpack.c.l.b16 %v1852
    %v1885 = vunpack.c.l.b16 %v1853
    %v1886 = vunpack.c.l.b16 %v1854
    %v1887 = vunpack.c.l.b16 %v1855
    %v1888 = vunpack.c.l.b16 %v1856
    %v1889 = vunpack.c.l.b16 %v1857
    %v1890 = vunpack.c.l.b16 %v1858
    %v1891 = vunpack.c.l.b16 %v1859
    %v1892 = vunpack.c.l.b16 %v1860
    %v1893 = vunpack.c.l.b16 %v1861
    %v1894 = vpack.c.b16 %v1879, %v1878
    %v1895 = vpack.c.b16 %v1881, %v1880
    %v1896 = vpack.c.b16 %v1883, %v1882
    %v1897 = vpack.c.b16 %v1885, %v1884
    %v1898 = vpack.c.b16 %v1887, %v1886
    %v1899 = vpack.c.b16 %v1889, %v1888
    %v1900 = vpack.c.b16 %v1891, %v1890
    %v1901 = vpack.c.b16 %v1893, %v1892
    %1910 = vmatprep.subr.bf16.mxu0 0
    %1911 = vmatpush1.bf16.msra.mxu0 %v1901
    %1912 = vmatprep.subr.bf16.mxu0 0
    %1913 = vmatpush1.bf16.msra.mxu0 %v1900
    %1914 = vmatprep.subr.bf16.mxu0 0
    %1915 = vmatpush1.bf16.msra.mxu0 %v1899
    %1916 = vmatprep.subr.bf16.mxu0 0
    %1917 = vmatpush1.bf16.msra.mxu0 %v1898
    %1918 = vmatprep.subr.bf16.mxu0 0
    %1919 = vmatpush1.bf16.msra.mxu0 %v1897
    %1920 = vmatprep.subr.bf16.mxu0 0
    %1921 = vmatpush1.bf16.msra.mxu0 %v1896
    %1922 = vmatprep.subr.bf16.mxu0 0
    %1923 = vmatpush1.bf16.msra.mxu0 %v1895
    %1924 = vmatprep.subr.bf16.mxu0 0
    %1925 = vmatpush1.bf16.msra.mxu0 %v1894
    %1926 = vmatprep.subr.bf16.mxu0 0
    %1927 = vmatpush2.bf16.msra.mxu0 0
    %1928 = vmatprep.subr.bf16.mxu0 0
    %1929 = vmatpush2.bf16.msra.mxu0 0
    %1930 = vmatprep.subr.bf16.mxu0 0
    %1931 = vmatpush2.bf16.msra.mxu0 0
    %1932 = vmatprep.subr.bf16.mxu0 0
    %1933 = vmatpush2.bf16.msra.mxu0 0
    %1934 = vmatprep.subr.bf16.mxu0 0
    %1935 = vmatpush2.bf16.msra.mxu0 0
    %1936 = vmatprep.subr.bf16.mxu0 0
    %1937 = vmatpush2.bf16.msra.mxu0 0
    %1938 = vmatprep.subr.bf16.mxu0 0
    %1939 = vmatpush2.bf16.msra.mxu0 0
    %1940 = vmatprep.subr.bf16.mxu0 0
    %1941 = vmatpush2.bf16.msra.mxu0 0
    %1942 = vmatprep.mubr.bf16.mxu0 0
    %1943 = vmatmul.mubr.bf16.gmra.mxu0 %v1538
    %v1944 = vpop.f32.mrf.mxu0
    %v1945 = vadd.f32 0.0, %v1944
    %v1946 = vpop.f32.mrf.mxu0
    %v1947 = vpop.f32.mrf.mxu0
    %v1948 = vadd.f32 0.0, %v1947
    %v1949 = vpop.f32.mrf.mxu0
    %1950 = vmatprep.mubr.bf16.mxu0 0
    %1951 = vmatmul.mubr.bf16.gmra.mxu0 %v1539
    %v1952 = vpop.f32.mrf.mxu0
    %v1953 = vadd.f32 0.0, %v1952
    %v1954 = vpop.f32.mrf.mxu0
    %v1955 = vpop.f32.mrf.mxu0
    %v1956 = vadd.f32 0.0, %v1955
    %v1957 = vpop.f32.mrf.mxu0
    %1958 = vdwg.mxu0
    %v1975 = vunpack.c.l.b16 %v1829
    %v1976 = vunpack.c.l.b16 %v1830
    %v1977 = vunpack.c.l.b16 %v1831
    %v1978 = vunpack.c.l.b16 %v1832
    %v1979 = vunpack.c.l.b16 %v1833
    %v1980 = vunpack.c.l.b16 %v1834
    %v1981 = vunpack.c.l.b16 %v1835
    %v1982 = vunpack.c.l.b16 %v1836
    %v1983 = vunpack.c.l.b16 %v1837
    %v1984 = vunpack.c.l.b16 %v1838
    %v1985 = vunpack.c.l.b16 %v1839
    %v1986 = vunpack.c.l.b16 %v1840
    %v1987 = vunpack.c.l.b16 %v1841
    %v1988 = vunpack.c.l.b16 %v1842
    %v1989 = vunpack.c.l.b16 %v1843
    %v1990 = vunpack.c.l.b16 %v1844
    %v1991 = vpack.c.b16 %v1976, %v1975
    %v1992 = vpack.c.b16 %v1978, %v1977
    %v1993 = vpack.c.b16 %v1980, %v1979
    %v1994 = vpack.c.b16 %v1982, %v1981
    %v1995 = vpack.c.b16 %v1984, %v1983
    %v1996 = vpack.c.b16 %v1986, %v1985
    %v1997 = vpack.c.b16 %v1988, %v1987
    %v1998 = vpack.c.b16 %v1990, %v1989
    %2007 = vmatprep.subr.bf16.mxu0 0
    %2008 = vmatpush1.bf16.msra.mxu0 %v1998
    %2009 = vmatprep.subr.bf16.mxu0 0
    %2010 = vmatpush1.bf16.msra.mxu0 %v1997
    %2011 = vmatprep.subr.bf16.mxu0 0
    %2012 = vmatpush1.bf16.msra.mxu0 %v1996
    %2013 = vmatprep.subr.bf16.mxu0 0
    %2014 = vmatpush1.bf16.msra.mxu0 %v1995
    %2015 = vmatprep.subr.bf16.mxu0 0
    %2016 = vmatpush1.bf16.msra.mxu0 %v1994
    %2017 = vmatprep.subr.bf16.mxu0 0
    %2018 = vmatpush1.bf16.msra.mxu0 %v1993
    %2019 = vmatprep.subr.bf16.mxu0 0
    %2020 = vmatpush1.bf16.msra.mxu0 %v1992
    %2021 = vmatprep.subr.bf16.mxu0 0
    %2022 = vmatpush1.bf16.msra.mxu0 %v1991
    %2023 = vmatprep.subr.bf16.mxu0 0
    %2024 = vmatpush2.bf16.msra.mxu0 0
    %2025 = vmatprep.subr.bf16.mxu0 0
    %2026 = vmatpush2.bf16.msra.mxu0 0
    %2027 = vmatprep.subr.bf16.mxu0 0
    %2028 = vmatpush2.bf16.msra.mxu0 0
    %2029 = vmatprep.subr.bf16.mxu0 0
    %2030 = vmatpush2.bf16.msra.mxu0 0
    %2031 = vmatprep.subr.bf16.mxu0 0
    %2032 = vmatpush2.bf16.msra.mxu0 0
    %2033 = vmatprep.subr.bf16.mxu0 0
    %2034 = vmatpush2.bf16.msra.mxu0 0
    %2035 = vmatprep.subr.bf16.mxu0 0
    %2036 = vmatpush2.bf16.msra.mxu0 0
    %2037 = vmatprep.subr.bf16.mxu0 0
    %2038 = vmatpush2.bf16.msra.mxu0 0
    %2039 = vmatprep.mubr.bf16.mxu0 0
    %2040 = vmatmul.mubr.bf16.gmra.mxu0 %v1589
    %v2041 = vpop.f32.mrf.mxu0
    %v2042 = vadd.f32 %v1945, %v2041
    %v2043 = vpop.f32.mrf.mxu0
    %v2044 = vpop.f32.mrf.mxu0
    %v2045 = vadd.f32 %v1948, %v2044
    %v2046 = vpop.f32.mrf.mxu0
    %2047 = vmatprep.mubr.bf16.mxu0 0
    %2048 = vmatmul.mubr.bf16.gmra.mxu0 %v1590
    %v2049 = vpop.f32.mrf.mxu0
    %v2050 = vadd.f32 %v1953, %v2049
    %v2051 = vpop.f32.mrf.mxu0
    %v2052 = vpop.f32.mrf.mxu0
    %v2053 = vadd.f32 %v1956, %v2052
    %v2054 = vpop.f32.mrf.mxu0
    %2055 = vdwg.mxu0
    %v2056 = vld [vmem:[#allocation9 + $0x6] sm:$0x1]
    %v2057 = vlaneseq
    %v2058 = vshrl.u32 %v2057, 7
    %v2059 = vsub.s32 0, %v2058
    %v2060 = vrot.slane %v2056, %v2059
    %v2061 = vadd.f32 %v2042, %v2060
    %v2062 = vadd.f32 %v2045, %v2060
    %v2063 = vadd.f32 %v2050, %v2060
    %v2064 = vadd.f32 %v2053, %v2060
    %v2065 = vmax.f32 %v2061, -10.0
    %v2066 = vmax.f32 %v2062, -10.0
    %v2067 = vmax.f32 %v2063, -10.0
    %v2068 = vmax.f32 %v2064, -10.0
    %v2069 = vmin.f32 %v2065, 10.0
    %v2070 = vmin.f32 %v2066, 10.0
    %v2071 = vmin.f32 %v2067, 10.0
    %v2072 = vmin.f32 %v2068, 10.0
    %v2073 = vmul.f32 %v2069, 1.442695
    %v2074 = vpow.pop %v2073
    %v2075 = vmul.f32 %v2070, 1.442695
    %v2076 = vpow.pop %v2075
    %v2077 = vmul.f32 %v2071, 1.442695
    %v2078 = vpow.pop %v2077
    %v2079 = vmul.f32 %v2072, 1.442695
    %v2080 = vpow.pop %v2079
    %v2081 = vmul.f32 %v97, %v2074
    %v2082 = vmul.f32 %v98, %v2076
    %v2083 = vmul.f32 %v99, %v2078
    %v2084 = vmul.f32 %v100, %v2080
    %v2085 = vadd.f32 %v1824, %v2081
    %v2086 = vadd.f32 %v1825, %v2082
    %v2087 = vadd.f32 %v1826, %v2083
    %v2088 = vadd.f32 %v1827, %v2084
    %v2089 = vpack.c.bf16 %v2086, %v2085
    %v2090 = vpack.c.bf16 %v2088, %v2087
    %2091 = vmatprep.subr.bf16.mxu0 0
    %2092 = vmatpush1.bf16.msra.mxu0 0
    %2093 = vmatprep.subr.bf16.mxu0 0
    %2094 = vmatpush1.bf16.msra.mxu0 0
    %2095 = vmatprep.subr.bf16.mxu0 0
    %2096 = vmatpush1.bf16.msra.mxu0 0
    %2097 = vmatprep.subr.bf16.mxu0 0
    %2098 = vmatpush1.bf16.msra.mxu0 0
    %2099 = vmatprep.subr.bf16.mxu0 0
    %2100 = vmatpush1.bf16.msra.mxu0 0
    %2101 = vmatprep.subr.bf16.mxu0 0
    %2102 = vmatpush1.bf16.msra.mxu0 0
    %2103 = vmatprep.subr.bf16.mxu0 0
    %2104 = vmatpush1.bf16.msra.mxu0 %v2090
    %2105 = vmatprep.subr.bf16.mxu0 0
    %2106 = vmatpush1.bf16.msra.mxu0 %v2089
    %2107 = vmatprep.subr.bf16.mxu0 0
    %2108 = vmatpush2.bf16.msra.mxu0 0
    %2109 = vmatprep.subr.bf16.mxu0 0
    %2110 = vmatpush2.bf16.msra.mxu0 0
    %2111 = vmatprep.subr.bf16.mxu0 0
    %2112 = vmatpush2.bf16.msra.mxu0 0
    %2113 = vmatprep.subr.bf16.mxu0 0
    %2114 = vmatpush2.bf16.msra.mxu0 0
    %2115 = vmatprep.subr.bf16.mxu0 0
    %2116 = vmatpush2.bf16.msra.mxu0 0
    %2117 = vmatprep.subr.bf16.mxu0 0
    %2118 = vmatpush2.bf16.msra.mxu0 0
    %2119 = vmatprep.subr.bf16.mxu0 0
    %2120 = vmatpush2.bf16.msra.mxu0 0
    %2121 = vmatprep.subr.bf16.mxu0 0
    %2122 = vmatpush2.bf16.msra.mxu0 0
    %2123 = vmatprep.mubr.bf16.mxu0 0
    %2124 = vmatmul.mubr.bf16.gmra.mxu0 %v115
    %v2125 = vpop.f32.mrf.mxu0
    %v2126 = vadd.f32 0.0, %v2125
    %v2127 = vpop.f32.mrf.mxu0
    %v2128 = vpop.f32.mrf.mxu0
    %v2129 = vadd.f32 0.0, %v2128
    %v2130 = vpop.f32.mrf.mxu0
    %2131 = vmatprep.mubr.bf16.mxu0 0
    %2132 = vmatmul.mubr.bf16.gmra.mxu0 %v118
    %v2133 = vpop.f32.mrf.mxu0
    %v2134 = vadd.f32 0.0, %v2133
    %v2135 = vpop.f32.mrf.mxu0
    %v2136 = vpop.f32.mrf.mxu0
    %v2137 = vadd.f32 0.0, %v2136
    %v2138 = vpop.f32.mrf.mxu0
    %2139 = vdwg.mxu0
    %v2140 = vpack.c.bf16 %v2129, %v2126
    %v2141 = vpack.c.bf16 %v2137, %v2134
    %s2142 = scalar_lea.vmem [#allocation7], 896
    %v2143 = vld [vmem:[%s2142] sm:$0xf]
    %v2144 = vld [vmem:[%s2142 + $0x4] sm:$0xf]
    %v2145 = vld [vmem:[%s2142 + $0x8] sm:$0xf]
    %v2146 = vld [vmem:[%s2142 + $0xc] sm:$0xf]
    %v2147 = vld [vmem:[%s2142 + $0x10] sm:$0xf]
    %v2148 = vld [vmem:[%s2142 + $0x14] sm:$0xf]
    %v2149 = vld [vmem:[%s2142 + $0x18] sm:$0xf]
    %v2150 = vld [vmem:[%s2142 + $0x1c] sm:$0xf]
    %v2151 = vld [vmem:[%s2142 + $0x20] sm:$0xf]
    %v2152 = vld [vmem:[%s2142 + $0x24] sm:$0xf]
    %v2153 = vld [vmem:[%s2142 + $0x28] sm:$0xf]
    %v2154 = vld [vmem:[%s2142 + $0x2c] sm:$0xf]
    %v2155 = vld [vmem:[%s2142 + $0x30] sm:$0xf]
    %v2156 = vld [vmem:[%s2142 + $0x34] sm:$0xf]
    %v2157 = vld [vmem:[%s2142 + $0x38] sm:$0xf]
    %v2158 = vld [vmem:[%s2142 + $0x3c] sm:$0xf]
    %s2159 = scalar_lea.vmem [#allocation7], 960
    %v2160 = vld [vmem:[%s2159] sm:$0xf]
    %v2161 = vld [vmem:[%s2159 + $0x4] sm:$0xf]
    %v2162 = vld [vmem:[%s2159 + $0x8] sm:$0xf]
    %v2163 = vld [vmem:[%s2159 + $0xc] sm:$0xf]
    %v2164 = vld [vmem:[%s2159 + $0x10] sm:$0xf]
    %v2165 = vld [vmem:[%s2159 + $0x14] sm:$0xf]
    %v2166 = vld [vmem:[%s2159 + $0x18] sm:$0xf]
    %v2167 = vld [vmem:[%s2159 + $0x1c] sm:$0xf]
    %v2168 = vld [vmem:[%s2159 + $0x20] sm:$0xf]
    %v2169 = vld [vmem:[%s2159 + $0x24] sm:$0xf]
    %v2170 = vld [vmem:[%s2159 + $0x28] sm:$0xf]
    %v2171 = vld [vmem:[%s2159 + $0x2c] sm:$0xf]
    %v2172 = vld [vmem:[%s2159 + $0x30] sm:$0xf]
    %v2173 = vld [vmem:[%s2159 + $0x34] sm:$0xf]
    %v2174 = vld [vmem:[%s2159 + $0x38] sm:$0xf]
    %v2175 = vld [vmem:[%s2159 + $0x3c] sm:$0xf]
    %v2192 = vunpack.c.l.b16 %v2160
    %v2193 = vunpack.c.l.b16 %v2161
    %v2194 = vunpack.c.l.b16 %v2162
    %v2195 = vunpack.c.l.b16 %v2163
    %v2196 = vunpack.c.l.b16 %v2164
    %v2197 = vunpack.c.l.b16 %v2165
    %v2198 = vunpack.c.l.b16 %v2166
    %v2199 = vunpack.c.l.b16 %v2167
    %v2200 = vunpack.c.l.b16 %v2168
    %v2201 = vunpack.c.l.b16 %v2169
    %v2202 = vunpack.c.l.b16 %v2170
    %v2203 = vunpack.c.l.b16 %v2171
    %v2204 = vunpack.c.l.b16 %v2172
    %v2205 = vunpack.c.l.b16 %v2173
    %v2206 = vunpack.c.l.b16 %v2174
    %v2207 = vunpack.c.l.b16 %v2175
    %v2208 = vpack.c.b16 %v2193, %v2192
    %v2209 = vpack.c.b16 %v2195, %v2194
    %v2210 = vpack.c.b16 %v2197, %v2196
    %v2211 = vpack.c.b16 %v2199, %v2198
    %v2212 = vpack.c.b16 %v2201, %v2200
    %v2213 = vpack.c.b16 %v2203, %v2202
    %v2214 = vpack.c.b16 %v2205, %v2204
    %v2215 = vpack.c.b16 %v2207, %v2206
    %2224 = vmatprep.subr.bf16.mxu0 0
    %2225 = vmatpush1.bf16.msra.mxu0 %v2215
    %2226 = vmatprep.subr.bf16.mxu0 0
    %2227 = vmatpush1.bf16.msra.mxu0 %v2214
    %2228 = vmatprep.subr.bf16.mxu0 0
    %2229 = vmatpush1.bf16.msra.mxu0 %v2213
    %2230 = vmatprep.subr.bf16.mxu0 0
    %2231 = vmatpush1.bf16.msra.mxu0 %v2212
    %2232 = vmatprep.subr.bf16.mxu0 0
    %2233 = vmatpush1.bf16.msra.mxu0 %v2211
    %2234 = vmatprep.subr.bf16.mxu0 0
    %2235 = vmatpush1.bf16.msra.mxu0 %v2210
    %2236 = vmatprep.subr.bf16.mxu0 0
    %2237 = vmatpush1.bf16.msra.mxu0 %v2209
    %2238 = vmatprep.subr.bf16.mxu0 0
    %2239 = vmatpush1.bf16.msra.mxu0 %v2208
    %2240 = vmatprep.subr.bf16.mxu0 0
    %2241 = vmatpush2.bf16.msra.mxu0 0
    %2242 = vmatprep.subr.bf16.mxu0 0
    %2243 = vmatpush2.bf16.msra.mxu0 0
    %2244 = vmatprep.subr.bf16.mxu0 0
    %2245 = vmatpush2.bf16.msra.mxu0 0
    %2246 = vmatprep.subr.bf16.mxu0 0
    %2247 = vmatpush2.bf16.msra.mxu0 0
    %2248 = vmatprep.subr.bf16.mxu0 0
    %2249 = vmatpush2.bf16.msra.mxu0 0
    %2250 = vmatprep.subr.bf16.mxu0 0
    %2251 = vmatpush2.bf16.msra.mxu0 0
    %2252 = vmatprep.subr.bf16.mxu0 0
    %2253 = vmatpush2.bf16.msra.mxu0 0
    %2254 = vmatprep.subr.bf16.mxu0 0
    %2255 = vmatpush2.bf16.msra.mxu0 0
    %2256 = vmatprep.mubr.bf16.mxu0 0
    %2257 = vmatmul.mubr.bf16.gmra.mxu0 %v2089
    %v2258 = vpop.f32.mrf.mxu0
    %v2259 = vadd.f32 0.0, %v2258
    %v2260 = vpop.f32.mrf.mxu0
    %v2261 = vpop.f32.mrf.mxu0
    %v2262 = vadd.f32 0.0, %v2261
    %v2263 = vpop.f32.mrf.mxu0
    %2264 = vmatprep.mubr.bf16.mxu0 0
    %2265 = vmatmul.mubr.bf16.gmra.mxu0 %v2090
    %v2266 = vpop.f32.mrf.mxu0
    %v2267 = vadd.f32 0.0, %v2266
    %v2268 = vpop.f32.mrf.mxu0
    %v2269 = vpop.f32.mrf.mxu0
    %v2270 = vadd.f32 0.0, %v2269
    %v2271 = vpop.f32.mrf.mxu0
    %2272 = vdwg.mxu0
    %v2289 = vunpack.c.l.b16 %v2143
    %v2290 = vunpack.c.l.b16 %v2144
    %v2291 = vunpack.c.l.b16 %v2145
    %v2292 = vunpack.c.l.b16 %v2146
    %v2293 = vunpack.c.l.b16 %v2147
    %v2294 = vunpack.c.l.b16 %v2148
    %v2295 = vunpack.c.l.b16 %v2149
    %v2296 = vunpack.c.l.b16 %v2150
    %v2297 = vunpack.c.l.b16 %v2151
    %v2298 = vunpack.c.l.b16 %v2152
    %v2299 = vunpack.c.l.b16 %v2153
    %v2300 = vunpack.c.l.b16 %v2154
    %v2301 = vunpack.c.l.b16 %v2155
    %v2302 = vunpack.c.l.b16 %v2156
    %v2303 = vunpack.c.l.b16 %v2157
    %v2304 = vunpack.c.l.b16 %v2158
    %v2305 = vpack.c.b16 %v2290, %v2289
    %v2306 = vpack.c.b16 %v2292, %v2291
    %v2307 = vpack.c.b16 %v2294, %v2293
    %v2308 = vpack.c.b16 %v2296, %v2295
    %v2309 = vpack.c.b16 %v2298, %v2297
    %v2310 = vpack.c.b16 %v2300, %v2299
    %v2311 = vpack.c.b16 %v2302, %v2301
    %v2312 = vpack.c.b16 %v2304, %v2303
    %2321 = vmatprep.subr.bf16.mxu0 0
    %2322 = vmatpush1.bf16.msra.mxu0 %v2312
    %2323 = vmatprep.subr.bf16.mxu0 0
    %2324 = vmatpush1.bf16.msra.mxu0 %v2311
    %2325 = vmatprep.subr.bf16.mxu0 0
    %2326 = vmatpush1.bf16.msra.mxu0 %v2310
    %2327 = vmatprep.subr.bf16.mxu0 0
    %2328 = vmatpush1.bf16.msra.mxu0 %v2309
    %2329 = vmatprep.subr.bf16.mxu0 0
    %2330 = vmatpush1.bf16.msra.mxu0 %v2308
    %2331 = vmatprep.subr.bf16.mxu0 0
    %2332 = vmatpush1.bf16.msra.mxu0 %v2307
    %2333 = vmatprep.subr.bf16.mxu0 0
    %2334 = vmatpush1.bf16.msra.mxu0 %v2306
    %2335 = vmatprep.subr.bf16.mxu0 0
    %2336 = vmatpush1.bf16.msra.mxu0 %v2305
    %2337 = vmatprep.subr.bf16.mxu0 0
    %2338 = vmatpush2.bf16.msra.mxu0 0
    %2339 = vmatprep.subr.bf16.mxu0 0
    %2340 = vmatpush2.bf16.msra.mxu0 0
    %2341 = vmatprep.subr.bf16.mxu0 0
    %2342 = vmatpush2.bf16.msra.mxu0 0
    %2343 = vmatprep.subr.bf16.mxu0 0
    %2344 = vmatpush2.bf16.msra.mxu0 0
    %2345 = vmatprep.subr.bf16.mxu0 0
    %2346 = vmatpush2.bf16.msra.mxu0 0
    %2347 = vmatprep.subr.bf16.mxu0 0
    %2348 = vmatpush2.bf16.msra.mxu0 0
    %2349 = vmatprep.subr.bf16.mxu0 0
    %2350 = vmatpush2.bf16.msra.mxu0 0
    %2351 = vmatprep.subr.bf16.mxu0 0
    %2352 = vmatpush2.bf16.msra.mxu0 0
    %2353 = vmatprep.mubr.bf16.mxu0 0
    %2354 = vmatmul.mubr.bf16.gmra.mxu0 %v2140
    %v2355 = vpop.f32.mrf.mxu0
    %v2356 = vadd.f32 %v2259, %v2355
    %v2357 = vpop.f32.mrf.mxu0
    %v2358 = vpop.f32.mrf.mxu0
    %v2359 = vadd.f32 %v2262, %v2358
    %v2360 = vpop.f32.mrf.mxu0
    %2361 = vmatprep.mubr.bf16.mxu0 0
    %2362 = vmatmul.mubr.bf16.gmra.mxu0 %v2141
    %v2363 = vpop.f32.mrf.mxu0
    %v2364 = vadd.f32 %v2267, %v2363
    %v2365 = vpop.f32.mrf.mxu0
    %v2366 = vpop.f32.mrf.mxu0
    %v2367 = vadd.f32 %v2270, %v2366
    %v2368 = vpop.f32.mrf.mxu0
    %2369 = vdwg.mxu0
    %v2370 = vld [vmem:[#allocation9 + $0x7] sm:$0x1]
    %v2371 = vlaneseq
    %v2372 = vshrl.u32 %v2371, 7
    %v2373 = vsub.s32 0, %v2372
    %v2374 = vrot.slane %v2370, %v2373
    %v2375 = vadd.f32 %v2356, %v2374
    %v2376 = vadd.f32 %v2359, %v2374
    %v2377 = vadd.f32 %v2364, %v2374
    %v2378 = vadd.f32 %v2367, %v2374
    %v2379 = vpack.c.bf16 %v2376, %v2375
    %v2380 = vpack.c.bf16 %v2378, %v2377
    %2381 = vmatprep.subr.bf16.mxu0 0
    %2382 = vmatpush1.bf16.msra.mxu0 0
    %2383 = vmatprep.subr.bf16.mxu0 0
    %2384 = vmatpush1.bf16.msra.mxu0 0
    %2385 = vmatprep.subr.bf16.mxu0 0
    %2386 = vmatpush1.bf16.msra.mxu0 0
    %2387 = vmatprep.subr.bf16.mxu0 0
    %2388 = vmatpush1.bf16.msra.mxu0 0
    %2389 = vmatprep.subr.bf16.mxu0 0
    %2390 = vmatpush1.bf16.msra.mxu0 0
    %2391 = vmatprep.subr.bf16.mxu0 0
    %2392 = vmatpush1.bf16.msra.mxu0 0
    %2393 = vmatprep.subr.bf16.mxu0 0
    %2394 = vmatpush1.bf16.msra.mxu0 %v2380
    %2395 = vmatprep.subr.bf16.mxu0 0
    %2396 = vmatpush1.bf16.msra.mxu0 %v2379
    %2397 = vmatprep.subr.bf16.mxu0 0
    %2398 = vmatpush2.bf16.msra.mxu0 0
    %2399 = vmatprep.subr.bf16.mxu0 0
    %2400 = vmatpush2.bf16.msra.mxu0 0
    %2401 = vmatprep.subr.bf16.mxu0 0
    %2402 = vmatpush2.bf16.msra.mxu0 0
    %2403 = vmatprep.subr.bf16.mxu0 0
    %2404 = vmatpush2.bf16.msra.mxu0 0
    %2405 = vmatprep.subr.bf16.mxu0 0
    %2406 = vmatpush2.bf16.msra.mxu0 0
    %2407 = vmatprep.subr.bf16.mxu0 0
    %2408 = vmatpush2.bf16.msra.mxu0 0
    %2409 = vmatprep.subr.bf16.mxu0 0
    %2410 = vmatpush2.bf16.msra.mxu0 0
    %2411 = vmatprep.subr.bf16.mxu0 0
    %2412 = vmatpush2.bf16.msra.mxu0 0
    %2413 = vmatprep.mubr.bf16.mxu0 0
    %2414 = vmatmul.mubr.bf16.gmra.mxu0 %v115
    %v2415 = vpop.f32.mrf.mxu0
    %v2416 = vadd.f32 0.0, %v2415
    %v2417 = vpop.f32.mrf.mxu0
    %v2418 = vpop.f32.mrf.mxu0
    %v2419 = vadd.f32 0.0, %v2418
    %v2420 = vpop.f32.mrf.mxu0
    %2421 = vmatprep.mubr.bf16.mxu0 0
    %2422 = vmatmul.mubr.bf16.gmra.mxu0 %v118
    %v2423 = vpop.f32.mrf.mxu0
    %v2424 = vadd.f32 0.0, %v2423
    %v2425 = vpop.f32.mrf.mxu0
    %v2426 = vpop.f32.mrf.mxu0
    %v2427 = vadd.f32 0.0, %v2426
    %v2428 = vpop.f32.mrf.mxu0
    %2429 = vdwg.mxu0
    %v2430 = vpack.c.bf16 %v2419, %v2416
    %v2431 = vpack.c.bf16 %v2427, %v2424
    %s2432 = scalar_lea.vmem [#allocation7], 1024
    %v2433 = vld [vmem:[%s2432] sm:$0xf]
    %v2434 = vld [vmem:[%s2432 + $0x4] sm:$0xf]
    %v2435 = vld [vmem:[%s2432 + $0x8] sm:$0xf]
    %v2436 = vld [vmem:[%s2432 + $0xc] sm:$0xf]
    %v2437 = vld [vmem:[%s2432 + $0x10] sm:$0xf]
    %v2438 = vld [vmem:[%s2432 + $0x14] sm:$0xf]
    %v2439 = vld [vmem:[%s2432 + $0x18] sm:$0xf]
    %v2440 = vld [vmem:[%s2432 + $0x1c] sm:$0xf]
    %v2441 = vld [vmem:[%s2432 + $0x20] sm:$0xf]
    %v2442 = vld [vmem:[%s2432 + $0x24] sm:$0xf]
    %v2443 = vld [vmem:[%s2432 + $0x28] sm:$0xf]
    %v2444 = vld [vmem:[%s2432 + $0x2c] sm:$0xf]
    %v2445 = vld [vmem:[%s2432 + $0x30] sm:$0xf]
    %v2446 = vld [vmem:[%s2432 + $0x34] sm:$0xf]
    %v2447 = vld [vmem:[%s2432 + $0x38] sm:$0xf]
    %v2448 = vld [vmem:[%s2432 + $0x3c] sm:$0xf]
    %s2449 = scalar_lea.vmem [#allocation7], 1088
    %v2450 = vld [vmem:[%s2449] sm:$0xf]
    %v2451 = vld [vmem:[%s2449 + $0x4] sm:$0xf]
    %v2452 = vld [vmem:[%s2449 + $0x8] sm:$0xf]
    %v2453 = vld [vmem:[%s2449 + $0xc] sm:$0xf]
    %v2454 = vld [vmem:[%s2449 + $0x10] sm:$0xf]
    %v2455 = vld [vmem:[%s2449 + $0x14] sm:$0xf]
    %v2456 = vld [vmem:[%s2449 + $0x18] sm:$0xf]
    %v2457 = vld [vmem:[%s2449 + $0x1c] sm:$0xf]
    %v2458 = vld [vmem:[%s2449 + $0x20] sm:$0xf]
    %v2459 = vld [vmem:[%s2449 + $0x24] sm:$0xf]
    %v2460 = vld [vmem:[%s2449 + $0x28] sm:$0xf]
    %v2461 = vld [vmem:[%s2449 + $0x2c] sm:$0xf]
    %v2462 = vld [vmem:[%s2449 + $0x30] sm:$0xf]
    %v2463 = vld [vmem:[%s2449 + $0x34] sm:$0xf]
    %v2464 = vld [vmem:[%s2449 + $0x38] sm:$0xf]
    %v2465 = vld [vmem:[%s2449 + $0x3c] sm:$0xf]
    %v2482 = vunpack.c.l.b16 %v2450
    %v2483 = vunpack.c.l.b16 %v2451
    %v2484 = vunpack.c.l.b16 %v2452
    %v2485 = vunpack.c.l.b16 %v2453
    %v2486 = vunpack.c.l.b16 %v2454
    %v2487 = vunpack.c.l.b16 %v2455
    %v2488 = vunpack.c.l.b16 %v2456
    %v2489 = vunpack.c.l.b16 %v2457
    %v2490 = vunpack.c.l.b16 %v2458
    %v2491 = vunpack.c.l.b16 %v2459
    %v2492 = vunpack.c.l.b16 %v2460
    %v2493 = vunpack.c.l.b16 %v2461
    %v2494 = vunpack.c.l.b16 %v2462
    %v2495 = vunpack.c.l.b16 %v2463
    %v2496 = vunpack.c.l.b16 %v2464
    %v2497 = vunpack.c.l.b16 %v2465
    %v2498 = vpack.c.b16 %v2483, %v2482
    %v2499 = vpack.c.b16 %v2485, %v2484
    %v2500 = vpack.c.b16 %v2487, %v2486
    %v2501 = vpack.c.b16 %v2489, %v2488
    %v2502 = vpack.c.b16 %v2491, %v2490
    %v2503 = vpack.c.b16 %v2493, %v2492
    %v2504 = vpack.c.b16 %v2495, %v2494
    %v2505 = vpack.c.b16 %v2497, %v2496
    %2514 = vmatprep.subr.bf16.mxu0 0
    %2515 = vmatpush1.bf16.msra.mxu0 %v2505
    %2516 = vmatprep.subr.bf16.mxu0 0
    %2517 = vmatpush1.bf16.msra.mxu0 %v2504
    %2518 = vmatprep.subr.bf16.mxu0 0
    %2519 = vmatpush1.bf16.msra.mxu0 %v2503
    %2520 = vmatprep.subr.bf16.mxu0 0
    %2521 = vmatpush1.bf16.msra.mxu0 %v2502
    %2522 = vmatprep.subr.bf16.mxu0 0
    %2523 = vmatpush1.bf16.msra.mxu0 %v2501
    %2524 = vmatprep.subr.bf16.mxu0 0
    %2525 = vmatpush1.bf16.msra.mxu0 %v2500
    %2526 = vmatprep.subr.bf16.mxu0 0
    %2527 = vmatpush1.bf16.msra.mxu0 %v2499
    %2528 = vmatprep.subr.bf16.mxu0 0
    %2529 = vmatpush1.bf16.msra.mxu0 %v2498
    %2530 = vmatprep.subr.bf16.mxu0 0
    %2531 = vmatpush2.bf16.msra.mxu0 0
    %2532 = vmatprep.subr.bf16.mxu0 0
    %2533 = vmatpush2.bf16.msra.mxu0 0
    %2534 = vmatprep.subr.bf16.mxu0 0
    %2535 = vmatpush2.bf16.msra.mxu0 0
    %2536 = vmatprep.subr.bf16.mxu0 0
    %2537 = vmatpush2.bf16.msra.mxu0 0
    %2538 = vmatprep.subr.bf16.mxu0 0
    %2539 = vmatpush2.bf16.msra.mxu0 0
    %2540 = vmatprep.subr.bf16.mxu0 0
    %2541 = vmatpush2.bf16.msra.mxu0 0
    %2542 = vmatprep.subr.bf16.mxu0 0
    %2543 = vmatpush2.bf16.msra.mxu0 0
    %2544 = vmatprep.subr.bf16.mxu0 0
    %2545 = vmatpush2.bf16.msra.mxu0 0
    %2546 = vmatprep.mubr.bf16.mxu0 0
    %2547 = vmatmul.mubr.bf16.gmra.mxu0 %v2379
    %v2548 = vpop.f32.mrf.mxu0
    %v2549 = vadd.f32 0.0, %v2548
    %v2550 = vpop.f32.mrf.mxu0
    %v2551 = vpop.f32.mrf.mxu0
    %v2552 = vadd.f32 0.0, %v2551
    %v2553 = vpop.f32.mrf.mxu0
    %2554 = vmatprep.mubr.bf16.mxu0 0
    %2555 = vmatmul.mubr.bf16.gmra.mxu0 %v2380
    %v2556 = vpop.f32.mrf.mxu0
    %v2557 = vadd.f32 0.0, %v2556
    %v2558 = vpop.f32.mrf.mxu0
    %v2559 = vpop.f32.mrf.mxu0
    %v2560 = vadd.f32 0.0, %v2559
    %v2561 = vpop.f32.mrf.mxu0
    %2562 = vdwg.mxu0
    %v2579 = vunpack.c.l.b16 %v2433
    %v2580 = vunpack.c.l.b16 %v2434
    %v2581 = vunpack.c.l.b16 %v2435
    %v2582 = vunpack.c.l.b16 %v2436
    %v2583 = vunpack.c.l.b16 %v2437
    %v2584 = vunpack.c.l.b16 %v2438
    %v2585 = vunpack.c.l.b16 %v2439
    %v2586 = vunpack.c.l.b16 %v2440
    %v2587 = vunpack.c.l.b16 %v2441
    %v2588 = vunpack.c.l.b16 %v2442
    %v2589 = vunpack.c.l.b16 %v2443
    %v2590 = vunpack.c.l.b16 %v2444
    %v2591 = vunpack.c.l.b16 %v2445
    %v2592 = vunpack.c.l.b16 %v2446
    %v2593 = vunpack.c.l.b16 %v2447
    %v2594 = vunpack.c.l.b16 %v2448
    %v2595 = vpack.c.b16 %v2580, %v2579
    %v2596 = vpack.c.b16 %v2582, %v2581
    %v2597 = vpack.c.b16 %v2584, %v2583
    %v2598 = vpack.c.b16 %v2586, %v2585
    %v2599 = vpack.c.b16 %v2588, %v2587
    %v2600 = vpack.c.b16 %v2590, %v2589
    %v2601 = vpack.c.b16 %v2592, %v2591
    %v2602 = vpack.c.b16 %v2594, %v2593
    %2611 = vmatprep.subr.bf16.mxu0 0
    %2612 = vmatpush1.bf16.msra.mxu0 %v2602
    %2613 = vmatprep.subr.bf16.mxu0 0
    %2614 = vmatpush1.bf16.msra.mxu0 %v2601
    %2615 = vmatprep.subr.bf16.mxu0 0
    %2616 = vmatpush1.bf16.msra.mxu0 %v2600
    %2617 = vmatprep.subr.bf16.mxu0 0
    %2618 = vmatpush1.bf16.msra.mxu0 %v2599
    %2619 = vmatprep.subr.bf16.mxu0 0
    %2620 = vmatpush1.bf16.msra.mxu0 %v2598
    %2621 = vmatprep.subr.bf16.mxu0 0
    %2622 = vmatpush1.bf16.msra.mxu0 %v2597
    %2623 = vmatprep.subr.bf16.mxu0 0
    %2624 = vmatpush1.bf16.msra.mxu0 %v2596
    %2625 = vmatprep.subr.bf16.mxu0 0
    %2626 = vmatpush1.bf16.msra.mxu0 %v2595
    %2627 = vmatprep.subr.bf16.mxu0 0
    %2628 = vmatpush2.bf16.msra.mxu0 0
    %2629 = vmatprep.subr.bf16.mxu0 0
    %2630 = vmatpush2.bf16.msra.mxu0 0
    %2631 = vmatprep.subr.bf16.mxu0 0
    %2632 = vmatpush2.bf16.msra.mxu0 0
    %2633 = vmatprep.subr.bf16.mxu0 0
    %2634 = vmatpush2.bf16.msra.mxu0 0
    %2635 = vmatprep.subr.bf16.mxu0 0
    %2636 = vmatpush2.bf16.msra.mxu0 0
    %2637 = vmatprep.subr.bf16.mxu0 0
    %2638 = vmatpush2.bf16.msra.mxu0 0
    %2639 = vmatprep.subr.bf16.mxu0 0
    %2640 = vmatpush2.bf16.msra.mxu0 0
    %2641 = vmatprep.subr.bf16.mxu0 0
    %2642 = vmatpush2.bf16.msra.mxu0 0
    %2643 = vmatprep.mubr.bf16.mxu0 0
    %2644 = vmatmul.mubr.bf16.gmra.mxu0 %v2430
    %v2645 = vpop.f32.mrf.mxu0
    %v2646 = vadd.f32 %v2549, %v2645
    %v2647 = vpop.f32.mrf.mxu0
    %v2648 = vpop.f32.mrf.mxu0
    %v2649 = vadd.f32 %v2552, %v2648
    %v2650 = vpop.f32.mrf.mxu0
    %2651 = vmatprep.mubr.bf16.mxu0 0
    %2652 = vmatmul.mubr.bf16.gmra.mxu0 %v2431
    %v2653 = vpop.f32.mrf.mxu0
    %v2654 = vadd.f32 %v2557, %v2653
    %v2655 = vpop.f32.mrf.mxu0
    %v2656 = vpop.f32.mrf.mxu0
    %v2657 = vadd.f32 %v2560, %v2656
    %v2658 = vpop.f32.mrf.mxu0
    %2659 = vdwg.mxu0
    %v2660 = vld [vmem:[#allocation9 + $0x8] sm:$0x1]
    %v2661 = vlaneseq
    %v2662 = vshrl.u32 %v2661, 7
    %v2663 = vsub.s32 0, %v2662
    %v2664 = vrot.slane %v2660, %v2663
    %v2665 = vadd.f32 %v2646, %v2664
    %v2666 = vadd.f32 %v2649, %v2664
    %v2667 = vadd.f32 %v2654, %v2664
    %v2668 = vadd.f32 %v2657, %v2664
    %v2669 = vmax.f32 %v2665, 0.0
    %v2670 = vmax.f32 %v2666, 0.0
    %v2671 = vmax.f32 %v2667, 0.0
    %v2672 = vmax.f32 %v2668, 0.0
    %v2673 = vpack.c.bf16 %v2670, %v2669
    %v2674 = vpack.c.bf16 %v2672, %v2671
    %2675 = vmatprep.subr.bf16.mxu0 0
    %2676 = vmatpush1.bf16.msra.mxu0 0
    %2677 = vmatprep.subr.bf16.mxu0 0
    %2678 = vmatpush1.bf16.msra.mxu0 0
    %2679 = vmatprep.subr.bf16.mxu0 0
    %2680 = vmatpush1.bf16.msra.mxu0 0
    %2681 = vmatprep.subr.bf16.mxu0 0
    %2682 = vmatpush1.bf16.msra.mxu0 0
    %2683 = vmatprep.subr.bf16.mxu0 0
    %2684 = vmatpush1.bf16.msra.mxu0 0
    %2685 = vmatprep.subr.bf16.mxu0 0
    %2686 = vmatpush1.bf16.msra.mxu0 0
    %2687 = vmatprep.subr.bf16.mxu0 0
    %2688 = vmatpush1.bf16.msra.mxu0 %v2674
    %2689 = vmatprep.subr.bf16.mxu0 0
    %2690 = vmatpush1.bf16.msra.mxu0 %v2673
    %2691 = vmatprep.subr.bf16.mxu0 0
    %2692 = vmatpush2.bf16.msra.mxu0 0
    %2693 = vmatprep.subr.bf16.mxu0 0
    %2694 = vmatpush2.bf16.msra.mxu0 0
    %2695 = vmatprep.subr.bf16.mxu0 0
    %2696 = vmatpush2.bf16.msra.mxu0 0
    %2697 = vmatprep.subr.bf16.mxu0 0
    %2698 = vmatpush2.bf16.msra.mxu0 0
    %2699 = vmatprep.subr.bf16.mxu0 0
    %2700 = vmatpush2.bf16.msra.mxu0 0
    %2701 = vmatprep.subr.bf16.mxu0 0
    %2702 = vmatpush2.bf16.msra.mxu0 0
    %2703 = vmatprep.subr.bf16.mxu0 0
    %2704 = vmatpush2.bf16.msra.mxu0 0
    %2705 = vmatprep.subr.bf16.mxu0 0
    %2706 = vmatpush2.bf16.msra.mxu0 0
    %2707 = vmatprep.mubr.bf16.mxu0 0
    %2708 = vmatmul.mubr.bf16.gmra.mxu0 %v115
    %v2709 = vpop.f32.mrf.mxu0
    %v2710 = vadd.f32 0.0, %v2709
    %v2711 = vpop.f32.mrf.mxu0
    %v2712 = vpop.f32.mrf.mxu0
    %v2713 = vadd.f32 0.0, %v2712
    %v2714 = vpop.f32.mrf.mxu0
    %2715 = vmatprep.mubr.bf16.mxu0 0
    %2716 = vmatmul.mubr.bf16.gmra.mxu0 %v118
    %v2717 = vpop.f32.mrf.mxu0
    %v2718 = vadd.f32 0.0, %v2717
    %v2719 = vpop.f32.mrf.mxu0
    %v2720 = vpop.f32.mrf.mxu0
    %v2721 = vadd.f32 0.0, %v2720
    %v2722 = vpop.f32.mrf.mxu0
    %2723 = vdwg.mxu0
    %v2724 = vpack.c.bf16 %v2713, %v2710
    %v2725 = vpack.c.bf16 %v2721, %v2718
    %s2726 = scalar_lea.vmem [#allocation7], 1152
    %v2727 = vld [vmem:[%s2726] sm:$0xf]
    %v2728 = vld [vmem:[%s2726 + $0x4] sm:$0xf]
    %v2729 = vld [vmem:[%s2726 + $0x8] sm:$0xf]
    %v2730 = vld [vmem:[%s2726 + $0xc] sm:$0xf]
    %v2731 = vld [vmem:[%s2726 + $0x10] sm:$0xf]
    %v2732 = vld [vmem:[%s2726 + $0x14] sm:$0xf]
    %v2733 = vld [vmem:[%s2726 + $0x18] sm:$0xf]
    %v2734 = vld [vmem:[%s2726 + $0x1c] sm:$0xf]
    %v2735 = vld [vmem:[%s2726 + $0x20] sm:$0xf]
    %v2736 = vld [vmem:[%s2726 + $0x24] sm:$0xf]
    %v2737 = vld [vmem:[%s2726 + $0x28] sm:$0xf]
    %v2738 = vld [vmem:[%s2726 + $0x2c] sm:$0xf]
    %v2739 = vld [vmem:[%s2726 + $0x30] sm:$0xf]
    %v2740 = vld [vmem:[%s2726 + $0x34] sm:$0xf]
    %v2741 = vld [vmem:[%s2726 + $0x38] sm:$0xf]
    %v2742 = vld [vmem:[%s2726 + $0x3c] sm:$0xf]
    %s2743 = scalar_lea.vmem [#allocation7], 1216
    %v2744 = vld [vmem:[%s2743] sm:$0xf]
    %v2745 = vld [vmem:[%s2743 + $0x4] sm:$0xf]
    %v2746 = vld [vmem:[%s2743 + $0x8] sm:$0xf]
    %v2747 = vld [vmem:[%s2743 + $0xc] sm:$0xf]
    %v2748 = vld [vmem:[%s2743 + $0x10] sm:$0xf]
    %v2749 = vld [vmem:[%s2743 + $0x14] sm:$0xf]
    %v2750 = vld [vmem:[%s2743 + $0x18] sm:$0xf]
    %v2751 = vld [vmem:[%s2743 + $0x1c] sm:$0xf]
    %v2752 = vld [vmem:[%s2743 + $0x20] sm:$0xf]
    %v2753 = vld [vmem:[%s2743 + $0x24] sm:$0xf]
    %v2754 = vld [vmem:[%s2743 + $0x28] sm:$0xf]
    %v2755 = vld [vmem:[%s2743 + $0x2c] sm:$0xf]
    %v2756 = vld [vmem:[%s2743 + $0x30] sm:$0xf]
    %v2757 = vld [vmem:[%s2743 + $0x34] sm:$0xf]
    %v2758 = vld [vmem:[%s2743 + $0x38] sm:$0xf]
    %v2759 = vld [vmem:[%s2743 + $0x3c] sm:$0xf]
    %v2776 = vunpack.c.l.b16 %v2744
    %v2777 = vunpack.c.l.b16 %v2745
    %v2778 = vunpack.c.l.b16 %v2746
    %v2779 = vunpack.c.l.b16 %v2747
    %v2780 = vunpack.c.l.b16 %v2748
    %v2781 = vunpack.c.l.b16 %v2749
    %v2782 = vunpack.c.l.b16 %v2750
    %v2783 = vunpack.c.l.b16 %v2751
    %v2784 = vunpack.c.l.b16 %v2752
    %v2785 = vunpack.c.l.b16 %v2753
    %v2786 = vunpack.c.l.b16 %v2754
    %v2787 = vunpack.c.l.b16 %v2755
    %v2788 = vunpack.c.l.b16 %v2756
    %v2789 = vunpack.c.l.b16 %v2757
    %v2790 = vunpack.c.l.b16 %v2758
    %v2791 = vunpack.c.l.b16 %v2759
    %v2792 = vpack.c.b16 %v2777, %v2776
    %v2793 = vpack.c.b16 %v2779, %v2778
    %v2794 = vpack.c.b16 %v2781, %v2780
    %v2795 = vpack.c.b16 %v2783, %v2782
    %v2796 = vpack.c.b16 %v2785, %v2784
    %v2797 = vpack.c.b16 %v2787, %v2786
    %v2798 = vpack.c.b16 %v2789, %v2788
    %v2799 = vpack.c.b16 %v2791, %v2790
    %2808 = vmatprep.subr.bf16.mxu0 0
    %2809 = vmatpush1.bf16.msra.mxu0 %v2799
    %2810 = vmatprep.subr.bf16.mxu0 0
    %2811 = vmatpush1.bf16.msra.mxu0 %v2798
    %2812 = vmatprep.subr.bf16.mxu0 0
    %2813 = vmatpush1.bf16.msra.mxu0 %v2797
    %2814 = vmatprep.subr.bf16.mxu0 0
    %2815 = vmatpush1.bf16.msra.mxu0 %v2796
    %2816 = vmatprep.subr.bf16.mxu0 0
    %2817 = vmatpush1.bf16.msra.mxu0 %v2795
    %2818 = vmatprep.subr.bf16.mxu0 0
    %2819 = vmatpush1.bf16.msra.mxu0 %v2794
    %2820 = vmatprep.subr.bf16.mxu0 0
    %2821 = vmatpush1.bf16.msra.mxu0 %v2793
    %2822 = vmatprep.subr.bf16.mxu0 0
    %2823 = vmatpush1.bf16.msra.mxu0 %v2792
    %2824 = vmatprep.subr.bf16.mxu0 0
    %2825 = vmatpush2.bf16.msra.mxu0 0
    %2826 = vmatprep.subr.bf16.mxu0 0
    %2827 = vmatpush2.bf16.msra.mxu0 0
    %2828 = vmatprep.subr.bf16.mxu0 0
    %2829 = vmatpush2.bf16.msra.mxu0 0
    %2830 = vmatprep.subr.bf16.mxu0 0
    %2831 = vmatpush2.bf16.msra.mxu0 0
    %2832 = vmatprep.subr.bf16.mxu0 0
    %2833 = vmatpush2.bf16.msra.mxu0 0
    %2834 = vmatprep.subr.bf16.mxu0 0
    %2835 = vmatpush2.bf16.msra.mxu0 0
    %2836 = vmatprep.subr.bf16.mxu0 0
    %2837 = vmatpush2.bf16.msra.mxu0 0
    %2838 = vmatprep.subr.bf16.mxu0 0
    %2839 = vmatpush2.bf16.msra.mxu0 0
    %2840 = vmatprep.mubr.bf16.mxu0 0
    %2841 = vmatmul.mubr.bf16.gmra.mxu0 %v2673
    %v2842 = vpop.f32.mrf.mxu0
    %v2843 = vadd.f32 0.0, %v2842
    %v2844 = vpop.f32.mrf.mxu0
    %v2845 = vpop.f32.mrf.mxu0
    %v2846 = vadd.f32 0.0, %v2845
    %v2847 = vpop.f32.mrf.mxu0
    %2848 = vmatprep.mubr.bf16.mxu0 0
    %2849 = vmatmul.mubr.bf16.gmra.mxu0 %v2674
    %v2850 = vpop.f32.mrf.mxu0
    %v2851 = vadd.f32 0.0, %v2850
    %v2852 = vpop.f32.mrf.mxu0
    %v2853 = vpop.f32.mrf.mxu0
    %v2854 = vadd.f32 0.0, %v2853
    %v2855 = vpop.f32.mrf.mxu0
    %2856 = vdwg.mxu0
    %v2873 = vunpack.c.l.b16 %v2727
    %v2874 = vunpack.c.l.b16 %v2728
    %v2875 = vunpack.c.l.b16 %v2729
    %v2876 = vunpack.c.l.b16 %v2730
    %v2877 = vunpack.c.l.b16 %v2731
    %v2878 = vunpack.c.l.b16 %v2732
    %v2879 = vunpack.c.l.b16 %v2733
    %v2880 = vunpack.c.l.b16 %v2734
    %v2881 = vunpack.c.l.b16 %v2735
    %v2882 = vunpack.c.l.b16 %v2736
    %v2883 = vunpack.c.l.b16 %v2737
    %v2884 = vunpack.c.l.b16 %v2738
    %v2885 = vunpack.c.l.b16 %v2739
    %v2886 = vunpack.c.l.b16 %v2740
    %v2887 = vunpack.c.l.b16 %v2741
    %v2888 = vunpack.c.l.b16 %v2742
    %v2889 = vpack.c.b16 %v2874, %v2873
    %v2890 = vpack.c.b16 %v2876, %v2875
    %v2891 = vpack.c.b16 %v2878, %v2877
    %v2892 = vpack.c.b16 %v2880, %v2879
    %v2893 = vpack.c.b16 %v2882, %v2881
    %v2894 = vpack.c.b16 %v2884, %v2883
    %v2895 = vpack.c.b16 %v2886, %v2885
    %v2896 = vpack.c.b16 %v2888, %v2887
    %2905 = vmatprep.subr.bf16.mxu0 0
    %2906 = vmatpush1.bf16.msra.mxu0 %v2896
    %2907 = vmatprep.subr.bf16.mxu0 0
    %2908 = vmatpush1.bf16.msra.mxu0 %v2895
    %2909 = vmatprep.subr.bf16.mxu0 0
    %2910 = vmatpush1.bf16.msra.mxu0 %v2894
    %2911 = vmatprep.subr.bf16.mxu0 0
    %2912 = vmatpush1.bf16.msra.mxu0 %v2893
    %2913 = vmatprep.subr.bf16.mxu0 0
    %2914 = vmatpush1.bf16.msra.mxu0 %v2892
    %2915 = vmatprep.subr.bf16.mxu0 0
    %2916 = vmatpush1.bf16.msra.mxu0 %v2891
    %2917 = vmatprep.subr.bf16.mxu0 0
    %2918 = vmatpush1.bf16.msra.mxu0 %v2890
    %2919 = vmatprep.subr.bf16.mxu0 0
    %2920 = vmatpush1.bf16.msra.mxu0 %v2889
    %2921 = vmatprep.subr.bf16.mxu0 0
    %2922 = vmatpush2.bf16.msra.mxu0 0
    %2923 = vmatprep.subr.bf16.mxu0 0
    %2924 = vmatpush2.bf16.msra.mxu0 0
    %2925 = vmatprep.subr.bf16.mxu0 0
    %2926 = vmatpush2.bf16.msra.mxu0 0
    %2927 = vmatprep.subr.bf16.mxu0 0
    %2928 = vmatpush2.bf16.msra.mxu0 0
    %2929 = vmatprep.subr.bf16.mxu0 0
    %2930 = vmatpush2.bf16.msra.mxu0 0
    %2931 = vmatprep.subr.bf16.mxu0 0
    %2932 = vmatpush2.bf16.msra.mxu0 0
    %2933 = vmatprep.subr.bf16.mxu0 0
    %2934 = vmatpush2.bf16.msra.mxu0 0
    %2935 = vmatprep.subr.bf16.mxu0 0
    %2936 = vmatpush2.bf16.msra.mxu0 0
    %2937 = vmatprep.mubr.bf16.mxu0 0
    %2938 = vmatmul.mubr.bf16.gmra.mxu0 %v2724
    %v2939 = vpop.f32.mrf.mxu0
    %v2940 = vadd.f32 %v2843, %v2939
    %v2941 = vpop.f32.mrf.mxu0
    %v2942 = vpop.f32.mrf.mxu0
    %v2943 = vadd.f32 %v2846, %v2942
    %v2944 = vpop.f32.mrf.mxu0
    %2945 = vmatprep.mubr.bf16.mxu0 0
    %2946 = vmatmul.mubr.bf16.gmra.mxu0 %v2725
    %v2947 = vpop.f32.mrf.mxu0
    %v2948 = vadd.f32 %v2851, %v2947
    %v2949 = vpop.f32.mrf.mxu0
    %v2950 = vpop.f32.mrf.mxu0
    %v2951 = vadd.f32 %v2854, %v2950
    %v2952 = vpop.f32.mrf.mxu0
    %2953 = vdwg.mxu0
    %v2954 = vld [vmem:[#allocation9 + $0x9] sm:$0x1]
    %v2955 = vlaneseq
    %v2956 = vshrl.u32 %v2955, 7
    %v2957 = vsub.s32 0, %v2956
    %v2958 = vrot.slane %v2954, %v2957
    %v2959 = vadd.f32 %v2940, %v2958
    %v2960 = vadd.f32 %v2943, %v2958
    %v2961 = vadd.f32 %v2948, %v2958
    %v2962 = vadd.f32 %v2951, %v2958
    %v2963 = vadd.f32 %v2959, %v2375
    %v2964 = vadd.f32 %v2960, %v2376
    %v2965 = vadd.f32 %v2961, %v2377
    %v2966 = vadd.f32 %v2962, %v2378
    %v2967 = vmax.f32 %v2963, 0.0
    %v2968 = vmax.f32 %v2964, 0.0
    %v2969 = vmax.f32 %v2965, 0.0
    %v2970 = vmax.f32 %v2966, 0.0
    %v2971 = vpack.c.bf16 %v2968, %v2967
    %v2972 = vpack.c.bf16 %v2970, %v2969
    %2973 = vmatprep.subr.bf16.mxu0 0
    %2974 = vmatpush1.bf16.msra.mxu0 0
    %2975 = vmatprep.subr.bf16.mxu0 0
    %2976 = vmatpush1.bf16.msra.mxu0 0
    %2977 = vmatprep.subr.bf16.mxu0 0
    %2978 = vmatpush1.bf16.msra.mxu0 0
    %2979 = vmatprep.subr.bf16.mxu0 0
    %2980 = vmatpush1.bf16.msra.mxu0 0
    %2981 = vmatprep.subr.bf16.mxu0 0
    %2982 = vmatpush1.bf16.msra.mxu0 0
    %2983 = vmatprep.subr.bf16.mxu0 0
    %2984 = vmatpush1.bf16.msra.mxu0 0
    %2985 = vmatprep.subr.bf16.mxu0 0
    %2986 = vmatpush1.bf16.msra.mxu0 %v2972
    %2987 = vmatprep.subr.bf16.mxu0 0
    %2988 = vmatpush1.bf16.msra.mxu0 %v2971
    %2989 = vmatprep.subr.bf16.mxu0 0
    %2990 = vmatpush2.bf16.msra.mxu0 0
    %2991 = vmatprep.subr.bf16.mxu0 0
    %2992 = vmatpush2.bf16.msra.mxu0 0
    %2993 = vmatprep.subr.bf16.mxu0 0
    %2994 = vmatpush2.bf16.msra.mxu0 0
    %2995 = vmatprep.subr.bf16.mxu0 0
    %2996 = vmatpush2.bf16.msra.mxu0 0
    %2997 = vmatprep.subr.bf16.mxu0 0
    %2998 = vmatpush2.bf16.msra.mxu0 0
    %2999 = vmatprep.subr.bf16.mxu0 0
    %3000 = vmatpush2.bf16.msra.mxu0 0
    %3001 = vmatprep.subr.bf16.mxu0 0
    %3002 = vmatpush2.bf16.msra.mxu0 0
    %3003 = vmatprep.subr.bf16.mxu0 0
    %3004 = vmatpush2.bf16.msra.mxu0 0
    %3005 = vmatprep.mubr.bf16.mxu0 0
    %3006 = vmatmul.mubr.bf16.gmra.mxu0 %v115
    %v3007 = vpop.f32.mrf.mxu0
    %v3008 = vadd.f32 0.0, %v3007
    %v3009 = vpop.f32.mrf.mxu0
    %v3010 = vpop.f32.mrf.mxu0
    %v3011 = vadd.f32 0.0, %v3010
    %v3012 = vpop.f32.mrf.mxu0
    %3013 = vmatprep.mubr.bf16.mxu0 0
    %3014 = vmatmul.mubr.bf16.gmra.mxu0 %v118
    %v3015 = vpop.f32.mrf.mxu0
    %v3016 = vadd.f32 0.0, %v3015
    %v3017 = vpop.f32.mrf.mxu0
    %v3018 = vpop.f32.mrf.mxu0
    %v3019 = vadd.f32 0.0, %v3018
    %v3020 = vpop.f32.mrf.mxu0
    %3021 = vdwg.mxu0
    %v3022 = vpack.c.bf16 %v3011, %v3008
    %v3023 = vpack.c.bf16 %v3019, %v3016
    %s3024 = scalar_lea.vmem [#allocation7], 1280
    %v3025 = vld [vmem:[%s3024] sm:$0xf]
    %v3026 = vld [vmem:[%s3024 + $0x4] sm:$0xf]
    %v3027 = vld [vmem:[%s3024 + $0x8] sm:$0xf]
    %v3028 = vld [vmem:[%s3024 + $0xc] sm:$0xf]
    %v3029 = vld [vmem:[%s3024 + $0x10] sm:$0xf]
    %v3030 = vld [vmem:[%s3024 + $0x14] sm:$0xf]
    %v3031 = vld [vmem:[%s3024 + $0x18] sm:$0xf]
    %v3032 = vld [vmem:[%s3024 + $0x1c] sm:$0xf]
    %v3033 = vld [vmem:[%s3024 + $0x20] sm:$0xf]
    %v3034 = vld [vmem:[%s3024 + $0x24] sm:$0xf]
    %v3035 = vld [vmem:[%s3024 + $0x28] sm:$0xf]
    %v3036 = vld [vmem:[%s3024 + $0x2c] sm:$0xf]
    %v3037 = vld [vmem:[%s3024 + $0x30] sm:$0xf]
    %v3038 = vld [vmem:[%s3024 + $0x34] sm:$0xf]
    %v3039 = vld [vmem:[%s3024 + $0x38] sm:$0xf]
    %v3040 = vld [vmem:[%s3024 + $0x3c] sm:$0xf]
    %s3041 = scalar_lea.vmem [#allocation7], 1344
    %v3042 = vld [vmem:[%s3041] sm:$0xf]
    %v3043 = vld [vmem:[%s3041 + $0x4] sm:$0xf]
    %v3044 = vld [vmem:[%s3041 + $0x8] sm:$0xf]
    %v3045 = vld [vmem:[%s3041 + $0xc] sm:$0xf]
    %v3046 = vld [vmem:[%s3041 + $0x10] sm:$0xf]
    %v3047 = vld [vmem:[%s3041 + $0x14] sm:$0xf]
    %v3048 = vld [vmem:[%s3041 + $0x18] sm:$0xf]
    %v3049 = vld [vmem:[%s3041 + $0x1c] sm:$0xf]
    %v3050 = vld [vmem:[%s3041 + $0x20] sm:$0xf]
    %v3051 = vld [vmem:[%s3041 + $0x24] sm:$0xf]
    %v3052 = vld [vmem:[%s3041 + $0x28] sm:$0xf]
    %v3053 = vld [vmem:[%s3041 + $0x2c] sm:$0xf]
    %v3054 = vld [vmem:[%s3041 + $0x30] sm:$0xf]
    %v3055 = vld [vmem:[%s3041 + $0x34] sm:$0xf]
    %v3056 = vld [vmem:[%s3041 + $0x38] sm:$0xf]
    %v3057 = vld [vmem:[%s3041 + $0x3c] sm:$0xf]
    %v3074 = vunpack.c.l.b16 %v3042
    %v3075 = vunpack.c.l.b16 %v3043
    %v3076 = vunpack.c.l.b16 %v3044
    %v3077 = vunpack.c.l.b16 %v3045
    %v3078 = vunpack.c.l.b16 %v3046
    %v3079 = vunpack.c.l.b16 %v3047
    %v3080 = vunpack.c.l.b16 %v3048
    %v3081 = vunpack.c.l.b16 %v3049
    %v3082 = vunpack.c.l.b16 %v3050
    %v3083 = vunpack.c.l.b16 %v3051
    %v3084 = vunpack.c.l.b16 %v3052
    %v3085 = vunpack.c.l.b16 %v3053
    %v3086 = vunpack.c.l.b16 %v3054
    %v3087 = vunpack.c.l.b16 %v3055
    %v3088 = vunpack.c.l.b16 %v3056
    %v3089 = vunpack.c.l.b16 %v3057
    %v3090 = vpack.c.b16 %v3075, %v3074
    %v3091 = vpack.c.b16 %v3077, %v3076
    %v3092 = vpack.c.b16 %v3079, %v3078
    %v3093 = vpack.c.b16 %v3081, %v3080
    %v3094 = vpack.c.b16 %v3083, %v3082
    %v3095 = vpack.c.b16 %v3085, %v3084
    %v3096 = vpack.c.b16 %v3087, %v3086
    %v3097 = vpack.c.b16 %v3089, %v3088
    %3106 = vmatprep.subr.bf16.mxu0 0
    %3107 = vmatpush1.bf16.msra.mxu0 %v3097
    %3108 = vmatprep.subr.bf16.mxu0 0
    %3109 = vmatpush1.bf16.msra.mxu0 %v3096
    %3110 = vmatprep.subr.bf16.mxu0 0
    %3111 = vmatpush1.bf16.msra.mxu0 %v3095
    %3112 = vmatprep.subr.bf16.mxu0 0
    %3113 = vmatpush1.bf16.msra.mxu0 %v3094
    %3114 = vmatprep.subr.bf16.mxu0 0
    %3115 = vmatpush1.bf16.msra.mxu0 %v3093
    %3116 = vmatprep.subr.bf16.mxu0 0
    %3117 = vmatpush1.bf16.msra.mxu0 %v3092
    %3118 = vmatprep.subr.bf16.mxu0 0
    %3119 = vmatpush1.bf16.msra.mxu0 %v3091
    %3120 = vmatprep.subr.bf16.mxu0 0
    %3121 = vmatpush1.bf16.msra.mxu0 %v3090
    %3122 = vmatprep.subr.bf16.mxu0 0
    %3123 = vmatpush2.bf16.msra.mxu0 0
    %3124 = vmatprep.subr.bf16.mxu0 0
    %3125 = vmatpush2.bf16.msra.mxu0 0
    %3126 = vmatprep.subr.bf16.mxu0 0
    %3127 = vmatpush2.bf16.msra.mxu0 0
    %3128 = vmatprep.subr.bf16.mxu0 0
    %3129 = vmatpush2.bf16.msra.mxu0 0
    %3130 = vmatprep.subr.bf16.mxu0 0
    %3131 = vmatpush2.bf16.msra.mxu0 0
    %3132 = vmatprep.subr.bf16.mxu0 0
    %3133 = vmatpush2.bf16.msra.mxu0 0
    %3134 = vmatprep.subr.bf16.mxu0 0
    %3135 = vmatpush2.bf16.msra.mxu0 0
    %3136 = vmatprep.subr.bf16.mxu0 0
    %3137 = vmatpush2.bf16.msra.mxu0 0
    %3138 = vmatprep.mubr.bf16.mxu0 0
    %3139 = vmatmul.mubr.bf16.gmra.mxu0 %v2971
    %v3140 = vpop.f32.mrf.mxu0
    %v3141 = vadd.f32 0.0, %v3140
    %v3142 = vpop.f32.mrf.mxu0
    %v3143 = vpop.f32.mrf.mxu0
    %v3144 = vadd.f32 0.0, %v3143
    %v3145 = vpop.f32.mrf.mxu0
    %3146 = vmatprep.mubr.bf16.mxu0 0
    %3147 = vmatmul.mubr.bf16.gmra.mxu0 %v2972
    %v3148 = vpop.f32.mrf.mxu0
    %v3149 = vadd.f32 0.0, %v3148
    %v3150 = vpop.f32.mrf.mxu0
    %v3151 = vpop.f32.mrf.mxu0
    %v3152 = vadd.f32 0.0, %v3151
    %v3153 = vpop.f32.mrf.mxu0
    %3154 = vdwg.mxu0
    %v3171 = vunpack.c.l.b16 %v3025
    %v3172 = vunpack.c.l.b16 %v3026
    %v3173 = vunpack.c.l.b16 %v3027
    %v3174 = vunpack.c.l.b16 %v3028
    %v3175 = vunpack.c.l.b16 %v3029
    %v3176 = vunpack.c.l.b16 %v3030
    %v3177 = vunpack.c.l.b16 %v3031
    %v3178 = vunpack.c.l.b16 %v3032
    %v3179 = vunpack.c.l.b16 %v3033
    %v3180 = vunpack.c.l.b16 %v3034
    %v3181 = vunpack.c.l.b16 %v3035
    %v3182 = vunpack.c.l.b16 %v3036
    %v3183 = vunpack.c.l.b16 %v3037
    %v3184 = vunpack.c.l.b16 %v3038
    %v3185 = vunpack.c.l.b16 %v3039
    %v3186 = vunpack.c.l.b16 %v3040
    %v3187 = vpack.c.b16 %v3172, %v3171
    %v3188 = vpack.c.b16 %v3174, %v3173
    %v3189 = vpack.c.b16 %v3176, %v3175
    %v3190 = vpack.c.b16 %v3178, %v3177
    %v3191 = vpack.c.b16 %v3180, %v3179
    %v3192 = vpack.c.b16 %v3182, %v3181
    %v3193 = vpack.c.b16 %v3184, %v3183
    %v3194 = vpack.c.b16 %v3186, %v3185
    %3203 = vmatprep.subr.bf16.mxu0 0
    %3204 = vmatpush1.bf16.msra.mxu0 %v3194
    %3205 = vmatprep.subr.bf16.mxu0 0
    %3206 = vmatpush1.bf16.msra.mxu0 %v3193
    %3207 = vmatprep.subr.bf16.mxu0 0
    %3208 = vmatpush1.bf16.msra.mxu0 %v3192
    %3209 = vmatprep.subr.bf16.mxu0 0
    %3210 = vmatpush1.bf16.msra.mxu0 %v3191
    %3211 = vmatprep.subr.bf16.mxu0 0
    %3212 = vmatpush1.bf16.msra.mxu0 %v3190
    %3213 = vmatprep.subr.bf16.mxu0 0
    %3214 = vmatpush1.bf16.msra.mxu0 %v3189
    %3215 = vmatprep.subr.bf16.mxu0 0
    %3216 = vmatpush1.bf16.msra.mxu0 %v3188
    %3217 = vmatprep.subr.bf16.mxu0 0
    %3218 = vmatpush1.bf16.msra.mxu0 %v3187
    %3219 = vmatprep.subr.bf16.mxu0 0
    %3220 = vmatpush2.bf16.msra.mxu0 0
    %3221 = vmatprep.subr.bf16.mxu0 0
    %3222 = vmatpush2.bf16.msra.mxu0 0
    %3223 = vmatprep.subr.bf16.mxu0 0
    %3224 = vmatpush2.bf16.msra.mxu0 0
    %3225 = vmatprep.subr.bf16.mxu0 0
    %3226 = vmatpush2.bf16.msra.mxu0 0
    %3227 = vmatprep.subr.bf16.mxu0 0
    %3228 = vmatpush2.bf16.msra.mxu0 0
    %3229 = vmatprep.subr.bf16.mxu0 0
    %3230 = vmatpush2.bf16.msra.mxu0 0
    %3231 = vmatprep.subr.bf16.mxu0 0
    %3232 = vmatpush2.bf16.msra.mxu0 0
    %3233 = vmatprep.subr.bf16.mxu0 0
    %3234 = vmatpush2.bf16.msra.mxu0 0
    %3235 = vmatprep.mubr.bf16.mxu0 0
    %3236 = vmatmul.mubr.bf16.gmra.mxu0 %v3022
    %v3237 = vpop.f32.mrf.mxu0
    %v3238 = vadd.f32 %v3141, %v3237
    %v3239 = vpop.f32.mrf.mxu0
    %v3240 = vpop.f32.mrf.mxu0
    %v3241 = vadd.f32 %v3144, %v3240
    %v3242 = vpop.f32.mrf.mxu0
    %3243 = vmatprep.mubr.bf16.mxu0 0
    %3244 = vmatmul.mubr.bf16.gmra.mxu0 %v3023
    %v3245 = vpop.f32.mrf.mxu0
    %v3246 = vadd.f32 %v3149, %v3245
    %v3247 = vpop.f32.mrf.mxu0
    %v3248 = vpop.f32.mrf.mxu0
    %v3249 = vadd.f32 %v3152, %v3248
    %v3250 = vpop.f32.mrf.mxu0
    %3251 = vdwg.mxu0
    %v3252 = vld [vmem:[#allocation9 + $0xa] sm:$0x1]
    %v3253 = vlaneseq
    %v3254 = vshrl.u32 %v3253, 7
    %v3255 = vsub.s32 0, %v3254
    %v3256 = vrot.slane %v3252, %v3255
    %v3257 = vadd.f32 %v3238, %v3256
    %v3258 = vadd.f32 %v3241, %v3256
    %v3259 = vadd.f32 %v3246, %v3256
    %v3260 = vadd.f32 %v3249, %v3256
    %v3261 = vmax.f32 %v3257, 0.0
    %v3262 = vmax.f32 %v3258, 0.0
    %v3263 = vmax.f32 %v3259, 0.0
    %v3264 = vmax.f32 %v3260, 0.0
    %s3265 = scalar_lea.vmem [#allocation7], 1536
    %v3266 = vld [vmem:[%s3265] sm:$0xf]
    %v3267 = vld [vmem:[%s3265 + $0x4] sm:$0xf]
    %v3268 = vld [vmem:[%s3265 + $0x8] sm:$0xf]
    %v3269 = vld [vmem:[%s3265 + $0xc] sm:$0xf]
    %v3270 = vld [vmem:[%s3265 + $0x10] sm:$0xf]
    %v3271 = vld [vmem:[%s3265 + $0x14] sm:$0xf]
    %v3272 = vld [vmem:[%s3265 + $0x18] sm:$0xf]
    %v3273 = vld [vmem:[%s3265 + $0x1c] sm:$0xf]
    %v3274 = vld [vmem:[%s3265 + $0x20] sm:$0xf]
    %v3275 = vld [vmem:[%s3265 + $0x24] sm:$0xf]
    %v3276 = vld [vmem:[%s3265 + $0x28] sm:$0xf]
    %v3277 = vld [vmem:[%s3265 + $0x2c] sm:$0xf]
    %v3278 = vld [vmem:[%s3265 + $0x30] sm:$0xf]
    %v3279 = vld [vmem:[%s3265 + $0x34] sm:$0xf]
    %v3280 = vld [vmem:[%s3265 + $0x38] sm:$0xf]
    %v3281 = vld [vmem:[%s3265 + $0x3c] sm:$0xf]
    %s3282 = scalar_lea.vmem [#allocation7], 1600
    %v3283 = vld [vmem:[%s3282] sm:$0xf]
    %v3284 = vld [vmem:[%s3282 + $0x4] sm:$0xf]
    %v3285 = vld [vmem:[%s3282 + $0x8] sm:$0xf]
    %v3286 = vld [vmem:[%s3282 + $0xc] sm:$0xf]
    %v3287 = vld [vmem:[%s3282 + $0x10] sm:$0xf]
    %v3288 = vld [vmem:[%s3282 + $0x14] sm:$0xf]
    %v3289 = vld [vmem:[%s3282 + $0x18] sm:$0xf]
    %v3290 = vld [vmem:[%s3282 + $0x1c] sm:$0xf]
    %v3291 = vld [vmem:[%s3282 + $0x20] sm:$0xf]
    %v3292 = vld [vmem:[%s3282 + $0x24] sm:$0xf]
    %v3293 = vld [vmem:[%s3282 + $0x28] sm:$0xf]
    %v3294 = vld [vmem:[%s3282 + $0x2c] sm:$0xf]
    %v3295 = vld [vmem:[%s3282 + $0x30] sm:$0xf]
    %v3296 = vld [vmem:[%s3282 + $0x34] sm:$0xf]
    %v3297 = vld [vmem:[%s3282 + $0x38] sm:$0xf]
    %v3298 = vld [vmem:[%s3282 + $0x3c] sm:$0xf]
    %v3315 = vunpack.c.l.b16 %v3283
    %v3316 = vunpack.c.l.b16 %v3284
    %v3317 = vunpack.c.l.b16 %v3285
    %v3318 = vunpack.c.l.b16 %v3286
    %v3319 = vunpack.c.l.b16 %v3287
    %v3320 = vunpack.c.l.b16 %v3288
    %v3321 = vunpack.c.l.b16 %v3289
    %v3322 = vunpack.c.l.b16 %v3290
    %v3323 = vunpack.c.l.b16 %v3291
    %v3324 = vunpack.c.l.b16 %v3292
    %v3325 = vunpack.c.l.b16 %v3293
    %v3326 = vunpack.c.l.b16 %v3294
    %v3327 = vunpack.c.l.b16 %v3295
    %v3328 = vunpack.c.l.b16 %v3296
    %v3329 = vunpack.c.l.b16 %v3297
    %v3330 = vunpack.c.l.b16 %v3298
    %v3331 = vpack.c.b16 %v3316, %v3315
    %v3332 = vpack.c.b16 %v3318, %v3317
    %v3333 = vpack.c.b16 %v3320, %v3319
    %v3334 = vpack.c.b16 %v3322, %v3321
    %v3335 = vpack.c.b16 %v3324, %v3323
    %v3336 = vpack.c.b16 %v3326, %v3325
    %v3337 = vpack.c.b16 %v3328, %v3327
    %v3338 = vpack.c.b16 %v3330, %v3329
    %3347 = vmatprep.subr.bf16.mxu0 0
    %3348 = vmatpush1.bf16.msra.mxu0 %v3338
    %3349 = vmatprep.subr.bf16.mxu0 0
    %3350 = vmatpush1.bf16.msra.mxu0 %v3337
    %3351 = vmatprep.subr.bf16.mxu0 0
    %3352 = vmatpush1.bf16.msra.mxu0 %v3336
    %3353 = vmatprep.subr.bf16.mxu0 0
    %3354 = vmatpush1.bf16.msra.mxu0 %v3335
    %3355 = vmatprep.subr.bf16.mxu0 0
    %3356 = vmatpush1.bf16.msra.mxu0 %v3334
    %3357 = vmatprep.subr.bf16.mxu0 0
    %3358 = vmatpush1.bf16.msra.mxu0 %v3333
    %3359 = vmatprep.subr.bf16.mxu0 0
    %3360 = vmatpush1.bf16.msra.mxu0 %v3332
    %3361 = vmatprep.subr.bf16.mxu0 0
    %3362 = vmatpush1.bf16.msra.mxu0 %v3331
    %3363 = vmatprep.subr.bf16.mxu0 0
    %3364 = vmatpush2.bf16.msra.mxu0 0
    %3365 = vmatprep.subr.bf16.mxu0 0
    %3366 = vmatpush2.bf16.msra.mxu0 0
    %3367 = vmatprep.subr.bf16.mxu0 0
    %3368 = vmatpush2.bf16.msra.mxu0 0
    %3369 = vmatprep.subr.bf16.mxu0 0
    %3370 = vmatpush2.bf16.msra.mxu0 0
    %3371 = vmatprep.subr.bf16.mxu0 0
    %3372 = vmatpush2.bf16.msra.mxu0 0
    %3373 = vmatprep.subr.bf16.mxu0 0
    %3374 = vmatpush2.bf16.msra.mxu0 0
    %3375 = vmatprep.subr.bf16.mxu0 0
    %3376 = vmatpush2.bf16.msra.mxu0 0
    %3377 = vmatprep.subr.bf16.mxu0 0
    %3378 = vmatpush2.bf16.msra.mxu0 0
    %3379 = vmatprep.mubr.bf16.mxu0 0
    %3380 = vmatmul.mubr.bf16.gmra.mxu0 %v2971
    %v3381 = vpop.f32.mrf.mxu0
    %v3382 = vadd.f32 0.0, %v3381
    %v3383 = vpop.f32.mrf.mxu0
    %v3384 = vpop.f32.mrf.mxu0
    %v3385 = vadd.f32 0.0, %v3384
    %v3386 = vpop.f32.mrf.mxu0
    %3387 = vmatprep.mubr.bf16.mxu0 0
    %3388 = vmatmul.mubr.bf16.gmra.mxu0 %v2972
    %v3389 = vpop.f32.mrf.mxu0
    %v3390 = vadd.f32 0.0, %v3389
    %v3391 = vpop.f32.mrf.mxu0
    %v3392 = vpop.f32.mrf.mxu0
    %v3393 = vadd.f32 0.0, %v3392
    %v3394 = vpop.f32.mrf.mxu0
    %3395 = vdwg.mxu0
    %v3412 = vunpack.c.l.b16 %v3266
    %v3413 = vunpack.c.l.b16 %v3267
    %v3414 = vunpack.c.l.b16 %v3268
    %v3415 = vunpack.c.l.b16 %v3269
    %v3416 = vunpack.c.l.b16 %v3270
    %v3417 = vunpack.c.l.b16 %v3271
    %v3418 = vunpack.c.l.b16 %v3272
    %v3419 = vunpack.c.l.b16 %v3273
    %v3420 = vunpack.c.l.b16 %v3274
    %v3421 = vunpack.c.l.b16 %v3275
    %v3422 = vunpack.c.l.b16 %v3276
    %v3423 = vunpack.c.l.b16 %v3277
    %v3424 = vunpack.c.l.b16 %v3278
    %v3425 = vunpack.c.l.b16 %v3279
    %v3426 = vunpack.c.l.b16 %v3280
    %v3427 = vunpack.c.l.b16 %v3281
    %v3428 = vpack.c.b16 %v3413, %v3412
    %v3429 = vpack.c.b16 %v3415, %v3414
    %v3430 = vpack.c.b16 %v3417, %v3416
    %v3431 = vpack.c.b16 %v3419, %v3418
    %v3432 = vpack.c.b16 %v3421, %v3420
    %v3433 = vpack.c.b16 %v3423, %v3422
    %v3434 = vpack.c.b16 %v3425, %v3424
    %v3435 = vpack.c.b16 %v3427, %v3426
    %3444 = vmatprep.subr.bf16.mxu0 0
    %3445 = vmatpush1.bf16.msra.mxu0 %v3435
    %3446 = vmatprep.subr.bf16.mxu0 0
    %3447 = vmatpush1.bf16.msra.mxu0 %v3434
    %3448 = vmatprep.subr.bf16.mxu0 0
    %3449 = vmatpush1.bf16.msra.mxu0 %v3433
    %3450 = vmatprep.subr.bf16.mxu0 0
    %3451 = vmatpush1.bf16.msra.mxu0 %v3432
    %3452 = vmatprep.subr.bf16.mxu0 0
    %3453 = vmatpush1.bf16.msra.mxu0 %v3431
    %3454 = vmatprep.subr.bf16.mxu0 0
    %3455 = vmatpush1.bf16.msra.mxu0 %v3430
    %3456 = vmatprep.subr.bf16.mxu0 0
    %3457 = vmatpush1.bf16.msra.mxu0 %v3429
    %3458 = vmatprep.subr.bf16.mxu0 0
    %3459 = vmatpush1.bf16.msra.mxu0 %v3428
    %3460 = vmatprep.subr.bf16.mxu0 0
    %3461 = vmatpush2.bf16.msra.mxu0 0
    %3462 = vmatprep.subr.bf16.mxu0 0
    %3463 = vmatpush2.bf16.msra.mxu0 0
    %3464 = vmatprep.subr.bf16.mxu0 0
    %3465 = vmatpush2.bf16.msra.mxu0 0
    %3466 = vmatprep.subr.bf16.mxu0 0
    %3467 = vmatpush2.bf16.msra.mxu0 0
    %3468 = vmatprep.subr.bf16.mxu0 0
    %3469 = vmatpush2.bf16.msra.mxu0 0
    %3470 = vmatprep.subr.bf16.mxu0 0
    %3471 = vmatpush2.bf16.msra.mxu0 0
    %3472 = vmatprep.subr.bf16.mxu0 0
    %3473 = vmatpush2.bf16.msra.mxu0 0
    %3474 = vmatprep.subr.bf16.mxu0 0
    %3475 = vmatpush2.bf16.msra.mxu0 0
    %3476 = vmatprep.mubr.bf16.mxu0 0
    %3477 = vmatmul.mubr.bf16.gmra.mxu0 %v3022
    %v3478 = vpop.f32.mrf.mxu0
    %v3479 = vadd.f32 %v3382, %v3478
    %v3480 = vpop.f32.mrf.mxu0
    %v3481 = vpop.f32.mrf.mxu0
    %v3482 = vadd.f32 %v3385, %v3481
    %v3483 = vpop.f32.mrf.mxu0
    %3484 = vmatprep.mubr.bf16.mxu0 0
    %3485 = vmatmul.mubr.bf16.gmra.mxu0 %v3023
    %v3486 = vpop.f32.mrf.mxu0
    %v3487 = vadd.f32 %v3390, %v3486
    %v3488 = vpop.f32.mrf.mxu0
    %v3489 = vpop.f32.mrf.mxu0
    %v3490 = vadd.f32 %v3393, %v3489
    %v3491 = vpop.f32.mrf.mxu0
    %3492 = vdwg.mxu0
    %v3493 = vld [vmem:[#allocation9 + $0xc] sm:$0x1]
    %v3494 = vlaneseq
    %v3495 = vshrl.u32 %v3494, 7
    %v3496 = vsub.s32 0, %v3495
    %v3497 = vrot.slane %v3493, %v3496
    %v3498 = vadd.f32 %v3479, %v3497
    %v3499 = vadd.f32 %v3482, %v3497
    %v3500 = vadd.f32 %v3487, %v3497
    %v3501 = vadd.f32 %v3490, %v3497
    %v3502 = vpack.c.bf16 %v3262, %v3261
    %v3503 = vpack.c.bf16 %v3264, %v3263
    %3504 = vmatprep.subr.bf16.mxu0 0
    %3505 = vmatpush1.bf16.msra.mxu0 0
    %3506 = vmatprep.subr.bf16.mxu0 0
    %3507 = vmatpush1.bf16.msra.mxu0 0
    %3508 = vmatprep.subr.bf16.mxu0 0
    %3509 = vmatpush1.bf16.msra.mxu0 0
    %3510 = vmatprep.subr.bf16.mxu0 0
    %3511 = vmatpush1.bf16.msra.mxu0 0
    %3512 = vmatprep.subr.bf16.mxu0 0
    %3513 = vmatpush1.bf16.msra.mxu0 0
    %3514 = vmatprep.subr.bf16.mxu0 0
    %3515 = vmatpush1.bf16.msra.mxu0 0
    %3516 = vmatprep.subr.bf16.mxu0 0
    %3517 = vmatpush1.bf16.msra.mxu0 %v3503
    %3518 = vmatprep.subr.bf16.mxu0 0
    %3519 = vmatpush1.bf16.msra.mxu0 %v3502
    %3520 = vmatprep.subr.bf16.mxu0 0
    %3521 = vmatpush2.bf16.msra.mxu0 0
    %3522 = vmatprep.subr.bf16.mxu0 0
    %3523 = vmatpush2.bf16.msra.mxu0 0
    %3524 = vmatprep.subr.bf16.mxu0 0
    %3525 = vmatpush2.bf16.msra.mxu0 0
    %3526 = vmatprep.subr.bf16.mxu0 0
    %3527 = vmatpush2.bf16.msra.mxu0 0
    %3528 = vmatprep.subr.bf16.mxu0 0
    %3529 = vmatpush2.bf16.msra.mxu0 0
    %3530 = vmatprep.subr.bf16.mxu0 0
    %3531 = vmatpush2.bf16.msra.mxu0 0
    %3532 = vmatprep.subr.bf16.mxu0 0
    %3533 = vmatpush2.bf16.msra.mxu0 0
    %3534 = vmatprep.subr.bf16.mxu0 0
    %3535 = vmatpush2.bf16.msra.mxu0 0
    %3536 = vmatprep.mubr.bf16.mxu0 0
    %3537 = vmatmul.mubr.bf16.gmra.mxu0 %v115
    %v3538 = vpop.f32.mrf.mxu0
    %v3539 = vadd.f32 0.0, %v3538
    %v3540 = vpop.f32.mrf.mxu0
    %v3541 = vpop.f32.mrf.mxu0
    %v3542 = vadd.f32 0.0, %v3541
    %v3543 = vpop.f32.mrf.mxu0
    %3544 = vmatprep.mubr.bf16.mxu0 0
    %3545 = vmatmul.mubr.bf16.gmra.mxu0 %v118
    %v3546 = vpop.f32.mrf.mxu0
    %v3547 = vadd.f32 0.0, %v3546
    %v3548 = vpop.f32.mrf.mxu0
    %v3549 = vpop.f32.mrf.mxu0
    %v3550 = vadd.f32 0.0, %v3549
    %v3551 = vpop.f32.mrf.mxu0
    %3552 = vdwg.mxu0
    %v3553 = vpack.c.bf16 %v3542, %v3539
    %v3554 = vpack.c.bf16 %v3550, %v3547
    %s3555 = scalar_lea.vmem [#allocation7], 1408
    %v3556 = vld [vmem:[%s3555] sm:$0xf]
    %v3557 = vld [vmem:[%s3555 + $0x4] sm:$0xf]
    %v3558 = vld [vmem:[%s3555 + $0x8] sm:$0xf]
    %v3559 = vld [vmem:[%s3555 + $0xc] sm:$0xf]
    %v3560 = vld [vmem:[%s3555 + $0x10] sm:$0xf]
    %v3561 = vld [vmem:[%s3555 + $0x14] sm:$0xf]
    %v3562 = vld [vmem:[%s3555 + $0x18] sm:$0xf]
    %v3563 = vld [vmem:[%s3555 + $0x1c] sm:$0xf]
    %v3564 = vld [vmem:[%s3555 + $0x20] sm:$0xf]
    %v3565 = vld [vmem:[%s3555 + $0x24] sm:$0xf]
    %v3566 = vld [vmem:[%s3555 + $0x28] sm:$0xf]
    %v3567 = vld [vmem:[%s3555 + $0x2c] sm:$0xf]
    %v3568 = vld [vmem:[%s3555 + $0x30] sm:$0xf]
    %v3569 = vld [vmem:[%s3555 + $0x34] sm:$0xf]
    %v3570 = vld [vmem:[%s3555 + $0x38] sm:$0xf]
    %v3571 = vld [vmem:[%s3555 + $0x3c] sm:$0xf]
    %s3572 = scalar_lea.vmem [#allocation7], 1472
    %v3573 = vld [vmem:[%s3572] sm:$0xf]
    %v3574 = vld [vmem:[%s3572 + $0x4] sm:$0xf]
    %v3575 = vld [vmem:[%s3572 + $0x8] sm:$0xf]
    %v3576 = vld [vmem:[%s3572 + $0xc] sm:$0xf]
    %v3577 = vld [vmem:[%s3572 + $0x10] sm:$0xf]
    %v3578 = vld [vmem:[%s3572 + $0x14] sm:$0xf]
    %v3579 = vld [vmem:[%s3572 + $0x18] sm:$0xf]
    %v3580 = vld [vmem:[%s3572 + $0x1c] sm:$0xf]
    %v3581 = vld [vmem:[%s3572 + $0x20] sm:$0xf]
    %v3582 = vld [vmem:[%s3572 + $0x24] sm:$0xf]
    %v3583 = vld [vmem:[%s3572 + $0x28] sm:$0xf]
    %v3584 = vld [vmem:[%s3572 + $0x2c] sm:$0xf]
    %v3585 = vld [vmem:[%s3572 + $0x30] sm:$0xf]
    %v3586 = vld [vmem:[%s3572 + $0x34] sm:$0xf]
    %v3587 = vld [vmem:[%s3572 + $0x38] sm:$0xf]
    %v3588 = vld [vmem:[%s3572 + $0x3c] sm:$0xf]
    %v3605 = vunpack.c.l.b16 %v3573
    %v3606 = vunpack.c.l.b16 %v3574
    %v3607 = vunpack.c.l.b16 %v3575
    %v3608 = vunpack.c.l.b16 %v3576
    %v3609 = vunpack.c.l.b16 %v3577
    %v3610 = vunpack.c.l.b16 %v3578
    %v3611 = vunpack.c.l.b16 %v3579
    %v3612 = vunpack.c.l.b16 %v3580
    %v3613 = vunpack.c.l.b16 %v3581
    %v3614 = vunpack.c.l.b16 %v3582
    %v3615 = vunpack.c.l.b16 %v3583
    %v3616 = vunpack.c.l.b16 %v3584
    %v3617 = vunpack.c.l.b16 %v3585
    %v3618 = vunpack.c.l.b16 %v3586
    %v3619 = vunpack.c.l.b16 %v3587
    %v3620 = vunpack.c.l.b16 %v3588
    %v3621 = vpack.c.b16 %v3606, %v3605
    %v3622 = vpack.c.b16 %v3608, %v3607
    %v3623 = vpack.c.b16 %v3610, %v3609
    %v3624 = vpack.c.b16 %v3612, %v3611
    %v3625 = vpack.c.b16 %v3614, %v3613
    %v3626 = vpack.c.b16 %v3616, %v3615
    %v3627 = vpack.c.b16 %v3618, %v3617
    %v3628 = vpack.c.b16 %v3620, %v3619
    %3637 = vmatprep.subr.bf16.mxu0 0
    %3638 = vmatpush1.bf16.msra.mxu0 %v3628
    %3639 = vmatprep.subr.bf16.mxu0 0
    %3640 = vmatpush1.bf16.msra.mxu0 %v3627
    %3641 = vmatprep.subr.bf16.mxu0 0
    %3642 = vmatpush1.bf16.msra.mxu0 %v3626
    %3643 = vmatprep.subr.bf16.mxu0 0
    %3644 = vmatpush1.bf16.msra.mxu0 %v3625
    %3645 = vmatprep.subr.bf16.mxu0 0
    %3646 = vmatpush1.bf16.msra.mxu0 %v3624
    %3647 = vmatprep.subr.bf16.mxu0 0
    %3648 = vmatpush1.bf16.msra.mxu0 %v3623
    %3649 = vmatprep.subr.bf16.mxu0 0
    %3650 = vmatpush1.bf16.msra.mxu0 %v3622
    %3651 = vmatprep.subr.bf16.mxu0 0
    %3652 = vmatpush1.bf16.msra.mxu0 %v3621
    %3653 = vmatprep.subr.bf16.mxu0 0
    %3654 = vmatpush2.bf16.msra.mxu0 0
    %3655 = vmatprep.subr.bf16.mxu0 0
    %3656 = vmatpush2.bf16.msra.mxu0 0
    %3657 = vmatprep.subr.bf16.mxu0 0
    %3658 = vmatpush2.bf16.msra.mxu0 0
    %3659 = vmatprep.subr.bf16.mxu0 0
    %3660 = vmatpush2.bf16.msra.mxu0 0
    %3661 = vmatprep.subr.bf16.mxu0 0
    %3662 = vmatpush2.bf16.msra.mxu0 0
    %3663 = vmatprep.subr.bf16.mxu0 0
    %3664 = vmatpush2.bf16.msra.mxu0 0
    %3665 = vmatprep.subr.bf16.mxu0 0
    %3666 = vmatpush2.bf16.msra.mxu0 0
    %3667 = vmatprep.subr.bf16.mxu0 0
    %3668 = vmatpush2.bf16.msra.mxu0 0
    %3669 = vmatprep.mubr.bf16.mxu0 0
    %3670 = vmatmul.mubr.bf16.gmra.mxu0 %v3502
    %v3671 = vpop.f32.mrf.mxu0
    %v3672 = vadd.f32 0.0, %v3671
    %v3673 = vpop.f32.mrf.mxu0
    %v3674 = vpop.f32.mrf.mxu0
    %v3675 = vadd.f32 0.0, %v3674
    %v3676 = vpop.f32.mrf.mxu0
    %3677 = vmatprep.mubr.bf16.mxu0 0
    %3678 = vmatmul.mubr.bf16.gmra.mxu0 %v3503
    %v3679 = vpop.f32.mrf.mxu0
    %v3680 = vadd.f32 0.0, %v3679
    %v3681 = vpop.f32.mrf.mxu0
    %v3682 = vpop.f32.mrf.mxu0
    %v3683 = vadd.f32 0.0, %v3682
    %v3684 = vpop.f32.mrf.mxu0
    %3685 = vdwg.mxu0
    %v3702 = vunpack.c.l.b16 %v3556
    %v3703 = vunpack.c.l.b16 %v3557
    %v3704 = vunpack.c.l.b16 %v3558
    %v3705 = vunpack.c.l.b16 %v3559
    %v3706 = vunpack.c.l.b16 %v3560
    %v3707 = vunpack.c.l.b16 %v3561
    %v3708 = vunpack.c.l.b16 %v3562
    %v3709 = vunpack.c.l.b16 %v3563
    %v3710 = vunpack.c.l.b16 %v3564
    %v3711 = vunpack.c.l.b16 %v3565
    %v3712 = vunpack.c.l.b16 %v3566
    %v3713 = vunpack.c.l.b16 %v3567
    %v3714 = vunpack.c.l.b16 %v3568
    %v3715 = vunpack.c.l.b16 %v3569
    %v3716 = vunpack.c.l.b16 %v3570
    %v3717 = vunpack.c.l.b16 %v3571
    %v3718 = vpack.c.b16 %v3703, %v3702
    %v3719 = vpack.c.b16 %v3705, %v3704
    %v3720 = vpack.c.b16 %v3707, %v3706
    %v3721 = vpack.c.b16 %v3709, %v3708
    %v3722 = vpack.c.b16 %v3711, %v3710
    %v3723 = vpack.c.b16 %v3713, %v3712
    %v3724 = vpack.c.b16 %v3715, %v3714
    %v3725 = vpack.c.b16 %v3717, %v3716
    %3734 = vmatprep.subr.bf16.mxu0 0
    %3735 = vmatpush1.bf16.msra.mxu0 %v3725
    %3736 = vmatprep.subr.bf16.mxu0 0
    %3737 = vmatpush1.bf16.msra.mxu0 %v3724
    %3738 = vmatprep.subr.bf16.mxu0 0
    %3739 = vmatpush1.bf16.msra.mxu0 %v3723
    %3740 = vmatprep.subr.bf16.mxu0 0
    %3741 = vmatpush1.bf16.msra.mxu0 %v3722
    %3742 = vmatprep.subr.bf16.mxu0 0
    %3743 = vmatpush1.bf16.msra.mxu0 %v3721
    %3744 = vmatprep.subr.bf16.mxu0 0
    %3745 = vmatpush1.bf16.msra.mxu0 %v3720
    %3746 = vmatprep.subr.bf16.mxu0 0
    %3747 = vmatpush1.bf16.msra.mxu0 %v3719
    %3748 = vmatprep.subr.bf16.mxu0 0
    %3749 = vmatpush1.bf16.msra.mxu0 %v3718
    %3750 = vmatprep.subr.bf16.mxu0 0
    %3751 = vmatpush2.bf16.msra.mxu0 0
    %3752 = vmatprep.subr.bf16.mxu0 0
    %3753 = vmatpush2.bf16.msra.mxu0 0
    %3754 = vmatprep.subr.bf16.mxu0 0
    %3755 = vmatpush2.bf16.msra.mxu0 0
    %3756 = vmatprep.subr.bf16.mxu0 0
    %3757 = vmatpush2.bf16.msra.mxu0 0
    %3758 = vmatprep.subr.bf16.mxu0 0
    %3759 = vmatpush2.bf16.msra.mxu0 0
    %3760 = vmatprep.subr.bf16.mxu0 0
    %3761 = vmatpush2.bf16.msra.mxu0 0
    %3762 = vmatprep.subr.bf16.mxu0 0
    %3763 = vmatpush2.bf16.msra.mxu0 0
    %3764 = vmatprep.subr.bf16.mxu0 0
    %3765 = vmatpush2.bf16.msra.mxu0 0
    %3766 = vmatprep.mubr.bf16.mxu0 0
    %3767 = vmatmul.mubr.bf16.gmra.mxu0 %v3553
    %v3768 = vpop.f32.mrf.mxu0
    %v3769 = vadd.f32 %v3672, %v3768
    %v3770 = vpop.f32.mrf.mxu0
    %v3771 = vpop.f32.mrf.mxu0
    %v3772 = vadd.f32 %v3675, %v3771
    %v3773 = vpop.f32.mrf.mxu0
    %3774 = vmatprep.mubr.bf16.mxu0 0
    %3775 = vmatmul.mubr.bf16.gmra.mxu0 %v3554
    %v3776 = vpop.f32.mrf.mxu0
    %v3777 = vadd.f32 %v3680, %v3776
    %v3778 = vpop.f32.mrf.mxu0
    %v3779 = vpop.f32.mrf.mxu0
    %v3780 = vadd.f32 %v3683, %v3779
    %v3781 = vpop.f32.mrf.mxu0
    %3782 = vdwg.mxu0
    %v3783 = vld [vmem:[#allocation9 + $0xb] sm:$0x1]
    %v3784 = vlaneseq
    %v3785 = vshrl.u32 %v3784, 7
    %v3786 = vsub.s32 0, %v3785
    %v3787 = vrot.slane %v3783, %v3786
    %v3788 = vadd.f32 %v3769, %v3787
    %v3789 = vadd.f32 %v3772, %v3787
    %v3790 = vadd.f32 %v3777, %v3787
    %v3791 = vadd.f32 %v3780, %v3787
    %v3792 = vadd.f32 %v3788, %v3498
    %v3793 = vadd.f32 %v3789, %v3499
    %v3794 = vadd.f32 %v3790, %v3500
    %v3795 = vadd.f32 %v3791, %v3501
    %v3796 = vmax.f32 %v3792, 0.0
    %v3797 = vmax.f32 %v3793, 0.0
    %v3798 = vmax.f32 %v3794, 0.0
    %v3799 = vmax.f32 %v3795, 0.0
    %v3800 = vlaneseq
    %v3801 = vand.u32 %v3800, 127
    %v3802 = vand.u32 2147483647, %v3796
    %v3803 = vand.u32 2147483647, %v3797
    %v3804 = vand.u32 2147483647, %v3798
    %v3805 = vand.u32 2147483647, %v3799
    %v3806 = vsub.f32 0.0, %v3802
    %v3807 = vsub.f32 0.0, %v3803
    %v3808 = vsub.f32 0.0, %v3804
    %v3809 = vsub.f32 0.0, %v3805
    %v3810 = vmul.f32 %v3806, 1.442695
    %v3811 = vpow.pop %v3810
    %v3812 = vmul.f32 %v3807, 1.442695
    %v3813 = vpow.pop %v3812
    %v3814 = vmul.f32 %v3808, 1.442695
    %v3815 = vpow.pop %v3814
    %v3816 = vmul.f32 %v3809, 1.442695
    %v3817 = vpow.pop %v3816
    %v3818 = vadd.f32 %v3811, 1.0
    %v3819 = vlog2.pop %v3818
    %v3820 = vmul.f32 %v3819, 0.6931472
    %v3821 = vmul.f32 -0.5, %v3811
    %v3822 = vadd.f32 %v3821, 1.0
    %v3823 = vmul.f32 %v3822, %v3811
    %v3824 = vand.u32 2147483647, %v3811
    %vm3825 = vcmp.lt.f32.partialorder %v3824, 0.0004427343
    %v3826 = vsel %vm3825, %v3823, %v3820
    %v3827 = vadd.f32 %v3813, 1.0
    %v3828 = vlog2.pop %v3827
    %v3829 = vmul.f32 %v3828, 0.6931472
    %v3830 = vmul.f32 -0.5, %v3813
    %v3831 = vadd.f32 %v3830, 1.0
    %v3832 = vmul.f32 %v3831, %v3813
    %v3833 = vand.u32 2147483647, %v3813
    %vm3834 = vcmp.lt.f32.partialorder %v3833, 0.0004427343
    %v3835 = vsel %vm3834, %v3832, %v3829
    %v3836 = vadd.f32 %v3815, 1.0
    %v3837 = vlog2.pop %v3836
    %v3838 = vmul.f32 %v3837, 0.6931472
    %v3839 = vmul.f32 -0.5, %v3815
    %v3840 = vadd.f32 %v3839, 1.0
    %v3841 = vmul.f32 %v3840, %v3815
    %v3842 = vand.u32 2147483647, %v3815
    %vm3843 = vcmp.lt.f32.partialorder %v3842, 0.0004427343
    %v3844 = vsel %vm3843, %v3841, %v3838
    %v3845 = vadd.f32 %v3817, 1.0
    %v3846 = vlog2.pop %v3845
    %v3847 = vmul.f32 %v3846, 0.6931472
    %v3848 = vmul.f32 -0.5, %v3817
    %v3849 = vadd.f32 %v3848, 1.0
    %v3850 = vmul.f32 %v3849, %v3817
    %v3851 = vand.u32 2147483647, %v3817
    %vm3852 = vcmp.lt.f32.partialorder %v3851, 0.0004427343
    %v3853 = vsel %vm3852, %v3850, %v3847
    %v3854 = vsub.f32 0.0, %v3796
    %v3855 = vsub.f32 0.0, %v3797
    %v3856 = vsub.f32 0.0, %v3798
    %v3857 = vsub.f32 0.0, %v3799
    %v3858 = vmax.f32 %v3854, 0.0
    %v3859 = vmax.f32 %v3855, 0.0
    %v3860 = vmax.f32 %v3856, 0.0
    %v3861 = vmax.f32 %v3857, 0.0
    %v3862 = vadd.f32 %v3858, %v3826
    %v3863 = vadd.f32 %v3859, %v3835
    %v3864 = vadd.f32 %v3860, %v3844
    %v3865 = vadd.f32 %v3861, %v3853
    %v3866 = vsub.f32 0.0, %v3862
    %v3867 = vsub.f32 0.0, %v3863
    %v3868 = vsub.f32 0.0, %v3864
    %v3869 = vsub.f32 0.0, %v3865
    %v3870 = vmax.f32 %v3866, -100.0
    %v3871 = vmax.f32 %v3867, -100.0
    %v3872 = vmax.f32 %v3868, -100.0
    %v3873 = vmax.f32 %v3869, -100.0
    %v3874 = vmax.f32 %v3796, 0.0
    %v3875 = vmax.f32 %v3797, 0.0
    %v3876 = vmax.f32 %v3798, 0.0
    %v3877 = vmax.f32 %v3799, 0.0
    %v3878 = vadd.f32 %v3874, %v3826
    %v3879 = vadd.f32 %v3875, %v3835
    %v3880 = vadd.f32 %v3876, %v3844
    %v3881 = vadd.f32 %v3877, %v3853
    %v3882 = vsub.f32 0.0, %v3878
    %v3883 = vsub.f32 0.0, %v3879
    %v3884 = vsub.f32 0.0, %v3880
    %v3885 = vsub.f32 0.0, %v3881
    %v3886 = vmax.f32 %v3882, -100.0
    %v3887 = vmax.f32 %v3883, -100.0
    %v3888 = vmax.f32 %v3884, -100.0
    %v3889 = vmax.f32 %v3885, -100.0
    %v3890 = vmul.f32 %v93, %v3870
    %v3891 = vmul.f32 %v94, %v3871
    %v3892 = vmul.f32 %v95, %v3872
    %v3893 = vmul.f32 %v96, %v3873
    %v3894 = vsub.f32 1.0, %v93
    %v3895 = vsub.f32 1.0, %v94
    %v3896 = vsub.f32 1.0, %v95
    %v3897 = vsub.f32 1.0, %v96
    %v3898 = vmul.f32 %v3894, %v3886
    %v3899 = vmul.f32 %v3895, %v3887
    %v3900 = vmul.f32 %v3896, %v3888
    %v3901 = vmul.f32 %v3897, %v3889
    %v3902 = vadd.f32 %v3890, %v3898
    %v3903 = vadd.f32 %v3891, %v3899
    %v3904 = vadd.f32 %v3892, %v3900
    %v3905 = vadd.f32 %v3893, %v3901
    %v3906 = vsub.f32 0.0, %v3902
    %v3907 = vsub.f32 0.0, %v3903
    %v3908 = vsub.f32 0.0, %v3904
    %v3909 = vsub.f32 0.0, %v3905
    %vm3910 = vcmp.lt.s32.totalorder %v3801, 16
    %v3911 = vsel %vm3910, 1, 0
    %vm3912 = vcmp.eq.s32.totalorder %v3911, 1
    %v3913 = vsel %vm3912, %v3906, 0.0
    %v3914 = vsel %vm3912, %v3907, 0.0
    %v3915 = vsel %vm3912, %v3908, 0.0
    %v3916 = vsel %vm3912, %v3909, 0.0
    %v3917 = vadd.f32 %v3913, %v3914
    %v3918 = vadd.f32 %v3917, %v3915
    %v3919 = vadd.f32 %v3918, %v3916
    %3920 = vadd.xlane.f32.xlu0 %v3919
    %v3921 = vpop.xlane.xlu0 %3920
    %v3922 = vrot.slane %v3921, 4
    %v3923 = vadd.f32 %v3921, %v3922
    %v3924 = vrot.slane %v3923, 2
    %v3925 = vadd.f32 %v3923, %v3924
    %v3926 = vrot.slane %v3925, 1
    %v3927 = vadd.f32 %v3925, %v3926
    %s3928 = vtos %v3927
    %v3929 = vstv %s3928
    %v3930 = vmul.f32 %v3929, 0.001953125
    %v3931 = vadd.f32 %v2061, 1.0
    %v3932 = vadd.f32 %v2062, 1.0
    %v3933 = vadd.f32 %v2063, 1.0
    %v3934 = vadd.f32 %v2064, 1.0
    %v3935 = vmul.f32 %v1824, %v1824
    %v3936 = vmul.f32 %v1825, %v1825
    %v3937 = vmul.f32 %v1826, %v1826
    %v3938 = vmul.f32 %v1827, %v1827
    %v3939 = vsub.f32 %v3931, %v3935
    %v3940 = vsub.f32 %v3932, %v3936
    %v3941 = vsub.f32 %v3933, %v3937
    %v3942 = vsub.f32 %v3934, %v3938
    %v3943 = vmul.f32 %v2061, 1.442695
    %v3944 = vpow.pop %v3943
    %v3945 = vmul.f32 %v2062, 1.442695
    %v3946 = vpow.pop %v3945
    %v3947 = vmul.f32 %v2063, 1.442695
    %v3948 = vpow.pop %v3947
    %v3949 = vmul.f32 %v2064, 1.442695
    %v3950 = vpow.pop %v3949
    %v3951 = vsub.f32 %v3939, %v3944
    %v3952 = vsub.f32 %v3940, %v3946
    %v3953 = vsub.f32 %v3941, %v3948
    %v3954 = vsub.f32 %v3942, %v3950
    %v3955 = vadd.f32 %v3951, %v3952
    %v3956 = vadd.f32 %v3955, %v3953
    %v3957 = vadd.f32 %v3956, %v3954
    %3958 = vadd.xlane.f32.xlu0 %v3957
    %v3959 = vpop.xlane.xlu0 %3958
    %v3960 = vrot.slane %v3959, 4
    %v3961 = vadd.f32 %v3959, %v3960
    %v3962 = vrot.slane %v3961, 2
    %v3963 = vadd.f32 %v3961, %v3962
    %v3964 = vrot.slane %v3963, 1
    %v3965 = vadd.f32 %v3963, %v3964
    %s3966 = vtos %v3965
    %v3967 = vstv %s3966
    %v3968 = vmul.f32 %v3967, -0.001953125
    %v3969 = vmul.f32 %v3968, 0.2
    %v3970 = vadd.f32 %v3930, %v3969
    %vm3971 = vcmp.eq.s32.totalorder %v3801, 0
    %vm3972 = vcmp.eq.s32.totalorder %v3801, 1
    %vm3973 = vcmp.eq.s32.totalorder %v3801, 2
    %v3974 = vsel %vm3973, %v3968, 0.0
    %v3975 = vsel %vm3972, %v3930, %v3974
    %v3976 = vsel %vm3971, %v3970, %v3975
    %3977 = vst [vmem:[%s5] sm:$0x1] %v3976
    // Predicated region
    $region42: #{graphsage_vae_forward.1} parent=1 // pred_check
      _
    $region43: #{graphsage_vae_forward.1} parent=1 // pred_check_branch
      %3979 = sbr.rel (0) target = $region45
    $region44: #{graphsage_vae_forward.1} parent=1 // pred_region
      _
    $region45: #{graphsage_vae_forward.1} parent=1 // pred_fallthru
      _
    // Predicated region
    $region46: #{graphsage_vae_forward.1} parent=1 // pred_check
      _
    $region47: #{graphsage_vae_forward.1} parent=1 // pred_check_branch
      %3981 = sbr.rel (0) target = $region49
    $region48: #{graphsage_vae_forward.1} parent=1 // pred_region
      _
    $region49: #{graphsage_vae_forward.1} parent=1 // pred_fallthru
      _
    %3982 = vsyncpa [#allocation3], 1
    %3983 = vsyncpa [#allocation5], 1
    %3984 = vsyncpa [#allocation8], 1

</llo_original>
